<compile_context>
chip_gen: v7x
topology: tpu7x:2x2x1
jax: 0.10.0
libtpu: 0.0.40
codegen_flags: <defaults>
</compile_context>

<pallas_src>
import functools

import numpy as np

import jax
import jax.numpy as jnp
from jax import lax
from jax.experimental import pallas as pl
from jax.experimental.pallas import tpu as pltpu

NEG_SLOPE = 0.2  # nn.LeakyReLU(0.2)


# ----------------------------- small helpers --------------------------------- #

def _leaky_relu(x):
    # max(x, a*x) == LeakyReLU(a) for 0 <= a <= 1  (cheaper than compare+select)
    return jnp.maximum(x, NEG_SLOPE * x)


# --------------------------- in-kernel building blocks ------------------------ #

def _conv3x3(x, w_ref, b_ref, mask, W, act):
    """3x3 / stride-1 / zero-pad-1 conv as ONE packed-K MXU matmul.

    x    : (Cin, L) f32 activation, L = B_tile * H * W (lane-batched, lane-dense)
    w_ref: (Cout, 9*Cin) bf16 packed weights (tap-major, channel-minor columns)
    b_ref: (Cout, 1) f32 bias ref or None
    mask : (9, L) f32 {0,1} precomputed per-tap boundary-validity mask (resident input)
    Returns (Cout, L) f32.
    """
    L = x.shape[1]
    taps = []
    for t in range(9):
        dy, dx = t // 3 - 1, t % 3 - 1
        s = dy * W + dx
        tv = x if s == 0 else pltpu.roll(x, shift=(-s) % L, axis=1)
        if s != 0:
            tv = tv * mask[t:t + 1, :]       # zero out wrapped / out-of-image pixels
        taps.append(tv.astype(jnp.bfloat16))  # per-tap cast -> bf16 tap stack
    xt = jnp.concatenate(taps, axis=0)                     # (9*Cin, L) bf16
    acc = jnp.dot(w_ref[...], xt, preferred_element_type=jnp.float32)
    if b_ref is not None:
        acc = acc + b_ref[...]
    return _leaky_relu(acc) if act else acc


def _apply_sel(x, mat_ref):
    """Avg-pool / nearest-upsample as a matmul against a resident bf16 selection matrix."""
    return jnp.dot(x.astype(jnp.bfloat16), mat_ref[...],
                   preferred_element_type=jnp.float32)


# ------------------------------- fused kernel -------------------------------- #

def _unet_kernel(n_down, n_res, level_W, *refs):
    """Whole Unet forward for one batch-group (B_tile images packed along lanes).

    refs = [x_ref (1, Cin0, L0) f32,
            masks   (n_down+1) : (9, L_lvl) f32 resident boundary masks, level 0..n_down
            pools   (n_down)   : (L_l, L_{l+1}) bf16 resident pool matrices
            ups     (n_down)   : (L_{lvl}, L_{lvl-1}) bf16 resident upsample matrices,
                                 in decoder order (level n_down -> ... -> 1)
            weights            : packed conv weights / biases in consumption order,
            o_ref (1, Cout, L0) f32]
    """
    x_ref = refs[0]
    o_ref = refs[-1]
    rest = refs[1:-1]

    n_lvl = n_down + 1
    masks = rest[:n_lvl]
    pools = rest[n_lvl:n_lvl + n_down]
    ups = rest[n_lvl + n_down:n_lvl + 2 * n_down]
    wit = iter(rest[n_lvl + 2 * n_down:])

    x = x_ref[0]                                   # (Cin0, L0) f32
    lvl = 0

    # encoder: UpdownUnetBlock(down) = conv3x3 + lrelu, then 2x2 avg-pool (in VMEM)
    skips = []
    for i in range(n_down):
        m = masks[lvl][...]
        x = _conv3x3(x, next(wit), None, m, level_W[lvl], act=True)
        x = _apply_sel(x, pools[i])                # pooled output never leaves VMEM
        lvl += 1
        skips.append(x)

    # bottleneck: ResBlocks (conv+lrelu, conv, + residual), fully fused
    m = masks[lvl][...]                            # loaded once for all res blocks
    for _ in range(n_res):
        w1, b1, w2, b2 = next(wit), next(wit), next(wit), next(wit)
        y = _conv3x3(x, w1, b1, m, level_W[lvl], act=True)
        y = _conv3x3(y, w2, b2, m, level_W[lvl], act=False)
        x = x + y

    # decoder: channel concat with skip, 2x nearest upsample, conv3x3 + lrelu
    skips.reverse()
    for i in range(n_down):
        x = jnp.concatenate([x, skips[i]], axis=0)  # torch.cat(dim=1) == channel axis
        x = _apply_sel(x, ups[i])                   # upsample to level lvl-1
        lvl -= 1
        x = _conv3x3(x, next(wit), None, masks[lvl][...], level_W[lvl], act=True)

    o_ref[0] = x.astype(o_ref.dtype)               # lane-dense (Cout, L0) store


# --------------------------- host-side constant builders ---------------------- #

def _make_masks(H, W, B):
    """(9, B*H*W) f32 {0,1}: validity of conv tap t for each lane-batched pixel."""
    HW = H * W
    p = np.arange(B * HW) % HW                     # per-image flat position
    py, px = p // W, p % W
    rows = []
    for ky in range(3):
        for kx in range(3):
            dy, dx = ky - 1, kx - 1
            valid = np.ones(B * HW, dtype=bool)
            if dy == -1:
                valid &= py >= 1
            if dy == 1:
                valid &= py <= H - 2
            if dx == -1:
                valid &= px >= 1
            if dx == 1:
                valid &= px <= W - 2
            rows.append(valid.astype(np.float32))
    return jnp.asarray(np.stack(rows), dtype=jnp.float32)


def _make_pool_mat(H, W, B):
    """(B*H*W, B*(H//2)*(W//2)) bf16 selection matrix for per-image 2x2 avg-pool."""
    HW, H2, W2 = H * W, H // 2, W // 2
    HW2 = H2 * W2
    src = np.arange(B * HW)
    b, r = src // HW, src % HW
    y, x = r // W, r % W
    dst = b * HW2 + (y // 2) * W2 + (x // 2)
    mat = np.zeros((B * HW, B * HW2), np.float32)
    mat[src, dst] = 0.25
    return jnp.asarray(mat, dtype=jnp.bfloat16)


def _make_up_mat(Hlow, Wlow, B):
    """(B*Hlow*Wlow, B*2Hlow*2Wlow) bf16 selection matrix for per-image 2x nearest up."""
    HWl = Hlow * Wlow
    Hh, Wh = 2 * Hlow, 2 * Wlow
    HWh = Hh * Wh
    dst = np.arange(B * HWh)
    b, r = dst // HWh, dst % HWh
    Y, X = r // Wh, r % Wh
    src = b * HWl + (Y // 2) * Wlow + (X // 2)
    mat = np.zeros((B * HWl, B * HWh), np.float32)
    mat[src, dst] = 1.0
    return jnp.asarray(mat, dtype=jnp.bfloat16)


# ------------------------------- host wrapper --------------------------------- #

def _pack_conv_w(w_oihw):
    """PyTorch Conv2d weight (Cout, Cin, 3, 3) -> packed (Cout, 9*Cin) bf16.

    Column index = (ky*3 + kx)*Cin + ci (tap-major, channel-minor), matching the
    in-kernel tap stack built by _conv3x3.
    """
    cout, cin = w_oihw.shape[0], w_oihw.shape[1]
    return jnp.transpose(w_oihw, (0, 2, 3, 1)).reshape(cout, 9 * cin).astype(jnp.bfloat16)


def unet_forward(params, x_nchw, *, batch_tile=2):
    """Full Unet forward in a single pallas_call, gridded over batch groups."""
    N, cin0, H0, W0 = x_nchw.shape
    n_down = len(params['down'])
    n_res = len(params['res'])
    out_dim = params['up'][-1]['w'].shape[0]
    assert H0 % (2 ** n_down) == 0 and W0 % (2 ** n_down) == 0

    B = min(batch_tile, N)
    assert N % B == 0, "batch must be divisible by batch_tile"
    G = N // B                                       # grid steps (>= 2 keeps both v7x TCs busy)

    level_HW = [(H0 >> l, W0 >> l) for l in range(n_down + 1)]
    level_W = tuple(w for (_, w) in level_HW)
    HW0 = H0 * W0
    L0 = B * HW0

    # -------- hoisted constants: resident in VMEM, never rebuilt in-kernel --------
    masks = [_make_masks(h, w, B) for (h, w) in level_HW]
    pools = [_make_pool_mat(h, w, B) for (h, w) in level_HW[:-1]]            # level l -> l+1
    ups = [_make_up_mat(level_HW[l][0], level_HW[l][1], B)                   # decoder order
           for l in range(n_down, 0, -1)]

    # -------- weights flattened into the kernel's consumption order ---------------
    wflat = []
    for p in params['down']:
        wflat.append(_pack_conv_w(p['w']))                                   # use_bias=False
    for p in params['res']:
        wflat.append(_pack_conv_w(p['w1']))
        wflat.append(p['b1'].reshape(-1, 1).astype(jnp.float32))
        wflat.append(_pack_conv_w(p['w2']))
        wflat.append(p['b2'].reshape(-1, 1).astype(jnp.float32))
    for p in params['up']:
        wflat.append(_pack_conv_w(p['w']))                                   # use_bias=False

    consts = masks + pools + ups + wflat

    # lane-batched layout: (N,C,H,W) -> (G, C, B*HW)   (done in XLA, outside the kernel)
    x_lane = jnp.transpose(x_nchw.reshape(G, B, cin0, HW0), (0, 2, 1, 3)).reshape(G, cin0, L0)

    kernel = functools.partial(_unet_kernel, n_down, n_res, level_W)

    in_specs = [pl.BlockSpec((1, cin0, L0), lambda g: (g, 0, 0))]
    for a in consts:
        # full-array blocks with a constant index_map -> stay resident in VMEM
        in_specs.append(pl.BlockSpec(a.shape, lambda g: (0, 0)))

    out = pl.pallas_call(
        kernel,
        out_shape=jax.ShapeDtypeStruct((G, out_dim, L0), jnp.float32),
        grid_spec=pltpu.PrefetchScalarGridSpec(
            num_scalar_prefetch=0,
            grid=(G,),
            in_specs=in_specs,
            out_specs=pl.BlockSpec((1, out_dim, L0), lambda g: (g, 0, 0)),
        ),
        compiler_params=pltpu.CompilerParams(
            dimension_semantics=("parallel",),
            vmem_limit_bytes=32 * 1024 * 1024,   # fits v7x's 64 MiB VMEM with headroom
        ),
    )(x_lane, *consts)

    # (G, Cout, B*HW) -> (N, Cout, H, W)
    out = jnp.transpose(out.reshape(G, out_dim, B, HW0), (0, 2, 1, 3))
    return out.reshape(N, out_dim, H0, W0)


# ------------------------------- parameters ----------------------------------- #

def init_params(key, n_updown, n_res_blks, input_dim, dim, output_dim):
    """Synthetic weights in the real PyTorch Conv2d layout: w (Cout, Cin, 3, 3)."""
    keys = iter(jax.random.split(key, 64))

    def conv_w(cout, cin, scale=0.1):
        return scale * jax.random.normal(next(keys), (cout, cin, 3, 3), jnp.float32)

    params = {'down': [], 'res': [], 'up': []}
    d = dim
    params['down'].append({'w': conv_w(dim, input_dim)})
    for _ in range(n_updown - 1):
        params['down'].append({'w': conv_w(2 * d, d)})
        d *= 2
    for _ in range(n_res_blks):
        params['res'].append({
            'w1': conv_w(d, d),
            'b1': 0.01 * jax.random.normal(next(keys), (d,), jnp.float32),
            'w2': conv_w(d, d),
            'b2': 0.01 * jax.random.normal(next(keys), (d,), jnp.float32),
        })
    for _ in range(n_updown - 1):
        params['up'].append({'w': conv_w(d // 2, 2 * d)})
        d //= 2
    params['up'].append({'w': conv_w(output_dim, 2 * d)})
    return params


# --------------------------- pure-JAX reference -------------------------------- #

def _ref_conv3x3(x, w, b=None, act=True):
    # mirror the kernel's precision: bf16 operands, f32 accumulation
    y = lax.conv_general_dilated(
        x.astype(jnp.bfloat16), w.astype(jnp.bfloat16),
        window_strides=(1, 1), padding=((1, 1), (1, 1)),
        dimension_numbers=('NCHW', 'OIHW', 'NCHW'),
        preferred_element_type=jnp.float32)
    if b is not None:
        y = y + b.reshape(1, -1, 1, 1)
    return _leaky_relu(y) if act else y


def unet_reference(params, x):
    """Plain-JAX/XLA reference of the same (assumed) architecture, NCHW."""
    feats = []
    for p in params['down']:
        x = _ref_conv3x3(x, p['w'], None, act=True)
        n, c, h, w = x.shape
        # mirror the kernel's pooling precision (bf16 operands, f32 accumulation)
        xb = x.astype(jnp.bfloat16).astype(jnp.float32)
        x = xb.reshape(n, c, h // 2, 2, w // 2, 2).mean(axis=(3, 5))
        feats.append(x)
    for p in params['res']:
        r = x
        x = _ref_conv3x3(x, p['w1'], p['b1'], act=True)
        x = _ref_conv3x3(x, p['w2'], p['b2'], act=False)
        x = x + r
    feats.reverse()
    for p, skip in zip(params['up'], feats):
        x = jnp.concatenate([x, skip], axis=1)
        x = jnp.repeat(jnp.repeat(x, 2, axis=2), 2, axis=3)
        x = _ref_conv3x3(x, p['w'], None, act=True)
    return x


# ----------------------------------- main -------------------------------------- #

if __name__ == "__main__":
    # Unet(n_updown=2, n_res_blks=2, input_dim=3, dim=8, output_dim=3,
    #      norm='none', activ='lrelu', pad_type='zero')
    n_updown, n_res_blks = 2, 2
    input_dim, dim, output_dim = 3, 8, 3
    # N=4 with batch_tile=2 -> lane-batched groups of 2 images AND a grid of 2 steps
    # ("parallel" -> both v7x TensorCores busy; no-op on v5e/v6e).
    N, H, W = 4, 16, 16

    key = jax.random.PRNGKey(0)
    kx, kp = jax.random.split(key)
    x = jax.random.normal(kx, (N, input_dim, H, W), jnp.float32)   # PyTorch-style NCHW
    params = init_params(kp, n_updown, n_res_blks, input_dim, dim, output_dim)

    fwd = jax.jit(functools.partial(unet_forward, batch_tile=2))
    out = fwd(params, x)
    jax.block_until_ready(out)

    assert out.shape == (N, output_dim, H, W), out.shape
    assert bool(jnp.all(jnp.isfinite(out)))

    ref = jax.jit(unet_reference)(params, x)
    jax.block_until_ready(ref)
    max_err = float(jnp.max(jnp.abs(out - ref)))
    assert max_err < 2e-2, f"kernel/reference mismatch: max abs err = {max_err}"

    print("KERNEL_OK")
</pallas_src>

<mosaic_0001>
module attributes {stable_mosaic.version = 11 : i64} {
  func.func @_unet_kernel(%arg0: i32, %arg1: memref<1x3x512xf32, #tpu.memory_space<vmem>>, %arg2: memref<9x512xf32, #tpu.memory_space<vmem>>, %arg3: memref<9x128xf32, #tpu.memory_space<vmem>>, %arg4: memref<9x32xf32, #tpu.memory_space<vmem>>, %arg5: memref<512x128xbf16, #tpu.memory_space<vmem>>, %arg6: memref<128x32xbf16, #tpu.memory_space<vmem>>, %arg7: memref<32x128xbf16, #tpu.memory_space<vmem>>, %arg8: memref<128x512xbf16, #tpu.memory_space<vmem>>, %arg9: memref<8x27xbf16, #tpu.memory_space<vmem>>, %arg10: memref<16x72xbf16, #tpu.memory_space<vmem>>, %arg11: memref<16x144xbf16, #tpu.memory_space<vmem>>, %arg12: memref<16x1xf32, #tpu.memory_space<vmem>>, %arg13: memref<16x144xbf16, #tpu.memory_space<vmem>>, %arg14: memref<16x1xf32, #tpu.memory_space<vmem>>, %arg15: memref<16x144xbf16, #tpu.memory_space<vmem>>, %arg16: memref<16x1xf32, #tpu.memory_space<vmem>>, %arg17: memref<16x144xbf16, #tpu.memory_space<vmem>>, %arg18: memref<16x1xf32, #tpu.memory_space<vmem>>, %arg19: memref<8x288xbf16, #tpu.memory_space<vmem>>, %arg20: memref<3x144xbf16, #tpu.memory_space<vmem>>, %arg21: memref<1x3x512xf32, #tpu.memory_space<vmem>>) attributes {dimension_semantics = [#tpu.dimension_semantics<parallel>], iteration_bounds = array<i64: 2>, scalar_prefetch = 0 : i64, scratch_operands = 0 : i64, tpu.core_type = #tpu.core_type<tc>, window_params = [{transform_indices = @transform_0, window_bounds = array<i64: 1, 3, 512>}, {pipeline_mode = #tpu.pipeline_mode<synchronous>, transform_indices = @transform_1, window_bounds = array<i64: 9, 512>}, {pipeline_mode = #tpu.pipeline_mode<synchronous>, transform_indices = @transform_2, window_bounds = array<i64: 9, 128>}, {pipeline_mode = #tpu.pipeline_mode<synchronous>, transform_indices = @transform_3, window_bounds = array<i64: 9, 32>}, {pipeline_mode = #tpu.pipeline_mode<synchronous>, transform_indices = @transform_4, window_bounds = array<i64: 512, 128>}, {pipeline_mode = #tpu.pipeline_mode<synchronous>, transform_indices = @transform_5, window_bounds = array<i64: 128, 32>}, {pipeline_mode = #tpu.pipeline_mode<synchronous>, transform_indices = @transform_6, window_bounds = array<i64: 32, 128>}, {pipeline_mode = #tpu.pipeline_mode<synchronous>, transform_indices = @transform_7, window_bounds = array<i64: 128, 512>}, {pipeline_mode = #tpu.pipeline_mode<synchronous>, transform_indices = @transform_8, window_bounds = array<i64: 8, 27>}, {pipeline_mode = #tpu.pipeline_mode<synchronous>, transform_indices = @transform_9, window_bounds = array<i64: 16, 72>}, {pipeline_mode = #tpu.pipeline_mode<synchronous>, transform_indices = @transform_10, window_bounds = array<i64: 16, 144>}, {pipeline_mode = #tpu.pipeline_mode<synchronous>, transform_indices = @transform_11, window_bounds = array<i64: 16, 1>}, {pipeline_mode = #tpu.pipeline_mode<synchronous>, transform_indices = @transform_12, window_bounds = array<i64: 16, 144>}, {pipeline_mode = #tpu.pipeline_mode<synchronous>, transform_indices = @transform_13, window_bounds = array<i64: 16, 1>}, {pipeline_mode = #tpu.pipeline_mode<synchronous>, transform_indices = @transform_14, window_bounds = array<i64: 16, 144>}, {pipeline_mode = #tpu.pipeline_mode<synchronous>, transform_indices = @transform_15, window_bounds = array<i64: 16, 1>}, {pipeline_mode = #tpu.pipeline_mode<synchronous>, transform_indices = @transform_16, window_bounds = array<i64: 16, 144>}, {pipeline_mode = #tpu.pipeline_mode<synchronous>, transform_indices = @transform_17, window_bounds = array<i64: 16, 1>}, {pipeline_mode = #tpu.pipeline_mode<synchronous>, transform_indices = @transform_18, window_bounds = array<i64: 8, 288>}, {pipeline_mode = #tpu.pipeline_mode<synchronous>, transform_indices = @transform_19, window_bounds = array<i64: 3, 144>}, {transform_indices = @transform_20, window_bounds = array<i64: 1, 3, 512>}]} {
    %c0 = arith.constant 0 : index
    %c0_0 = arith.constant 0 : index
    %c0_1 = arith.constant 0 : index
    %0 = vector.load %arg1[%c0, %c0_0, %c0_1] : memref<1x3x512xf32, #tpu.memory_space<vmem>>, vector<1x3x512xf32>
    %1 = vector.shape_cast %0 : vector<1x3x512xf32> to vector<3x512xf32>
    %c0_2 = arith.constant 0 : index
    %c0_3 = arith.constant 0 : index
    %2 = vector.load %arg2[%c0_2, %c0_3] : memref<9x512xf32, #tpu.memory_space<vmem>>, vector<9x512xf32>
    %c17_i32 = arith.constant 17 : i32
    %3 = tpu.dynamic_rotate %1 by %c17_i32 dim 1 : vector<3x512xf32>, i32 -> vector<3x512xf32>
    %4 = vector.extract_strided_slice %2 {offsets = [0, 0], sizes = [1, 512], strides = [1, 1]} : vector<9x512xf32> to vector<1x512xf32>
    %5 = vector.broadcast %4 : vector<1x512xf32> to vector<3x512xf32>
    %6 = arith.mulf %3, %5 : vector<3x512xf32>
    %7 = arith.truncf %6 : vector<3x512xf32> to vector<3x512xbf16>
    %c16_i32 = arith.constant 16 : i32
    %8 = tpu.dynamic_rotate %1 by %c16_i32 dim 1 : vector<3x512xf32>, i32 -> vector<3x512xf32>
    %9 = vector.extract_strided_slice %2 {offsets = [1, 0], sizes = [1, 512], strides = [1, 1]} : vector<9x512xf32> to vector<1x512xf32>
    %10 = vector.broadcast %9 : vector<1x512xf32> to vector<3x512xf32>
    %11 = arith.mulf %8, %10 : vector<3x512xf32>
    %12 = arith.truncf %11 : vector<3x512xf32> to vector<3x512xbf16>
    %c15_i32 = arith.constant 15 : i32
    %13 = tpu.dynamic_rotate %1 by %c15_i32 dim 1 : vector<3x512xf32>, i32 -> vector<3x512xf32>
    %14 = vector.extract_strided_slice %2 {offsets = [2, 0], sizes = [1, 512], strides = [1, 1]} : vector<9x512xf32> to vector<1x512xf32>
    %15 = vector.broadcast %14 : vector<1x512xf32> to vector<3x512xf32>
    %16 = arith.mulf %13, %15 : vector<3x512xf32>
    %17 = arith.truncf %16 : vector<3x512xf32> to vector<3x512xbf16>
    %c1_i32 = arith.constant 1 : i32
    %18 = tpu.dynamic_rotate %1 by %c1_i32 dim 1 : vector<3x512xf32>, i32 -> vector<3x512xf32>
    %19 = vector.extract_strided_slice %2 {offsets = [3, 0], sizes = [1, 512], strides = [1, 1]} : vector<9x512xf32> to vector<1x512xf32>
    %20 = vector.broadcast %19 : vector<1x512xf32> to vector<3x512xf32>
    %21 = arith.mulf %18, %20 : vector<3x512xf32>
    %22 = arith.truncf %21 : vector<3x512xf32> to vector<3x512xbf16>
    %23 = arith.truncf %1 : vector<3x512xf32> to vector<3x512xbf16>
    %c511_i32 = arith.constant 511 : i32
    %24 = tpu.dynamic_rotate %1 by %c511_i32 dim 1 : vector<3x512xf32>, i32 -> vector<3x512xf32>
    %25 = vector.extract_strided_slice %2 {offsets = [5, 0], sizes = [1, 512], strides = [1, 1]} : vector<9x512xf32> to vector<1x512xf32>
    %26 = vector.broadcast %25 : vector<1x512xf32> to vector<3x512xf32>
    %27 = arith.mulf %24, %26 : vector<3x512xf32>
    %28 = arith.truncf %27 : vector<3x512xf32> to vector<3x512xbf16>
    %c497_i32 = arith.constant 497 : i32
    %29 = tpu.dynamic_rotate %1 by %c497_i32 dim 1 : vector<3x512xf32>, i32 -> vector<3x512xf32>
    %30 = vector.extract_strided_slice %2 {offsets = [6, 0], sizes = [1, 512], strides = [1, 1]} : vector<9x512xf32> to vector<1x512xf32>
    %31 = vector.broadcast %30 : vector<1x512xf32> to vector<3x512xf32>
    %32 = arith.mulf %29, %31 : vector<3x512xf32>
    %33 = arith.truncf %32 : vector<3x512xf32> to vector<3x512xbf16>
    %c496_i32 = arith.constant 496 : i32
    %34 = tpu.dynamic_rotate %1 by %c496_i32 dim 1 : vector<3x512xf32>, i32 -> vector<3x512xf32>
    %35 = vector.extract_strided_slice %2 {offsets = [7, 0], sizes = [1, 512], strides = [1, 1]} : vector<9x512xf32> to vector<1x512xf32>
    %36 = vector.broadcast %35 : vector<1x512xf32> to vector<3x512xf32>
    %37 = arith.mulf %34, %36 : vector<3x512xf32>
    %38 = arith.truncf %37 : vector<3x512xf32> to vector<3x512xbf16>
    %c495_i32 = arith.constant 495 : i32
    %39 = tpu.dynamic_rotate %1 by %c495_i32 dim 1 : vector<3x512xf32>, i32 -> vector<3x512xf32>
    %40 = vector.extract_strided_slice %2 {offsets = [8, 0], sizes = [1, 512], strides = [1, 1]} : vector<9x512xf32> to vector<1x512xf32>
    %41 = vector.broadcast %40 : vector<1x512xf32> to vector<3x512xf32>
    %42 = arith.mulf %39, %41 : vector<3x512xf32>
    %43 = arith.truncf %42 : vector<3x512xf32> to vector<3x512xbf16>
    %44 = tpu.concatenate %7, %12, %17, %22, %23, %28, %33, %38, %43 in 0 : vector<3x512xbf16>, vector<3x512xbf16>, vector<3x512xbf16>, vector<3x512xbf16>, vector<3x512xbf16>, vector<3x512xbf16>, vector<3x512xbf16>, vector<3x512xbf16>, vector<3x512xbf16> -> vector<27x512xbf16>
    %c0_4 = arith.constant 0 : index
    %c0_5 = arith.constant 0 : index
    %45 = vector.load %arg9[%c0_4, %c0_5] : memref<8x27xbf16, #tpu.memory_space<vmem>>, vector<8x27xbf16>
    %cst = arith.constant dense<0.000000e+00> : vector<8x512xf32>
    %46 = tpu.matmul %45, %44, %cst {dimension_numbers = #tpu.dot_dimension_numbers<[1], [0], [0], [1], [0, 0, 1, 1], [], []>} : vector<8x27xbf16>, vector<27x512xbf16>, vector<8x512xf32> -> vector<8x512xf32>
    %cst_6 = arith.constant 2.000000e-01 : f32
    %47 = vector.broadcast %cst_6 : f32 to vector<8x512xf32>
    %48 = arith.mulf %47, %46 : vector<8x512xf32>
    %49 = arith.maximumf %46, %48 : vector<8x512xf32>
    %50 = arith.truncf %49 : vector<8x512xf32> to vector<8x512xbf16>
    %c0_7 = arith.constant 0 : index
    %c0_8 = arith.constant 0 : index
    %51 = vector.load %arg5[%c0_7, %c0_8] : memref<512x128xbf16, #tpu.memory_space<vmem>>, vector<512x128xbf16>
    %cst_9 = arith.constant dense<0.000000e+00> : vector<8x128xf32>
    %52 = tpu.matmul %50, %51, %cst_9 {dimension_numbers = #tpu.dot_dimension_numbers<[1], [0], [0], [1], [0, 0, 1, 1], [], []>} : vector<8x512xbf16>, vector<512x128xbf16>, vector<8x128xf32> -> vector<8x128xf32>
    %c0_10 = arith.constant 0 : index
    %c0_11 = arith.constant 0 : index
    %53 = vector.load %arg3[%c0_10, %c0_11] : memref<9x128xf32, #tpu.memory_space<vmem>>, vector<9x128xf32>
    %c9_i32 = arith.constant 9 : i32
    %54 = tpu.dynamic_rotate %52 by %c9_i32 dim 1 : vector<8x128xf32>, i32 -> vector<8x128xf32>
    %55 = vector.extract_strided_slice %53 {offsets = [0, 0], sizes = [1, 128], strides = [1, 1]} : vector<9x128xf32> to vector<1x128xf32>
    %56 = vector.broadcast %55 : vector<1x128xf32> to vector<8x128xf32>
    %57 = arith.mulf %54, %56 : vector<8x128xf32>
    %58 = arith.truncf %57 : vector<8x128xf32> to vector<8x128xbf16>
    %c8_i32 = arith.constant 8 : i32
    %59 = tpu.dynamic_rotate %52 by %c8_i32 dim 1 : vector<8x128xf32>, i32 -> vector<8x128xf32>
    %60 = vector.extract_strided_slice %53 {offsets = [1, 0], sizes = [1, 128], strides = [1, 1]} : vector<9x128xf32> to vector<1x128xf32>
    %61 = vector.broadcast %60 : vector<1x128xf32> to vector<8x128xf32>
    %62 = arith.mulf %59, %61 : vector<8x128xf32>
    %63 = arith.truncf %62 : vector<8x128xf32> to vector<8x128xbf16>
    %c7_i32 = arith.constant 7 : i32
    %64 = tpu.dynamic_rotate %52 by %c7_i32 dim 1 : vector<8x128xf32>, i32 -> vector<8x128xf32>
    %65 = vector.extract_strided_slice %53 {offsets = [2, 0], sizes = [1, 128], strides = [1, 1]} : vector<9x128xf32> to vector<1x128xf32>
    %66 = vector.broadcast %65 : vector<1x128xf32> to vector<8x128xf32>
    %67 = arith.mulf %64, %66 : vector<8x128xf32>
    %68 = arith.truncf %67 : vector<8x128xf32> to vector<8x128xbf16>
    %c1_i32_12 = arith.constant 1 : i32
    %69 = tpu.dynamic_rotate %52 by %c1_i32_12 dim 1 : vector<8x128xf32>, i32 -> vector<8x128xf32>
    %70 = vector.extract_strided_slice %53 {offsets = [3, 0], sizes = [1, 128], strides = [1, 1]} : vector<9x128xf32> to vector<1x128xf32>
    %71 = vector.broadcast %70 : vector<1x128xf32> to vector<8x128xf32>
    %72 = arith.mulf %69, %71 : vector<8x128xf32>
    %73 = arith.truncf %72 : vector<8x128xf32> to vector<8x128xbf16>
    %74 = arith.truncf %52 : vector<8x128xf32> to vector<8x128xbf16>
    %c127_i32 = arith.constant 127 : i32
    %75 = tpu.dynamic_rotate %52 by %c127_i32 dim 1 : vector<8x128xf32>, i32 -> vector<8x128xf32>
    %76 = vector.extract_strided_slice %53 {offsets = [5, 0], sizes = [1, 128], strides = [1, 1]} : vector<9x128xf32> to vector<1x128xf32>
    %77 = vector.broadcast %76 : vector<1x128xf32> to vector<8x128xf32>
    %78 = arith.mulf %75, %77 : vector<8x128xf32>
    %79 = arith.truncf %78 : vector<8x128xf32> to vector<8x128xbf16>
    %c121_i32 = arith.constant 121 : i32
    %80 = tpu.dynamic_rotate %52 by %c121_i32 dim 1 : vector<8x128xf32>, i32 -> vector<8x128xf32>
    %81 = vector.extract_strided_slice %53 {offsets = [6, 0], sizes = [1, 128], strides = [1, 1]} : vector<9x128xf32> to vector<1x128xf32>
    %82 = vector.broadcast %81 : vector<1x128xf32> to vector<8x128xf32>
    %83 = arith.mulf %80, %82 : vector<8x128xf32>
    %84 = arith.truncf %83 : vector<8x128xf32> to vector<8x128xbf16>
    %c120_i32 = arith.constant 120 : i32
    %85 = tpu.dynamic_rotate %52 by %c120_i32 dim 1 : vector<8x128xf32>, i32 -> vector<8x128xf32>
    %86 = vector.extract_strided_slice %53 {offsets = [7, 0], sizes = [1, 128], strides = [1, 1]} : vector<9x128xf32> to vector<1x128xf32>
    %87 = vector.broadcast %86 : vector<1x128xf32> to vector<8x128xf32>
    %88 = arith.mulf %85, %87 : vector<8x128xf32>
    %89 = arith.truncf %88 : vector<8x128xf32> to vector<8x128xbf16>
    %c119_i32 = arith.constant 119 : i32
    %90 = tpu.dynamic_rotate %52 by %c119_i32 dim 1 : vector<8x128xf32>, i32 -> vector<8x128xf32>
    %91 = vector.extract_strided_slice %53 {offsets = [8, 0], sizes = [1, 128], strides = [1, 1]} : vector<9x128xf32> to vector<1x128xf32>
    %92 = vector.broadcast %91 : vector<1x128xf32> to vector<8x128xf32>
    %93 = arith.mulf %90, %92 : vector<8x128xf32>
    %94 = arith.truncf %93 : vector<8x128xf32> to vector<8x128xbf16>
    %95 = tpu.concatenate %58, %63, %68, %73, %74, %79, %84, %89, %94 in 0 : vector<8x128xbf16>, vector<8x128xbf16>, vector<8x128xbf16>, vector<8x128xbf16>, vector<8x128xbf16>, vector<8x128xbf16>, vector<8x128xbf16>, vector<8x128xbf16>, vector<8x128xbf16> -> vector<72x128xbf16>
    %c0_13 = arith.constant 0 : index
    %c0_14 = arith.constant 0 : index
    %96 = vector.load %arg10[%c0_13, %c0_14] : memref<16x72xbf16, #tpu.memory_space<vmem>>, vector<16x72xbf16>
    %cst_15 = arith.constant dense<0.000000e+00> : vector<16x128xf32>
    %97 = tpu.matmul %96, %95, %cst_15 {dimension_numbers = #tpu.dot_dimension_numbers<[1], [0], [0], [1], [0, 0, 1, 1], [], []>} : vector<16x72xbf16>, vector<72x128xbf16>, vector<16x128xf32> -> vector<16x128xf32>
    %cst_16 = arith.constant 2.000000e-01 : f32
    %98 = vector.broadcast %cst_16 : f32 to vector<16x128xf32>
    %99 = arith.mulf %98, %97 : vector<16x128xf32>
    %100 = arith.maximumf %97, %99 : vector<16x128xf32>
    %101 = arith.truncf %100 : vector<16x128xf32> to vector<16x128xbf16>
    %c0_17 = arith.constant 0 : index
    %c0_18 = arith.constant 0 : index
    %102 = vector.load %arg6[%c0_17, %c0_18] : memref<128x32xbf16, #tpu.memory_space<vmem>>, vector<128x32xbf16>
    %cst_19 = arith.constant dense<0.000000e+00> : vector<16x32xf32>
    %103 = tpu.matmul %101, %102, %cst_19 {dimension_numbers = #tpu.dot_dimension_numbers<[1], [0], [0], [1], [0, 0, 1, 1], [], []>} : vector<16x128xbf16>, vector<128x32xbf16>, vector<16x32xf32> -> vector<16x32xf32>
    %c0_20 = arith.constant 0 : index
    %c0_21 = arith.constant 0 : index
    %104 = vector.load %arg4[%c0_20, %c0_21] : memref<9x32xf32, #tpu.memory_space<vmem>>, vector<9x32xf32>
    %c5_i32 = arith.constant 5 : i32
    %105 = tpu.dynamic_rotate %103 by %c5_i32 dim 1 : vector<16x32xf32>, i32 -> vector<16x32xf32>
    %106 = vector.extract_strided_slice %104 {offsets = [0, 0], sizes = [1, 32], strides = [1, 1]} : vector<9x32xf32> to vector<1x32xf32>
    %107 = vector.broadcast %106 : vector<1x32xf32> to vector<16x32xf32>
    %108 = arith.mulf %105, %107 : vector<16x32xf32>
    %109 = arith.truncf %108 : vector<16x32xf32> to vector<16x32xbf16>
    %c4_i32 = arith.constant 4 : i32
    %110 = tpu.dynamic_rotate %103 by %c4_i32 dim 1 : vector<16x32xf32>, i32 -> vector<16x32xf32>
    %111 = vector.extract_strided_slice %104 {offsets = [1, 0], sizes = [1, 32], strides = [1, 1]} : vector<9x32xf32> to vector<1x32xf32>
    %112 = vector.broadcast %111 : vector<1x32xf32> to vector<16x32xf32>
    %113 = arith.mulf %110, %112 : vector<16x32xf32>
    %114 = arith.truncf %113 : vector<16x32xf32> to vector<16x32xbf16>
    %c3_i32 = arith.constant 3 : i32
    %115 = tpu.dynamic_rotate %103 by %c3_i32 dim 1 : vector<16x32xf32>, i32 -> vector<16x32xf32>
    %116 = vector.extract_strided_slice %104 {offsets = [2, 0], sizes = [1, 32], strides = [1, 1]} : vector<9x32xf32> to vector<1x32xf32>
    %117 = vector.broadcast %116 : vector<1x32xf32> to vector<16x32xf32>
    %118 = arith.mulf %115, %117 : vector<16x32xf32>
    %119 = arith.truncf %118 : vector<16x32xf32> to vector<16x32xbf16>
    %c1_i32_22 = arith.constant 1 : i32
    %120 = tpu.dynamic_rotate %103 by %c1_i32_22 dim 1 : vector<16x32xf32>, i32 -> vector<16x32xf32>
    %121 = vector.extract_strided_slice %104 {offsets = [3, 0], sizes = [1, 32], strides = [1, 1]} : vector<9x32xf32> to vector<1x32xf32>
    %122 = vector.broadcast %121 : vector<1x32xf32> to vector<16x32xf32>
    %123 = arith.mulf %120, %122 : vector<16x32xf32>
    %124 = arith.truncf %123 : vector<16x32xf32> to vector<16x32xbf16>
    %125 = arith.truncf %103 : vector<16x32xf32> to vector<16x32xbf16>
    %c31_i32 = arith.constant 31 : i32
    %126 = tpu.dynamic_rotate %103 by %c31_i32 dim 1 : vector<16x32xf32>, i32 -> vector<16x32xf32>
    %127 = vector.extract_strided_slice %104 {offsets = [5, 0], sizes = [1, 32], strides = [1, 1]} : vector<9x32xf32> to vector<1x32xf32>
    %128 = vector.broadcast %127 : vector<1x32xf32> to vector<16x32xf32>
    %129 = arith.mulf %126, %128 : vector<16x32xf32>
    %130 = arith.truncf %129 : vector<16x32xf32> to vector<16x32xbf16>
    %c29_i32 = arith.constant 29 : i32
    %131 = tpu.dynamic_rotate %103 by %c29_i32 dim 1 : vector<16x32xf32>, i32 -> vector<16x32xf32>
    %132 = vector.extract_strided_slice %104 {offsets = [6, 0], sizes = [1, 32], strides = [1, 1]} : vector<9x32xf32> to vector<1x32xf32>
    %133 = vector.broadcast %132 : vector<1x32xf32> to vector<16x32xf32>
    %134 = arith.mulf %131, %133 : vector<16x32xf32>
    %135 = arith.truncf %134 : vector<16x32xf32> to vector<16x32xbf16>
    %c28_i32 = arith.constant 28 : i32
    %136 = tpu.dynamic_rotate %103 by %c28_i32 dim 1 : vector<16x32xf32>, i32 -> vector<16x32xf32>
    %137 = vector.extract_strided_slice %104 {offsets = [7, 0], sizes = [1, 32], strides = [1, 1]} : vector<9x32xf32> to vector<1x32xf32>
    %138 = vector.broadcast %137 : vector<1x32xf32> to vector<16x32xf32>
    %139 = arith.mulf %136, %138 : vector<16x32xf32>
    %140 = arith.truncf %139 : vector<16x32xf32> to vector<16x32xbf16>
    %c27_i32 = arith.constant 27 : i32
    %141 = tpu.dynamic_rotate %103 by %c27_i32 dim 1 : vector<16x32xf32>, i32 -> vector<16x32xf32>
    %142 = vector.extract_strided_slice %104 {offsets = [8, 0], sizes = [1, 32], strides = [1, 1]} : vector<9x32xf32> to vector<1x32xf32>
    %143 = vector.broadcast %142 : vector<1x32xf32> to vector<16x32xf32>
    %144 = arith.mulf %141, %143 : vector<16x32xf32>
    %145 = arith.truncf %144 : vector<16x32xf32> to vector<16x32xbf16>
    %146 = tpu.concatenate %109, %114, %119, %124, %125, %130, %135, %140, %145 in 0 : vector<16x32xbf16>, vector<16x32xbf16>, vector<16x32xbf16>, vector<16x32xbf16>, vector<16x32xbf16>, vector<16x32xbf16>, vector<16x32xbf16>, vector<16x32xbf16>, vector<16x32xbf16> -> vector<144x32xbf16>
    %c0_23 = arith.constant 0 : index
    %c0_24 = arith.constant 0 : index
    %147 = vector.load %arg11[%c0_23, %c0_24] : memref<16x144xbf16, #tpu.memory_space<vmem>>, vector<16x144xbf16>
    %cst_25 = arith.constant dense<0.000000e+00> : vector<16x32xf32>
    %148 = tpu.matmul %147, %146, %cst_25 {dimension_numbers = #tpu.dot_dimension_numbers<[1], [0], [0], [1], [0, 0, 1, 1], [], []>} : vector<16x144xbf16>, vector<144x32xbf16>, vector<16x32xf32> -> vector<16x32xf32>
    %c0_26 = arith.constant 0 : index
    %c0_27 = arith.constant 0 : index
    %149 = vector.load %arg12[%c0_26, %c0_27] : memref<16x1xf32, #tpu.memory_space<vmem>>, vector<16x1xf32>
    %150 = vector.broadcast %149 : vector<16x1xf32> to vector<16x32xf32>
    %151 = arith.addf %148, %150 : vector<16x32xf32>
    %cst_28 = arith.constant 2.000000e-01 : f32
    %152 = vector.broadcast %cst_28 : f32 to vector<16x32xf32>
    %153 = arith.mulf %152, %151 : vector<16x32xf32>
    %154 = arith.maximumf %151, %153 : vector<16x32xf32>
    %c5_i32_29 = arith.constant 5 : i32
    %155 = tpu.dynamic_rotate %154 by %c5_i32_29 dim 1 : vector<16x32xf32>, i32 -> vector<16x32xf32>
    %156 = vector.extract_strided_slice %104 {offsets = [0, 0], sizes = [1, 32], strides = [1, 1]} : vector<9x32xf32> to vector<1x32xf32>
    %157 = vector.broadcast %156 : vector<1x32xf32> to vector<16x32xf32>
    %158 = arith.mulf %155, %157 : vector<16x32xf32>
    %159 = arith.truncf %158 : vector<16x32xf32> to vector<16x32xbf16>
    %c4_i32_30 = arith.constant 4 : i32
    %160 = tpu.dynamic_rotate %154 by %c4_i32_30 dim 1 : vector<16x32xf32>, i32 -> vector<16x32xf32>
    %161 = vector.extract_strided_slice %104 {offsets = [1, 0], sizes = [1, 32], strides = [1, 1]} : vector<9x32xf32> to vector<1x32xf32>
    %162 = vector.broadcast %161 : vector<1x32xf32> to vector<16x32xf32>
    %163 = arith.mulf %160, %162 : vector<16x32xf32>
    %164 = arith.truncf %163 : vector<16x32xf32> to vector<16x32xbf16>
    %c3_i32_31 = arith.constant 3 : i32
    %165 = tpu.dynamic_rotate %154 by %c3_i32_31 dim 1 : vector<16x32xf32>, i32 -> vector<16x32xf32>
    %166 = vector.extract_strided_slice %104 {offsets = [2, 0], sizes = [1, 32], strides = [1, 1]} : vector<9x32xf32> to vector<1x32xf32>
    %167 = vector.broadcast %166 : vector<1x32xf32> to vector<16x32xf32>
    %168 = arith.mulf %165, %167 : vector<16x32xf32>
    %169 = arith.truncf %168 : vector<16x32xf32> to vector<16x32xbf16>
    %c1_i32_32 = arith.constant 1 : i32
    %170 = tpu.dynamic_rotate %154 by %c1_i32_32 dim 1 : vector<16x32xf32>, i32 -> vector<16x32xf32>
    %171 = vector.extract_strided_slice %104 {offsets = [3, 0], sizes = [1, 32], strides = [1, 1]} : vector<9x32xf32> to vector<1x32xf32>
    %172 = vector.broadcast %171 : vector<1x32xf32> to vector<16x32xf32>
    %173 = arith.mulf %170, %172 : vector<16x32xf32>
    %174 = arith.truncf %173 : vector<16x32xf32> to vector<16x32xbf16>
    %175 = arith.truncf %154 : vector<16x32xf32> to vector<16x32xbf16>
    %c31_i32_33 = arith.constant 31 : i32
    %176 = tpu.dynamic_rotate %154 by %c31_i32_33 dim 1 : vector<16x32xf32>, i32 -> vector<16x32xf32>
    %177 = vector.extract_strided_slice %104 {offsets = [5, 0], sizes = [1, 32], strides = [1, 1]} : vector<9x32xf32> to vector<1x32xf32>
    %178 = vector.broadcast %177 : vector<1x32xf32> to vector<16x32xf32>
    %179 = arith.mulf %176, %178 : vector<16x32xf32>
    %180 = arith.truncf %179 : vector<16x32xf32> to vector<16x32xbf16>
    %c29_i32_34 = arith.constant 29 : i32
    %181 = tpu.dynamic_rotate %154 by %c29_i32_34 dim 1 : vector<16x32xf32>, i32 -> vector<16x32xf32>
    %182 = vector.extract_strided_slice %104 {offsets = [6, 0], sizes = [1, 32], strides = [1, 1]} : vector<9x32xf32> to vector<1x32xf32>
    %183 = vector.broadcast %182 : vector<1x32xf32> to vector<16x32xf32>
    %184 = arith.mulf %181, %183 : vector<16x32xf32>
    %185 = arith.truncf %184 : vector<16x32xf32> to vector<16x32xbf16>
    %c28_i32_35 = arith.constant 28 : i32
    %186 = tpu.dynamic_rotate %154 by %c28_i32_35 dim 1 : vector<16x32xf32>, i32 -> vector<16x32xf32>
    %187 = vector.extract_strided_slice %104 {offsets = [7, 0], sizes = [1, 32], strides = [1, 1]} : vector<9x32xf32> to vector<1x32xf32>
    %188 = vector.broadcast %187 : vector<1x32xf32> to vector<16x32xf32>
    %189 = arith.mulf %186, %188 : vector<16x32xf32>
    %190 = arith.truncf %189 : vector<16x32xf32> to vector<16x32xbf16>
    %c27_i32_36 = arith.constant 27 : i32
    %191 = tpu.dynamic_rotate %154 by %c27_i32_36 dim 1 : vector<16x32xf32>, i32 -> vector<16x32xf32>
    %192 = vector.extract_strided_slice %104 {offsets = [8, 0], sizes = [1, 32], strides = [1, 1]} : vector<9x32xf32> to vector<1x32xf32>
    %193 = vector.broadcast %192 : vector<1x32xf32> to vector<16x32xf32>
    %194 = arith.mulf %191, %193 : vector<16x32xf32>
    %195 = arith.truncf %194 : vector<16x32xf32> to vector<16x32xbf16>
    %196 = tpu.concatenate %159, %164, %169, %174, %175, %180, %185, %190, %195 in 0 : vector<16x32xbf16>, vector<16x32xbf16>, vector<16x32xbf16>, vector<16x32xbf16>, vector<16x32xbf16>, vector<16x32xbf16>, vector<16x32xbf16>, vector<16x32xbf16>, vector<16x32xbf16> -> vector<144x32xbf16>
    %c0_37 = arith.constant 0 : index
    %c0_38 = arith.constant 0 : index
    %197 = vector.load %arg13[%c0_37, %c0_38] : memref<16x144xbf16, #tpu.memory_space<vmem>>, vector<16x144xbf16>
    %cst_39 = arith.constant dense<0.000000e+00> : vector<16x32xf32>
    %198 = tpu.matmul %197, %196, %cst_39 {dimension_numbers = #tpu.dot_dimension_numbers<[1], [0], [0], [1], [0, 0, 1, 1], [], []>} : vector<16x144xbf16>, vector<144x32xbf16>, vector<16x32xf32> -> vector<16x32xf32>
    %c0_40 = arith.constant 0 : index
    %c0_41 = arith.constant 0 : index
    %199 = vector.load %arg14[%c0_40, %c0_41] : memref<16x1xf32, #tpu.memory_space<vmem>>, vector<16x1xf32>
    %200 = vector.broadcast %199 : vector<16x1xf32> to vector<16x32xf32>
    %201 = arith.addf %198, %200 : vector<16x32xf32>
    %202 = arith.addf %103, %201 : vector<16x32xf32>
    %c5_i32_42 = arith.constant 5 : i32
    %203 = tpu.dynamic_rotate %202 by %c5_i32_42 dim 1 : vector<16x32xf32>, i32 -> vector<16x32xf32>
    %204 = vector.extract_strided_slice %104 {offsets = [0, 0], sizes = [1, 32], strides = [1, 1]} : vector<9x32xf32> to vector<1x32xf32>
    %205 = vector.broadcast %204 : vector<1x32xf32> to vector<16x32xf32>
    %206 = arith.mulf %203, %205 : vector<16x32xf32>
    %207 = arith.truncf %206 : vector<16x32xf32> to vector<16x32xbf16>
    %c4_i32_43 = arith.constant 4 : i32
    %208 = tpu.dynamic_rotate %202 by %c4_i32_43 dim 1 : vector<16x32xf32>, i32 -> vector<16x32xf32>
    %209 = vector.extract_strided_slice %104 {offsets = [1, 0], sizes = [1, 32], strides = [1, 1]} : vector<9x32xf32> to vector<1x32xf32>
    %210 = vector.broadcast %209 : vector<1x32xf32> to vector<16x32xf32>
    %211 = arith.mulf %208, %210 : vector<16x32xf32>
    %212 = arith.truncf %211 : vector<16x32xf32> to vector<16x32xbf16>
    %c3_i32_44 = arith.constant 3 : i32
    %213 = tpu.dynamic_rotate %202 by %c3_i32_44 dim 1 : vector<16x32xf32>, i32 -> vector<16x32xf32>
    %214 = vector.extract_strided_slice %104 {offsets = [2, 0], sizes = [1, 32], strides = [1, 1]} : vector<9x32xf32> to vector<1x32xf32>
    %215 = vector.broadcast %214 : vector<1x32xf32> to vector<16x32xf32>
    %216 = arith.mulf %213, %215 : vector<16x32xf32>
    %217 = arith.truncf %216 : vector<16x32xf32> to vector<16x32xbf16>
    %c1_i32_45 = arith.constant 1 : i32
    %218 = tpu.dynamic_rotate %202 by %c1_i32_45 dim 1 : vector<16x32xf32>, i32 -> vector<16x32xf32>
    %219 = vector.extract_strided_slice %104 {offsets = [3, 0], sizes = [1, 32], strides = [1, 1]} : vector<9x32xf32> to vector<1x32xf32>
    %220 = vector.broadcast %219 : vector<1x32xf32> to vector<16x32xf32>
    %221 = arith.mulf %218, %220 : vector<16x32xf32>
    %222 = arith.truncf %221 : vector<16x32xf32> to vector<16x32xbf16>
    %223 = arith.truncf %202 : vector<16x32xf32> to vector<16x32xbf16>
    %c31_i32_46 = arith.constant 31 : i32
    %224 = tpu.dynamic_rotate %202 by %c31_i32_46 dim 1 : vector<16x32xf32>, i32 -> vector<16x32xf32>
    %225 = vector.extract_strided_slice %104 {offsets = [5, 0], sizes = [1, 32], strides = [1, 1]} : vector<9x32xf32> to vector<1x32xf32>
    %226 = vector.broadcast %225 : vector<1x32xf32> to vector<16x32xf32>
    %227 = arith.mulf %224, %226 : vector<16x32xf32>
    %228 = arith.truncf %227 : vector<16x32xf32> to vector<16x32xbf16>
    %c29_i32_47 = arith.constant 29 : i32
    %229 = tpu.dynamic_rotate %202 by %c29_i32_47 dim 1 : vector<16x32xf32>, i32 -> vector<16x32xf32>
    %230 = vector.extract_strided_slice %104 {offsets = [6, 0], sizes = [1, 32], strides = [1, 1]} : vector<9x32xf32> to vector<1x32xf32>
    %231 = vector.broadcast %230 : vector<1x32xf32> to vector<16x32xf32>
    %232 = arith.mulf %229, %231 : vector<16x32xf32>
    %233 = arith.truncf %232 : vector<16x32xf32> to vector<16x32xbf16>
    %c28_i32_48 = arith.constant 28 : i32
    %234 = tpu.dynamic_rotate %202 by %c28_i32_48 dim 1 : vector<16x32xf32>, i32 -> vector<16x32xf32>
    %235 = vector.extract_strided_slice %104 {offsets = [7, 0], sizes = [1, 32], strides = [1, 1]} : vector<9x32xf32> to vector<1x32xf32>
    %236 = vector.broadcast %235 : vector<1x32xf32> to vector<16x32xf32>
    %237 = arith.mulf %234, %236 : vector<16x32xf32>
    %238 = arith.truncf %237 : vector<16x32xf32> to vector<16x32xbf16>
    %c27_i32_49 = arith.constant 27 : i32
    %239 = tpu.dynamic_rotate %202 by %c27_i32_49 dim 1 : vector<16x32xf32>, i32 -> vector<16x32xf32>
    %240 = vector.extract_strided_slice %104 {offsets = [8, 0], sizes = [1, 32], strides = [1, 1]} : vector<9x32xf32> to vector<1x32xf32>
    %241 = vector.broadcast %240 : vector<1x32xf32> to vector<16x32xf32>
    %242 = arith.mulf %239, %241 : vector<16x32xf32>
    %243 = arith.truncf %242 : vector<16x32xf32> to vector<16x32xbf16>
    %244 = tpu.concatenate %207, %212, %217, %222, %223, %228, %233, %238, %243 in 0 : vector<16x32xbf16>, vector<16x32xbf16>, vector<16x32xbf16>, vector<16x32xbf16>, vector<16x32xbf16>, vector<16x32xbf16>, vector<16x32xbf16>, vector<16x32xbf16>, vector<16x32xbf16> -> vector<144x32xbf16>
    %c0_50 = arith.constant 0 : index
    %c0_51 = arith.constant 0 : index
    %245 = vector.load %arg15[%c0_50, %c0_51] : memref<16x144xbf16, #tpu.memory_space<vmem>>, vector<16x144xbf16>
    %cst_52 = arith.constant dense<0.000000e+00> : vector<16x32xf32>
    %246 = tpu.matmul %245, %244, %cst_52 {dimension_numbers = #tpu.dot_dimension_numbers<[1], [0], [0], [1], [0, 0, 1, 1], [], []>} : vector<16x144xbf16>, vector<144x32xbf16>, vector<16x32xf32> -> vector<16x32xf32>
    %c0_53 = arith.constant 0 : index
    %c0_54 = arith.constant 0 : index
    %247 = vector.load %arg16[%c0_53, %c0_54] : memref<16x1xf32, #tpu.memory_space<vmem>>, vector<16x1xf32>
    %248 = vector.broadcast %247 : vector<16x1xf32> to vector<16x32xf32>
    %249 = arith.addf %246, %248 : vector<16x32xf32>
    %cst_55 = arith.constant 2.000000e-01 : f32
    %250 = vector.broadcast %cst_55 : f32 to vector<16x32xf32>
    %251 = arith.mulf %250, %249 : vector<16x32xf32>
    %252 = arith.maximumf %249, %251 : vector<16x32xf32>
    %c5_i32_56 = arith.constant 5 : i32
    %253 = tpu.dynamic_rotate %252 by %c5_i32_56 dim 1 : vector<16x32xf32>, i32 -> vector<16x32xf32>
    %254 = vector.extract_strided_slice %104 {offsets = [0, 0], sizes = [1, 32], strides = [1, 1]} : vector<9x32xf32> to vector<1x32xf32>
    %255 = vector.broadcast %254 : vector<1x32xf32> to vector<16x32xf32>
    %256 = arith.mulf %253, %255 : vector<16x32xf32>
    %257 = arith.truncf %256 : vector<16x32xf32> to vector<16x32xbf16>
    %c4_i32_57 = arith.constant 4 : i32
    %258 = tpu.dynamic_rotate %252 by %c4_i32_57 dim 1 : vector<16x32xf32>, i32 -> vector<16x32xf32>
    %259 = vector.extract_strided_slice %104 {offsets = [1, 0], sizes = [1, 32], strides = [1, 1]} : vector<9x32xf32> to vector<1x32xf32>
    %260 = vector.broadcast %259 : vector<1x32xf32> to vector<16x32xf32>
    %261 = arith.mulf %258, %260 : vector<16x32xf32>
    %262 = arith.truncf %261 : vector<16x32xf32> to vector<16x32xbf16>
    %c3_i32_58 = arith.constant 3 : i32
    %263 = tpu.dynamic_rotate %252 by %c3_i32_58 dim 1 : vector<16x32xf32>, i32 -> vector<16x32xf32>
    %264 = vector.extract_strided_slice %104 {offsets = [2, 0], sizes = [1, 32], strides = [1, 1]} : vector<9x32xf32> to vector<1x32xf32>
    %265 = vector.broadcast %264 : vector<1x32xf32> to vector<16x32xf32>
    %266 = arith.mulf %263, %265 : vector<16x32xf32>
    %267 = arith.truncf %266 : vector<16x32xf32> to vector<16x32xbf16>
    %c1_i32_59 = arith.constant 1 : i32
    %268 = tpu.dynamic_rotate %252 by %c1_i32_59 dim 1 : vector<16x32xf32>, i32 -> vector<16x32xf32>
    %269 = vector.extract_strided_slice %104 {offsets = [3, 0], sizes = [1, 32], strides = [1, 1]} : vector<9x32xf32> to vector<1x32xf32>
    %270 = vector.broadcast %269 : vector<1x32xf32> to vector<16x32xf32>
    %271 = arith.mulf %268, %270 : vector<16x32xf32>
    %272 = arith.truncf %271 : vector<16x32xf32> to vector<16x32xbf16>
    %273 = arith.truncf %252 : vector<16x32xf32> to vector<16x32xbf16>
    %c31_i32_60 = arith.constant 31 : i32
    %274 = tpu.dynamic_rotate %252 by %c31_i32_60 dim 1 : vector<16x32xf32>, i32 -> vector<16x32xf32>
    %275 = vector.extract_strided_slice %104 {offsets = [5, 0], sizes = [1, 32], strides = [1, 1]} : vector<9x32xf32> to vector<1x32xf32>
    %276 = vector.broadcast %275 : vector<1x32xf32> to vector<16x32xf32>
    %277 = arith.mulf %274, %276 : vector<16x32xf32>
    %278 = arith.truncf %277 : vector<16x32xf32> to vector<16x32xbf16>
    %c29_i32_61 = arith.constant 29 : i32
    %279 = tpu.dynamic_rotate %252 by %c29_i32_61 dim 1 : vector<16x32xf32>, i32 -> vector<16x32xf32>
    %280 = vector.extract_strided_slice %104 {offsets = [6, 0], sizes = [1, 32], strides = [1, 1]} : vector<9x32xf32> to vector<1x32xf32>
    %281 = vector.broadcast %280 : vector<1x32xf32> to vector<16x32xf32>
    %282 = arith.mulf %279, %281 : vector<16x32xf32>
    %283 = arith.truncf %282 : vector<16x32xf32> to vector<16x32xbf16>
    %c28_i32_62 = arith.constant 28 : i32
    %284 = tpu.dynamic_rotate %252 by %c28_i32_62 dim 1 : vector<16x32xf32>, i32 -> vector<16x32xf32>
    %285 = vector.extract_strided_slice %104 {offsets = [7, 0], sizes = [1, 32], strides = [1, 1]} : vector<9x32xf32> to vector<1x32xf32>
    %286 = vector.broadcast %285 : vector<1x32xf32> to vector<16x32xf32>
    %287 = arith.mulf %284, %286 : vector<16x32xf32>
    %288 = arith.truncf %287 : vector<16x32xf32> to vector<16x32xbf16>
    %c27_i32_63 = arith.constant 27 : i32
    %289 = tpu.dynamic_rotate %252 by %c27_i32_63 dim 1 : vector<16x32xf32>, i32 -> vector<16x32xf32>
    %290 = vector.extract_strided_slice %104 {offsets = [8, 0], sizes = [1, 32], strides = [1, 1]} : vector<9x32xf32> to vector<1x32xf32>
    %291 = vector.broadcast %290 : vector<1x32xf32> to vector<16x32xf32>
    %292 = arith.mulf %289, %291 : vector<16x32xf32>
    %293 = arith.truncf %292 : vector<16x32xf32> to vector<16x32xbf16>
    %294 = tpu.concatenate %257, %262, %267, %272, %273, %278, %283, %288, %293 in 0 : vector<16x32xbf16>, vector<16x32xbf16>, vector<16x32xbf16>, vector<16x32xbf16>, vector<16x32xbf16>, vector<16x32xbf16>, vector<16x32xbf16>, vector<16x32xbf16>, vector<16x32xbf16> -> vector<144x32xbf16>
    %c0_64 = arith.constant 0 : index
    %c0_65 = arith.constant 0 : index
    %295 = vector.load %arg17[%c0_64, %c0_65] : memref<16x144xbf16, #tpu.memory_space<vmem>>, vector<16x144xbf16>
    %cst_66 = arith.constant dense<0.000000e+00> : vector<16x32xf32>
    %296 = tpu.matmul %295, %294, %cst_66 {dimension_numbers = #tpu.dot_dimension_numbers<[1], [0], [0], [1], [0, 0, 1, 1], [], []>} : vector<16x144xbf16>, vector<144x32xbf16>, vector<16x32xf32> -> vector<16x32xf32>
    %c0_67 = arith.constant 0 : index
    %c0_68 = arith.constant 0 : index
    %297 = vector.load %arg18[%c0_67, %c0_68] : memref<16x1xf32, #tpu.memory_space<vmem>>, vector<16x1xf32>
    %298 = vector.broadcast %297 : vector<16x1xf32> to vector<16x32xf32>
    %299 = arith.addf %296, %298 : vector<16x32xf32>
    %300 = arith.addf %202, %299 : vector<16x32xf32>
    %301 = tpu.concatenate %300, %103 in 0 : vector<16x32xf32>, vector<16x32xf32> -> vector<32x32xf32>
    %302 = arith.truncf %301 : vector<32x32xf32> to vector<32x32xbf16>
    %c0_69 = arith.constant 0 : index
    %c0_70 = arith.constant 0 : index
    %303 = vector.load %arg7[%c0_69, %c0_70] : memref<32x128xbf16, #tpu.memory_space<vmem>>, vector<32x128xbf16>
    %cst_71 = arith.constant dense<0.000000e+00> : vector<32x128xf32>
    %304 = tpu.matmul %302, %303, %cst_71 {dimension_numbers = #tpu.dot_dimension_numbers<[1], [0], [0], [1], [0, 0, 1, 1], [], []>} : vector<32x32xbf16>, vector<32x128xbf16>, vector<32x128xf32> -> vector<32x128xf32>
    %c0_72 = arith.constant 0 : index
    %c0_73 = arith.constant 0 : index
    %305 = vector.load %arg3[%c0_72, %c0_73] : memref<9x128xf32, #tpu.memory_space<vmem>>, vector<9x128xf32>
    %c9_i32_74 = arith.constant 9 : i32
    %306 = tpu.dynamic_rotate %304 by %c9_i32_74 dim 1 : vector<32x128xf32>, i32 -> vector<32x128xf32>
    %307 = vector.extract_strided_slice %305 {offsets = [0, 0], sizes = [1, 128], strides = [1, 1]} : vector<9x128xf32> to vector<1x128xf32>
    %308 = vector.broadcast %307 : vector<1x128xf32> to vector<32x128xf32>
    %309 = arith.mulf %306, %308 : vector<32x128xf32>
    %310 = arith.truncf %309 : vector<32x128xf32> to vector<32x128xbf16>
    %c8_i32_75 = arith.constant 8 : i32
    %311 = tpu.dynamic_rotate %304 by %c8_i32_75 dim 1 : vector<32x128xf32>, i32 -> vector<32x128xf32>
    %312 = vector.extract_strided_slice %305 {offsets = [1, 0], sizes = [1, 128], strides = [1, 1]} : vector<9x128xf32> to vector<1x128xf32>
    %313 = vector.broadcast %312 : vector<1x128xf32> to vector<32x128xf32>
    %314 = arith.mulf %311, %313 : vector<32x128xf32>
    %315 = arith.truncf %314 : vector<32x128xf32> to vector<32x128xbf16>
    %c7_i32_76 = arith.constant 7 : i32
    %316 = tpu.dynamic_rotate %304 by %c7_i32_76 dim 1 : vector<32x128xf32>, i32 -> vector<32x128xf32>
    %317 = vector.extract_strided_slice %305 {offsets = [2, 0], sizes = [1, 128], strides = [1, 1]} : vector<9x128xf32> to vector<1x128xf32>
    %318 = vector.broadcast %317 : vector<1x128xf32> to vector<32x128xf32>
    %319 = arith.mulf %316, %318 : vector<32x128xf32>
    %320 = arith.truncf %319 : vector<32x128xf32> to vector<32x128xbf16>
    %c1_i32_77 = arith.constant 1 : i32
    %321 = tpu.dynamic_rotate %304 by %c1_i32_77 dim 1 : vector<32x128xf32>, i32 -> vector<32x128xf32>
    %322 = vector.extract_strided_slice %305 {offsets = [3, 0], sizes = [1, 128], strides = [1, 1]} : vector<9x128xf32> to vector<1x128xf32>
    %323 = vector.broadcast %322 : vector<1x128xf32> to vector<32x128xf32>
    %324 = arith.mulf %321, %323 : vector<32x128xf32>
    %325 = arith.truncf %324 : vector<32x128xf32> to vector<32x128xbf16>
    %326 = arith.truncf %304 : vector<32x128xf32> to vector<32x128xbf16>
    %c127_i32_78 = arith.constant 127 : i32
    %327 = tpu.dynamic_rotate %304 by %c127_i32_78 dim 1 : vector<32x128xf32>, i32 -> vector<32x128xf32>
    %328 = vector.extract_strided_slice %305 {offsets = [5, 0], sizes = [1, 128], strides = [1, 1]} : vector<9x128xf32> to vector<1x128xf32>
    %329 = vector.broadcast %328 : vector<1x128xf32> to vector<32x128xf32>
    %330 = arith.mulf %327, %329 : vector<32x128xf32>
    %331 = arith.truncf %330 : vector<32x128xf32> to vector<32x128xbf16>
    %c121_i32_79 = arith.constant 121 : i32
    %332 = tpu.dynamic_rotate %304 by %c121_i32_79 dim 1 : vector<32x128xf32>, i32 -> vector<32x128xf32>
    %333 = vector.extract_strided_slice %305 {offsets = [6, 0], sizes = [1, 128], strides = [1, 1]} : vector<9x128xf32> to vector<1x128xf32>
    %334 = vector.broadcast %333 : vector<1x128xf32> to vector<32x128xf32>
    %335 = arith.mulf %332, %334 : vector<32x128xf32>
    %336 = arith.truncf %335 : vector<32x128xf32> to vector<32x128xbf16>
    %c120_i32_80 = arith.constant 120 : i32
    %337 = tpu.dynamic_rotate %304 by %c120_i32_80 dim 1 : vector<32x128xf32>, i32 -> vector<32x128xf32>
    %338 = vector.extract_strided_slice %305 {offsets = [7, 0], sizes = [1, 128], strides = [1, 1]} : vector<9x128xf32> to vector<1x128xf32>
    %339 = vector.broadcast %338 : vector<1x128xf32> to vector<32x128xf32>
    %340 = arith.mulf %337, %339 : vector<32x128xf32>
    %341 = arith.truncf %340 : vector<32x128xf32> to vector<32x128xbf16>
    %c119_i32_81 = arith.constant 119 : i32
    %342 = tpu.dynamic_rotate %304 by %c119_i32_81 dim 1 : vector<32x128xf32>, i32 -> vector<32x128xf32>
    %343 = vector.extract_strided_slice %305 {offsets = [8, 0], sizes = [1, 128], strides = [1, 1]} : vector<9x128xf32> to vector<1x128xf32>
    %344 = vector.broadcast %343 : vector<1x128xf32> to vector<32x128xf32>
    %345 = arith.mulf %342, %344 : vector<32x128xf32>
    %346 = arith.truncf %345 : vector<32x128xf32> to vector<32x128xbf16>
    %347 = tpu.concatenate %310, %315, %320, %325, %326, %331, %336, %341, %346 in 0 : vector<32x128xbf16>, vector<32x128xbf16>, vector<32x128xbf16>, vector<32x128xbf16>, vector<32x128xbf16>, vector<32x128xbf16>, vector<32x128xbf16>, vector<32x128xbf16>, vector<32x128xbf16> -> vector<288x128xbf16>
    %c0_82 = arith.constant 0 : index
    %c0_83 = arith.constant 0 : index
    %348 = vector.load %arg19[%c0_82, %c0_83] : memref<8x288xbf16, #tpu.memory_space<vmem>>, vector<8x288xbf16>
    %cst_84 = arith.constant dense<0.000000e+00> : vector<8x128xf32>
    %349 = tpu.matmul %348, %347, %cst_84 {dimension_numbers = #tpu.dot_dimension_numbers<[1], [0], [0], [1], [0, 0, 1, 1], [], []>} : vector<8x288xbf16>, vector<288x128xbf16>, vector<8x128xf32> -> vector<8x128xf32>
    %cst_85 = arith.constant 2.000000e-01 : f32
    %350 = vector.broadcast %cst_85 : f32 to vector<8x128xf32>
    %351 = arith.mulf %350, %349 : vector<8x128xf32>
    %352 = arith.maximumf %349, %351 : vector<8x128xf32>
    %353 = tpu.concatenate %352, %52 in 0 : vector<8x128xf32>, vector<8x128xf32> -> vector<16x128xf32>
    %354 = arith.truncf %353 : vector<16x128xf32> to vector<16x128xbf16>
    %c0_86 = arith.constant 0 : index
    %c0_87 = arith.constant 0 : index
    %355 = vector.load %arg8[%c0_86, %c0_87] : memref<128x512xbf16, #tpu.memory_space<vmem>>, vector<128x512xbf16>
    %cst_88 = arith.constant dense<0.000000e+00> : vector<16x512xf32>
    %356 = tpu.matmul %354, %355, %cst_88 {dimension_numbers = #tpu.dot_dimension_numbers<[1], [0], [0], [1], [0, 0, 1, 1], [], []>} : vector<16x128xbf16>, vector<128x512xbf16>, vector<16x512xf32> -> vector<16x512xf32>
    %c0_89 = arith.constant 0 : index
    %c0_90 = arith.constant 0 : index
    %357 = vector.load %arg2[%c0_89, %c0_90] : memref<9x512xf32, #tpu.memory_space<vmem>>, vector<9x512xf32>
    %c17_i32_91 = arith.constant 17 : i32
    %358 = tpu.dynamic_rotate %356 by %c17_i32_91 dim 1 : vector<16x512xf32>, i32 -> vector<16x512xf32>
    %359 = vector.extract_strided_slice %357 {offsets = [0, 0], sizes = [1, 512], strides = [1, 1]} : vector<9x512xf32> to vector<1x512xf32>
    %360 = vector.broadcast %359 : vector<1x512xf32> to vector<16x512xf32>
    %361 = arith.mulf %358, %360 : vector<16x512xf32>
    %362 = arith.truncf %361 : vector<16x512xf32> to vector<16x512xbf16>
    %c16_i32_92 = arith.constant 16 : i32
    %363 = tpu.dynamic_rotate %356 by %c16_i32_92 dim 1 : vector<16x512xf32>, i32 -> vector<16x512xf32>
    %364 = vector.extract_strided_slice %357 {offsets = [1, 0], sizes = [1, 512], strides = [1, 1]} : vector<9x512xf32> to vector<1x512xf32>
    %365 = vector.broadcast %364 : vector<1x512xf32> to vector<16x512xf32>
    %366 = arith.mulf %363, %365 : vector<16x512xf32>
    %367 = arith.truncf %366 : vector<16x512xf32> to vector<16x512xbf16>
    %c15_i32_93 = arith.constant 15 : i32
    %368 = tpu.dynamic_rotate %356 by %c15_i32_93 dim 1 : vector<16x512xf32>, i32 -> vector<16x512xf32>
    %369 = vector.extract_strided_slice %357 {offsets = [2, 0], sizes = [1, 512], strides = [1, 1]} : vector<9x512xf32> to vector<1x512xf32>
    %370 = vector.broadcast %369 : vector<1x512xf32> to vector<16x512xf32>
    %371 = arith.mulf %368, %370 : vector<16x512xf32>
    %372 = arith.truncf %371 : vector<16x512xf32> to vector<16x512xbf16>
    %c1_i32_94 = arith.constant 1 : i32
    %373 = tpu.dynamic_rotate %356 by %c1_i32_94 dim 1 : vector<16x512xf32>, i32 -> vector<16x512xf32>
    %374 = vector.extract_strided_slice %357 {offsets = [3, 0], sizes = [1, 512], strides = [1, 1]} : vector<9x512xf32> to vector<1x512xf32>
    %375 = vector.broadcast %374 : vector<1x512xf32> to vector<16x512xf32>
    %376 = arith.mulf %373, %375 : vector<16x512xf32>
    %377 = arith.truncf %376 : vector<16x512xf32> to vector<16x512xbf16>
    %378 = arith.truncf %356 : vector<16x512xf32> to vector<16x512xbf16>
    %c511_i32_95 = arith.constant 511 : i32
    %379 = tpu.dynamic_rotate %356 by %c511_i32_95 dim 1 : vector<16x512xf32>, i32 -> vector<16x512xf32>
    %380 = vector.extract_strided_slice %357 {offsets = [5, 0], sizes = [1, 512], strides = [1, 1]} : vector<9x512xf32> to vector<1x512xf32>
    %381 = vector.broadcast %380 : vector<1x512xf32> to vector<16x512xf32>
    %382 = arith.mulf %379, %381 : vector<16x512xf32>
    %383 = arith.truncf %382 : vector<16x512xf32> to vector<16x512xbf16>
    %c497_i32_96 = arith.constant 497 : i32
    %384 = tpu.dynamic_rotate %356 by %c497_i32_96 dim 1 : vector<16x512xf32>, i32 -> vector<16x512xf32>
    %385 = vector.extract_strided_slice %357 {offsets = [6, 0], sizes = [1, 512], strides = [1, 1]} : vector<9x512xf32> to vector<1x512xf32>
    %386 = vector.broadcast %385 : vector<1x512xf32> to vector<16x512xf32>
    %387 = arith.mulf %384, %386 : vector<16x512xf32>
    %388 = arith.truncf %387 : vector<16x512xf32> to vector<16x512xbf16>
    %c496_i32_97 = arith.constant 496 : i32
    %389 = tpu.dynamic_rotate %356 by %c496_i32_97 dim 1 : vector<16x512xf32>, i32 -> vector<16x512xf32>
    %390 = vector.extract_strided_slice %357 {offsets = [7, 0], sizes = [1, 512], strides = [1, 1]} : vector<9x512xf32> to vector<1x512xf32>
    %391 = vector.broadcast %390 : vector<1x512xf32> to vector<16x512xf32>
    %392 = arith.mulf %389, %391 : vector<16x512xf32>
    %393 = arith.truncf %392 : vector<16x512xf32> to vector<16x512xbf16>
    %c495_i32_98 = arith.constant 495 : i32
    %394 = tpu.dynamic_rotate %356 by %c495_i32_98 dim 1 : vector<16x512xf32>, i32 -> vector<16x512xf32>
    %395 = vector.extract_strided_slice %357 {offsets = [8, 0], sizes = [1, 512], strides = [1, 1]} : vector<9x512xf32> to vector<1x512xf32>
    %396 = vector.broadcast %395 : vector<1x512xf32> to vector<16x512xf32>
    %397 = arith.mulf %394, %396 : vector<16x512xf32>
    %398 = arith.truncf %397 : vector<16x512xf32> to vector<16x512xbf16>
    %399 = tpu.concatenate %362, %367, %372, %377, %378, %383, %388, %393, %398 in 0 : vector<16x512xbf16>, vector<16x512xbf16>, vector<16x512xbf16>, vector<16x512xbf16>, vector<16x512xbf16>, vector<16x512xbf16>, vector<16x512xbf16>, vector<16x512xbf16>, vector<16x512xbf16> -> vector<144x512xbf16>
    %c0_99 = arith.constant 0 : index
    %c0_100 = arith.constant 0 : index
    %400 = vector.load %arg20[%c0_99, %c0_100] : memref<3x144xbf16, #tpu.memory_space<vmem>>, vector<3x144xbf16>
    %cst_101 = arith.constant dense<0.000000e+00> : vector<3x512xf32>
    %401 = tpu.matmul %400, %399, %cst_101 {dimension_numbers = #tpu.dot_dimension_numbers<[1], [0], [0], [1], [0, 0, 1, 1], [], []>} : vector<3x144xbf16>, vector<144x512xbf16>, vector<3x512xf32> -> vector<3x512xf32>
    %cst_102 = arith.constant 2.000000e-01 : f32
    %402 = vector.broadcast %cst_102 : f32 to vector<3x512xf32>
    %403 = arith.mulf %402, %401 : vector<3x512xf32>
    %404 = arith.maximumf %401, %403 : vector<3x512xf32>
    %c0_103 = arith.constant 0 : index
    %c0_104 = arith.constant 0 : index
    %c0_105 = arith.constant 0 : index
    %405 = vector.load %arg21[%c0_103, %c0_104, %c0_105] : memref<1x3x512xf32, #tpu.memory_space<vmem>>, vector<1x3x512xf32>
    %406 = vector.shape_cast %405 : vector<1x3x512xf32> to vector<3x512xf32>
    %407 = vector.shape_cast %404 : vector<3x512xf32> to vector<1x3x512xf32>
    tpu.vector_store %arg21[%c0_103, %c0_104, %c0_105], %407 {strides = array<i32>} : memref<1x3x512xf32, #tpu.memory_space<vmem>>, vector<1x3x512xf32>,
    return
  }
  func.func @transform_0(%arg0: i32) -> (i32, i32, i32) {
    %c0_i32 = arith.constant 0 : i32
    %c0_i32_0 = arith.constant 0 : i32
    %c0_i32_1 = arith.constant 0 : i32
    return %arg0, %c0_i32, %c0_i32_0 : i32, i32, i32
  }
  func.func @transform_1(%arg0: i32) -> (i32, i32) {
    %c0_i32 = arith.constant 0 : i32
    %c0_i32_0 = arith.constant 0 : i32
    %c0_i32_1 = arith.constant 0 : i32
    return %c0_i32, %c0_i32_0 : i32, i32
  }
  func.func @transform_2(%arg0: i32) -> (i32, i32) {
    %c0_i32 = arith.constant 0 : i32
    %c0_i32_0 = arith.constant 0 : i32
    %c0_i32_1 = arith.constant 0 : i32
    return %c0_i32, %c0_i32_0 : i32, i32
  }
  func.func @transform_3(%arg0: i32) -> (i32, i32) {
    %c0_i32 = arith.constant 0 : i32
    %c0_i32_0 = arith.constant 0 : i32
    %c0_i32_1 = arith.constant 0 : i32
    return %c0_i32, %c0_i32_0 : i32, i32
  }
  func.func @transform_4(%arg0: i32) -> (i32, i32) {
    %c0_i32 = arith.constant 0 : i32
    %c0_i32_0 = arith.constant 0 : i32
    %c0_i32_1 = arith.constant 0 : i32
    return %c0_i32, %c0_i32_0 : i32, i32
  }
  func.func @transform_5(%arg0: i32) -> (i32, i32) {
    %c0_i32 = arith.constant 0 : i32
    %c0_i32_0 = arith.constant 0 : i32
    %c0_i32_1 = arith.constant 0 : i32
    return %c0_i32, %c0_i32_0 : i32, i32
  }
  func.func @transform_6(%arg0: i32) -> (i32, i32) {
    %c0_i32 = arith.constant 0 : i32
    %c0_i32_0 = arith.constant 0 : i32
    %c0_i32_1 = arith.constant 0 : i32
    return %c0_i32, %c0_i32_0 : i32, i32
  }
  func.func @transform_7(%arg0: i32) -> (i32, i32) {
    %c0_i32 = arith.constant 0 : i32
    %c0_i32_0 = arith.constant 0 : i32
    %c0_i32_1 = arith.constant 0 : i32
    return %c0_i32, %c0_i32_0 : i32, i32
  }
  func.func @transform_8(%arg0: i32) -> (i32, i32) {
    %c0_i32 = arith.constant 0 : i32
    %c0_i32_0 = arith.constant 0 : i32
    %c0_i32_1 = arith.constant 0 : i32
    return %c0_i32, %c0_i32_0 : i32, i32
  }
  func.func @transform_9(%arg0: i32) -> (i32, i32) {
    %c0_i32 = arith.constant 0 : i32
    %c0_i32_0 = arith.constant 0 : i32
    %c0_i32_1 = arith.constant 0 : i32
    return %c0_i32, %c0_i32_0 : i32, i32
  }
  func.func @transform_10(%arg0: i32) -> (i32, i32) {
    %c0_i32 = arith.constant 0 : i32
    %c0_i32_0 = arith.constant 0 : i32
    %c0_i32_1 = arith.constant 0 : i32
    return %c0_i32, %c0_i32_0 : i32, i32
  }
  func.func @transform_11(%arg0: i32) -> (i32, i32) {
    %c0_i32 = arith.constant 0 : i32
    %c0_i32_0 = arith.constant 0 : i32
    %c0_i32_1 = arith.constant 0 : i32
    return %c0_i32, %c0_i32_0 : i32, i32
  }
  func.func @transform_12(%arg0: i32) -> (i32, i32) {
    %c0_i32 = arith.constant 0 : i32
    %c0_i32_0 = arith.constant 0 : i32
    %c0_i32_1 = arith.constant 0 : i32
    return %c0_i32, %c0_i32_0 : i32, i32
  }
  func.func @transform_13(%arg0: i32) -> (i32, i32) {
    %c0_i32 = arith.constant 0 : i32
    %c0_i32_0 = arith.constant 0 : i32
    %c0_i32_1 = arith.constant 0 : i32
    return %c0_i32, %c0_i32_0 : i32, i32
  }
  func.func @transform_14(%arg0: i32) -> (i32, i32) {
    %c0_i32 = arith.constant 0 : i32
    %c0_i32_0 = arith.constant 0 : i32
    %c0_i32_1 = arith.constant 0 : i32
    return %c0_i32, %c0_i32_0 : i32, i32
  }
  func.func @transform_15(%arg0: i32) -> (i32, i32) {
    %c0_i32 = arith.constant 0 : i32
    %c0_i32_0 = arith.constant 0 : i32
    %c0_i32_1 = arith.constant 0 : i32
    return %c0_i32, %c0_i32_0 : i32, i32
  }
  func.func @transform_16(%arg0: i32) -> (i32, i32) {
    %c0_i32 = arith.constant 0 : i32
    %c0_i32_0 = arith.constant 0 : i32
    %c0_i32_1 = arith.constant 0 : i32
    return %c0_i32, %c0_i32_0 : i32, i32
  }
  func.func @transform_17(%arg0: i32) -> (i32, i32) {
    %c0_i32 = arith.constant 0 : i32
    %c0_i32_0 = arith.constant 0 : i32
    %c0_i32_1 = arith.constant 0 : i32
    return %c0_i32, %c0_i32_0 : i32, i32
  }
  func.func @transform_18(%arg0: i32) -> (i32, i32) {
    %c0_i32 = arith.constant 0 : i32
    %c0_i32_0 = arith.constant 0 : i32
    %c0_i32_1 = arith.constant 0 : i32
    return %c0_i32, %c0_i32_0 : i32, i32
  }
  func.func @transform_19(%arg0: i32) -> (i32, i32) {
    %c0_i32 = arith.constant 0 : i32
    %c0_i32_0 = arith.constant 0 : i32
    %c0_i32_1 = arith.constant 0 : i32
    return %c0_i32, %c0_i32_0 : i32, i32
  }
  func.func @transform_20(%arg0: i32) -> (i32, i32, i32) {
    %c0_i32 = arith.constant 0 : i32
    %c0_i32_0 = arith.constant 0 : i32
    %c0_i32_1 = arith.constant 0 : i32
    return %arg0, %c0_i32, %c0_i32_0 : i32, i32, i32
  }
}

</mosaic_0001>

<llo_original>
// kernel: unet_forward.1
$region0: #{unet_forward.1}
  #allocation0 [shape = 'u32[]', space=smem, size = 0x4, offset = 0x4, fixed_abs, tag = 'smem constant byte address 0x4 - core index']
  #allocation1 [shape = 'u32[144,128]{1,0:T(1,128)}', space=vmem, size = 0x12000, scoped, tag = 'internal scratch']
  %s0 = inlined_call_operand.vmem [shape: f32[2,3,512], index: 0, kind: input, shape index: {}]
  %s1 = inlined_call_operand.vmem [shape: f32[9,512], index: 1, kind: input, shape index: {}]
  %s2 = inlined_call_operand.vmem [shape: f32[9,128], index: 2, kind: input, shape index: {}]
  %s3 = inlined_call_operand.vmem [shape: f32[9,32], index: 3, kind: input, shape index: {}]
  %s4 = inlined_call_operand.vmem [shape: bf16[512,128], index: 4, kind: input, shape index: {}]
  %s5 = inlined_call_operand.vmem [shape: bf16[128,32], index: 5, kind: input, shape index: {}]
  %s6 = inlined_call_operand.vmem [shape: bf16[32,128], index: 6, kind: input, shape index: {}]
  %s7 = inlined_call_operand.vmem [shape: bf16[128,512], index: 7, kind: input, shape index: {}]
  %s8 = inlined_call_operand.vmem [shape: bf16[8,27], index: 8, kind: input, shape index: {}]
  %s9 = inlined_call_operand.vmem [shape: bf16[16,72], index: 9, kind: input, shape index: {}]
  %s10 = inlined_call_operand.vmem [shape: bf16[16,144], index: 10, kind: input, shape index: {}]
  %s11 = inlined_call_operand.vmem [shape: f32[16,1], index: 11, kind: input, shape index: {}]
  %s12 = inlined_call_operand.vmem [shape: bf16[16,144], index: 12, kind: input, shape index: {}]
  %s13 = inlined_call_operand.vmem [shape: f32[16,1], index: 13, kind: input, shape index: {}]
  %s14 = inlined_call_operand.vmem [shape: bf16[16,144], index: 14, kind: input, shape index: {}]
  %s15 = inlined_call_operand.vmem [shape: f32[16,1], index: 15, kind: input, shape index: {}]
  %s16 = inlined_call_operand.vmem [shape: bf16[16,144], index: 16, kind: input, shape index: {}]
  %s17 = inlined_call_operand.vmem [shape: f32[16,1], index: 17, kind: input, shape index: {}]
  %s18 = inlined_call_operand.vmem [shape: bf16[8,288], index: 18, kind: input, shape index: {}]
  %s19 = inlined_call_operand.vmem [shape: bf16[3,144], index: 19, kind: input, shape index: {}]
  %s20 = inlined_call_operand.vmem [shape: f32[2,3,512], index: 20, kind: output, shape index: {}]
  %s21 = sld [smem:[#allocation0]]
  $region113: #{unet_forward.1} parent=0
    _
  %s23 = ssub.s32 1, %s21
  %s24 = scalar_select 0, %s23, %s21
  loop: start=0, step=1, limit=4
  $region2: #{unet_forward.1} parent=0 // loop_pre_header
    _
  $region3: #{unet_forward.1} parent=0 // loop_header
    %s26 = sphi 0, %s30
    %p27 = scmp.ge.s32.totalorder %s26, 4
    %s36 = sphi 0, %s38
    %s39 = sphi 0, %s36
    %s40 = sphi 0, %s39
    %s56 = sphi 0, %s40
    %s60 = sphi 0, %s60
    %s62 = sphi 0, %s60
    %s63 = sphi 0, %s62
    %s77 = sphi 0, %s63
    %s81 = sphi 0, %s81
    %s83 = sphi 0, %s81
    %s84 = sphi 0, %s83
    %s98 = sphi 0, %s84
    %s102 = sphi 0, %s102
    %s104 = sphi 0, %s102
    %s105 = sphi 0, %s104
    %s119 = sphi 0, %s105
    %s123 = sphi 0, %s123
    %s125 = sphi 0, %s123
    %s126 = sphi 0, %s125
    %s140 = sphi 0, %s126
    %s144 = sphi 0, %s144
    %s146 = sphi 0, %s144
    %s147 = sphi 0, %s146
    %s161 = sphi 0, %s147
    %s165 = sphi 0, %s165
    %s167 = sphi 0, %s165
    %s168 = sphi 0, %s167
    %s182 = sphi 0, %s168
    %s186 = sphi 0, %s186
    %s188 = sphi 0, %s186
    %s189 = sphi 0, %s188
    %s203 = sphi 0, %s189
    %s207 = sphi 0, %s207
    %s209 = sphi 0, %s207
    %s210 = sphi 0, %s209
    %s224 = sphi 0, %s210
    %s228 = sphi 0, %s228
    %s230 = sphi 0, %s228
    %s231 = sphi 0, %s230
    %s245 = sphi 0, %s231
    %s249 = sphi 0, %s249
    %s251 = sphi 0, %s249
    %s252 = sphi 0, %s251
    %s266 = sphi 0, %s252
    %s270 = sphi 0, %s270
    %s272 = sphi 0, %s270
    %s273 = sphi 0, %s272
    %s287 = sphi 0, %s273
    %s291 = sphi 0, %s291
    %s293 = sphi 0, %s291
    %s294 = sphi 0, %s293
    %s308 = sphi 0, %s294
    %s312 = sphi 0, %s312
    %s314 = sphi 0, %s312
    %s315 = sphi 0, %s314
    %s329 = sphi 0, %s315
    %s333 = sphi 0, %s333
    %s335 = sphi 0, %s333
    %s336 = sphi 0, %s335
    %s350 = sphi 0, %s336
    %s354 = sphi 0, %s354
    %s356 = sphi 0, %s354
    %s357 = sphi 0, %s356
    %s371 = sphi 0, %s357
    %s375 = sphi 0, %s375
    %s377 = sphi 0, %s375
    %s378 = sphi 0, %s377
    %s392 = sphi 0, %s378
    %s396 = sphi 0, %s396
    %s398 = sphi 0, %s396
    %s399 = sphi 0, %s398
    %s413 = sphi 0, %s399
    %s417 = sphi 0, %s417
    %s419 = sphi 0, %s417
    %s420 = sphi 0, %s419
    %s434 = sphi 0, %s420
    %s438 = sphi 0, %s438
    %s440 = sphi 0, %s438
    %s441 = sphi 0, %s440
    %s455 = sphi 0, %s441
    %s461 = sphi 0, %s463
    %s464 = sphi 0, %s461
    %s465 = sphi 0, %s464
    %s481 = sphi 0, %s465
  $region4: #{unet_forward.1} parent=0 // loop_header_branch
    %29 = sbr.rel (%p27) target = $region8
  $region5: #{unet_forward.1} parent=0 // loop_body
    %s31 = ssub.s32 %s26, 1
    %s32 = ssub.s32 %s26, 2
    %s33 = sadd.s32 %s26, 1
    %s34 = ssub.s32 %s26, %s33
    %p35 = scmp.eq.s32.totalorder %s34, 0
    %s37 = sadd.s32 %s36, 1
    %s38 = scalar_select %p35, %s36, %s37
    %p41 = pneg %p35
    %p42 = scmp.eq.s32.totalorder %s26, 1
    %p43 = por %p41, %p42
    %p44 = scmp.ne.s32.totalorder %s36, %s39
    %p45 = scmp.eq.s32.totalorder %s26, 0
    %p46 = por %p44, %p45
    %p47 = scmp.ne.s32.totalorder %s36, %s39
    %p48 = scmp.eq.s32.totalorder %s31, 1
    %p49 = por %p47, %p48
    %p50 = scmp.ne.s32.totalorder %s39, %s40
    %p51 = scmp.eq.s32.totalorder %s31, 0
    %p52 = por %p50, %p51
    %p53 = scmp.ne.s32.totalorder %s39, %s40
    %p54 = scmp.eq.s32.totalorder %s32, 1
    %p55 = por %p53, %p54
    %p57 = scmp.ne.s32.totalorder %s40, %s56
    %p58 = scmp.eq.s32.totalorder %s32, 0
    %p59 = por %p57, %p58
    %s61 = sadd.s32 %s60, 1
    %p64 = scmp.eq.s32.totalorder %s26, 1
    %p65 = scmp.ne.s32.totalorder %s60, %s62
    %p66 = scmp.eq.s32.totalorder %s26, 0
    %p67 = por %p65, %p66
    %p68 = scmp.ne.s32.totalorder %s60, %s62
    %p69 = scmp.eq.s32.totalorder %s31, 1
    %p70 = por %p68, %p69
    %p71 = scmp.ne.s32.totalorder %s62, %s63
    %p72 = scmp.eq.s32.totalorder %s31, 0
    %p73 = por %p71, %p72
    %p74 = scmp.ne.s32.totalorder %s62, %s63
    %p75 = scmp.eq.s32.totalorder %s32, 1
    %p76 = por %p74, %p75
    %p78 = scmp.ne.s32.totalorder %s63, %s77
    %p79 = scmp.eq.s32.totalorder %s32, 0
    %p80 = por %p78, %p79
    %s82 = sadd.s32 %s81, 1
    %p85 = scmp.eq.s32.totalorder %s26, 1
    %p86 = scmp.ne.s32.totalorder %s81, %s83
    %p87 = scmp.eq.s32.totalorder %s26, 0
    %p88 = por %p86, %p87
    %p89 = scmp.ne.s32.totalorder %s81, %s83
    %p90 = scmp.eq.s32.totalorder %s31, 1
    %p91 = por %p89, %p90
    %p92 = scmp.ne.s32.totalorder %s83, %s84
    %p93 = scmp.eq.s32.totalorder %s31, 0
    %p94 = por %p92, %p93
    %p95 = scmp.ne.s32.totalorder %s83, %s84
    %p96 = scmp.eq.s32.totalorder %s32, 1
    %p97 = por %p95, %p96
    %p99 = scmp.ne.s32.totalorder %s84, %s98
    %p100 = scmp.eq.s32.totalorder %s32, 0
    %p101 = por %p99, %p100
    %s103 = sadd.s32 %s102, 1
    %p106 = scmp.eq.s32.totalorder %s26, 1
    %p107 = scmp.ne.s32.totalorder %s102, %s104
    %p108 = scmp.eq.s32.totalorder %s26, 0
    %p109 = por %p107, %p108
    %p110 = scmp.ne.s32.totalorder %s102, %s104
    %p111 = scmp.eq.s32.totalorder %s31, 1
    %p112 = por %p110, %p111
    %p113 = scmp.ne.s32.totalorder %s104, %s105
    %p114 = scmp.eq.s32.totalorder %s31, 0
    %p115 = por %p113, %p114
    %p116 = scmp.ne.s32.totalorder %s104, %s105
    %p117 = scmp.eq.s32.totalorder %s32, 1
    %p118 = por %p116, %p117
    %p120 = scmp.ne.s32.totalorder %s105, %s119
    %p121 = scmp.eq.s32.totalorder %s32, 0
    %p122 = por %p120, %p121
    %s124 = sadd.s32 %s123, 1
    %p127 = scmp.eq.s32.totalorder %s26, 1
    %p128 = scmp.ne.s32.totalorder %s123, %s125
    %p129 = scmp.eq.s32.totalorder %s26, 0
    %p130 = por %p128, %p129
    %p131 = scmp.ne.s32.totalorder %s123, %s125
    %p132 = scmp.eq.s32.totalorder %s31, 1
    %p133 = por %p131, %p132
    %p134 = scmp.ne.s32.totalorder %s125, %s126
    %p135 = scmp.eq.s32.totalorder %s31, 0
    %p136 = por %p134, %p135
    %p137 = scmp.ne.s32.totalorder %s125, %s126
    %p138 = scmp.eq.s32.totalorder %s32, 1
    %p139 = por %p137, %p138
    %p141 = scmp.ne.s32.totalorder %s126, %s140
    %p142 = scmp.eq.s32.totalorder %s32, 0
    %p143 = por %p141, %p142
    %s145 = sadd.s32 %s144, 1
    %p148 = scmp.eq.s32.totalorder %s26, 1
    %p149 = scmp.ne.s32.totalorder %s144, %s146
    %p150 = scmp.eq.s32.totalorder %s26, 0
    %p151 = por %p149, %p150
    %p152 = scmp.ne.s32.totalorder %s144, %s146
    %p153 = scmp.eq.s32.totalorder %s31, 1
    %p154 = por %p152, %p153
    %p155 = scmp.ne.s32.totalorder %s146, %s147
    %p156 = scmp.eq.s32.totalorder %s31, 0
    %p157 = por %p155, %p156
    %p158 = scmp.ne.s32.totalorder %s146, %s147
    %p159 = scmp.eq.s32.totalorder %s32, 1
    %p160 = por %p158, %p159
    %p162 = scmp.ne.s32.totalorder %s147, %s161
    %p163 = scmp.eq.s32.totalorder %s32, 0
    %p164 = por %p162, %p163
    %s166 = sadd.s32 %s165, 1
    %p169 = scmp.eq.s32.totalorder %s26, 1
    %p170 = scmp.ne.s32.totalorder %s165, %s167
    %p171 = scmp.eq.s32.totalorder %s26, 0
    %p172 = por %p170, %p171
    %p173 = scmp.ne.s32.totalorder %s165, %s167
    %p174 = scmp.eq.s32.totalorder %s31, 1
    %p175 = por %p173, %p174
    %p176 = scmp.ne.s32.totalorder %s167, %s168
    %p177 = scmp.eq.s32.totalorder %s31, 0
    %p178 = por %p176, %p177
    %p179 = scmp.ne.s32.totalorder %s167, %s168
    %p180 = scmp.eq.s32.totalorder %s32, 1
    %p181 = por %p179, %p180
    %p183 = scmp.ne.s32.totalorder %s168, %s182
    %p184 = scmp.eq.s32.totalorder %s32, 0
    %p185 = por %p183, %p184
    %s187 = sadd.s32 %s186, 1
    %p190 = scmp.eq.s32.totalorder %s26, 1
    %p191 = scmp.ne.s32.totalorder %s186, %s188
    %p192 = scmp.eq.s32.totalorder %s26, 0
    %p193 = por %p191, %p192
    %p194 = scmp.ne.s32.totalorder %s186, %s188
    %p195 = scmp.eq.s32.totalorder %s31, 1
    %p196 = por %p194, %p195
    %p197 = scmp.ne.s32.totalorder %s188, %s189
    %p198 = scmp.eq.s32.totalorder %s31, 0
    %p199 = por %p197, %p198
    %p200 = scmp.ne.s32.totalorder %s188, %s189
    %p201 = scmp.eq.s32.totalorder %s32, 1
    %p202 = por %p200, %p201
    %p204 = scmp.ne.s32.totalorder %s189, %s203
    %p205 = scmp.eq.s32.totalorder %s32, 0
    %p206 = por %p204, %p205
    %s208 = sadd.s32 %s207, 1
    %p211 = scmp.eq.s32.totalorder %s26, 1
    %p212 = scmp.ne.s32.totalorder %s207, %s209
    %p213 = scmp.eq.s32.totalorder %s26, 0
    %p214 = por %p212, %p213
    %p215 = scmp.ne.s32.totalorder %s207, %s209
    %p216 = scmp.eq.s32.totalorder %s31, 1
    %p217 = por %p215, %p216
    %p218 = scmp.ne.s32.totalorder %s209, %s210
    %p219 = scmp.eq.s32.totalorder %s31, 0
    %p220 = por %p218, %p219
    %p221 = scmp.ne.s32.totalorder %s209, %s210
    %p222 = scmp.eq.s32.totalorder %s32, 1
    %p223 = por %p221, %p222
    %p225 = scmp.ne.s32.totalorder %s210, %s224
    %p226 = scmp.eq.s32.totalorder %s32, 0
    %p227 = por %p225, %p226
    %s229 = sadd.s32 %s228, 1
    %p232 = scmp.eq.s32.totalorder %s26, 1
    %p233 = scmp.ne.s32.totalorder %s228, %s230
    %p234 = scmp.eq.s32.totalorder %s26, 0
    %p235 = por %p233, %p234
    %p236 = scmp.ne.s32.totalorder %s228, %s230
    %p237 = scmp.eq.s32.totalorder %s31, 1
    %p238 = por %p236, %p237
    %p239 = scmp.ne.s32.totalorder %s230, %s231
    %p240 = scmp.eq.s32.totalorder %s31, 0
    %p241 = por %p239, %p240
    %p242 = scmp.ne.s32.totalorder %s230, %s231
    %p243 = scmp.eq.s32.totalorder %s32, 1
    %p244 = por %p242, %p243
    %p246 = scmp.ne.s32.totalorder %s231, %s245
    %p247 = scmp.eq.s32.totalorder %s32, 0
    %p248 = por %p246, %p247
    %s250 = sadd.s32 %s249, 1
    %p253 = scmp.eq.s32.totalorder %s26, 1
    %p254 = scmp.ne.s32.totalorder %s249, %s251
    %p255 = scmp.eq.s32.totalorder %s26, 0
    %p256 = por %p254, %p255
    %p257 = scmp.ne.s32.totalorder %s249, %s251
    %p258 = scmp.eq.s32.totalorder %s31, 1
    %p259 = por %p257, %p258
    %p260 = scmp.ne.s32.totalorder %s251, %s252
    %p261 = scmp.eq.s32.totalorder %s31, 0
    %p262 = por %p260, %p261
    %p263 = scmp.ne.s32.totalorder %s251, %s252
    %p264 = scmp.eq.s32.totalorder %s32, 1
    %p265 = por %p263, %p264
    %p267 = scmp.ne.s32.totalorder %s252, %s266
    %p268 = scmp.eq.s32.totalorder %s32, 0
    %p269 = por %p267, %p268
    %s271 = sadd.s32 %s270, 1
    %p274 = scmp.eq.s32.totalorder %s26, 1
    %p275 = scmp.ne.s32.totalorder %s270, %s272
    %p276 = scmp.eq.s32.totalorder %s26, 0
    %p277 = por %p275, %p276
    %p278 = scmp.ne.s32.totalorder %s270, %s272
    %p279 = scmp.eq.s32.totalorder %s31, 1
    %p280 = por %p278, %p279
    %p281 = scmp.ne.s32.totalorder %s272, %s273
    %p282 = scmp.eq.s32.totalorder %s31, 0
    %p283 = por %p281, %p282
    %p284 = scmp.ne.s32.totalorder %s272, %s273
    %p285 = scmp.eq.s32.totalorder %s32, 1
    %p286 = por %p284, %p285
    %p288 = scmp.ne.s32.totalorder %s273, %s287
    %p289 = scmp.eq.s32.totalorder %s32, 0
    %p290 = por %p288, %p289
    %s292 = sadd.s32 %s291, 1
    %p295 = scmp.eq.s32.totalorder %s26, 1
    %p296 = scmp.ne.s32.totalorder %s291, %s293
    %p297 = scmp.eq.s32.totalorder %s26, 0
    %p298 = por %p296, %p297
    %p299 = scmp.ne.s32.totalorder %s291, %s293
    %p300 = scmp.eq.s32.totalorder %s31, 1
    %p301 = por %p299, %p300
    %p302 = scmp.ne.s32.totalorder %s293, %s294
    %p303 = scmp.eq.s32.totalorder %s31, 0
    %p304 = por %p302, %p303
    %p305 = scmp.ne.s32.totalorder %s293, %s294
    %p306 = scmp.eq.s32.totalorder %s32, 1
    %p307 = por %p305, %p306
    %p309 = scmp.ne.s32.totalorder %s294, %s308
    %p310 = scmp.eq.s32.totalorder %s32, 0
    %p311 = por %p309, %p310
    %s313 = sadd.s32 %s312, 1
    %p316 = scmp.eq.s32.totalorder %s26, 1
    %p317 = scmp.ne.s32.totalorder %s312, %s314
    %p318 = scmp.eq.s32.totalorder %s26, 0
    %p319 = por %p317, %p318
    %p320 = scmp.ne.s32.totalorder %s312, %s314
    %p321 = scmp.eq.s32.totalorder %s31, 1
    %p322 = por %p320, %p321
    %p323 = scmp.ne.s32.totalorder %s314, %s315
    %p324 = scmp.eq.s32.totalorder %s31, 0
    %p325 = por %p323, %p324
    %p326 = scmp.ne.s32.totalorder %s314, %s315
    %p327 = scmp.eq.s32.totalorder %s32, 1
    %p328 = por %p326, %p327
    %p330 = scmp.ne.s32.totalorder %s315, %s329
    %p331 = scmp.eq.s32.totalorder %s32, 0
    %p332 = por %p330, %p331
    %s334 = sadd.s32 %s333, 1
    %p337 = scmp.eq.s32.totalorder %s26, 1
    %p338 = scmp.ne.s32.totalorder %s333, %s335
    %p339 = scmp.eq.s32.totalorder %s26, 0
    %p340 = por %p338, %p339
    %p341 = scmp.ne.s32.totalorder %s333, %s335
    %p342 = scmp.eq.s32.totalorder %s31, 1
    %p343 = por %p341, %p342
    %p344 = scmp.ne.s32.totalorder %s335, %s336
    %p345 = scmp.eq.s32.totalorder %s31, 0
    %p346 = por %p344, %p345
    %p347 = scmp.ne.s32.totalorder %s335, %s336
    %p348 = scmp.eq.s32.totalorder %s32, 1
    %p349 = por %p347, %p348
    %p351 = scmp.ne.s32.totalorder %s336, %s350
    %p352 = scmp.eq.s32.totalorder %s32, 0
    %p353 = por %p351, %p352
    %s355 = sadd.s32 %s354, 1
    %p358 = scmp.eq.s32.totalorder %s26, 1
    %p359 = scmp.ne.s32.totalorder %s354, %s356
    %p360 = scmp.eq.s32.totalorder %s26, 0
    %p361 = por %p359, %p360
    %p362 = scmp.ne.s32.totalorder %s354, %s356
    %p363 = scmp.eq.s32.totalorder %s31, 1
    %p364 = por %p362, %p363
    %p365 = scmp.ne.s32.totalorder %s356, %s357
    %p366 = scmp.eq.s32.totalorder %s31, 0
    %p367 = por %p365, %p366
    %p368 = scmp.ne.s32.totalorder %s356, %s357
    %p369 = scmp.eq.s32.totalorder %s32, 1
    %p370 = por %p368, %p369
    %p372 = scmp.ne.s32.totalorder %s357, %s371
    %p373 = scmp.eq.s32.totalorder %s32, 0
    %p374 = por %p372, %p373
    %s376 = sadd.s32 %s375, 1
    %p379 = scmp.eq.s32.totalorder %s26, 1
    %p380 = scmp.ne.s32.totalorder %s375, %s377
    %p381 = scmp.eq.s32.totalorder %s26, 0
    %p382 = por %p380, %p381
    %p383 = scmp.ne.s32.totalorder %s375, %s377
    %p384 = scmp.eq.s32.totalorder %s31, 1
    %p385 = por %p383, %p384
    %p386 = scmp.ne.s32.totalorder %s377, %s378
    %p387 = scmp.eq.s32.totalorder %s31, 0
    %p388 = por %p386, %p387
    %p389 = scmp.ne.s32.totalorder %s377, %s378
    %p390 = scmp.eq.s32.totalorder %s32, 1
    %p391 = por %p389, %p390
    %p393 = scmp.ne.s32.totalorder %s378, %s392
    %p394 = scmp.eq.s32.totalorder %s32, 0
    %p395 = por %p393, %p394
    %s397 = sadd.s32 %s396, 1
    %p400 = scmp.eq.s32.totalorder %s26, 1
    %p401 = scmp.ne.s32.totalorder %s396, %s398
    %p402 = scmp.eq.s32.totalorder %s26, 0
    %p403 = por %p401, %p402
    %p404 = scmp.ne.s32.totalorder %s396, %s398
    %p405 = scmp.eq.s32.totalorder %s31, 1
    %p406 = por %p404, %p405
    %p407 = scmp.ne.s32.totalorder %s398, %s399
    %p408 = scmp.eq.s32.totalorder %s31, 0
    %p409 = por %p407, %p408
    %p410 = scmp.ne.s32.totalorder %s398, %s399
    %p411 = scmp.eq.s32.totalorder %s32, 1
    %p412 = por %p410, %p411
    %p414 = scmp.ne.s32.totalorder %s399, %s413
    %p415 = scmp.eq.s32.totalorder %s32, 0
    %p416 = por %p414, %p415
    %s418 = sadd.s32 %s417, 1
    %p421 = scmp.eq.s32.totalorder %s26, 1
    %p422 = scmp.ne.s32.totalorder %s417, %s419
    %p423 = scmp.eq.s32.totalorder %s26, 0
    %p424 = por %p422, %p423
    %p425 = scmp.ne.s32.totalorder %s417, %s419
    %p426 = scmp.eq.s32.totalorder %s31, 1
    %p427 = por %p425, %p426
    %p428 = scmp.ne.s32.totalorder %s419, %s420
    %p429 = scmp.eq.s32.totalorder %s31, 0
    %p430 = por %p428, %p429
    %p431 = scmp.ne.s32.totalorder %s419, %s420
    %p432 = scmp.eq.s32.totalorder %s32, 1
    %p433 = por %p431, %p432
    %p435 = scmp.ne.s32.totalorder %s420, %s434
    %p436 = scmp.eq.s32.totalorder %s32, 0
    %p437 = por %p435, %p436
    %s439 = sadd.s32 %s438, 1
    %p442 = scmp.eq.s32.totalorder %s26, 1
    %p443 = scmp.ne.s32.totalorder %s438, %s440
    %p444 = scmp.eq.s32.totalorder %s26, 0
    %p445 = por %p443, %p444
    %p446 = scmp.ne.s32.totalorder %s438, %s440
    %p447 = scmp.eq.s32.totalorder %s31, 1
    %p448 = por %p446, %p447
    %p449 = scmp.ne.s32.totalorder %s440, %s441
    %p450 = scmp.eq.s32.totalorder %s31, 0
    %p451 = por %p449, %p450
    %p452 = scmp.ne.s32.totalorder %s440, %s441
    %p453 = scmp.eq.s32.totalorder %s32, 1
    %p454 = por %p452, %p453
    %p456 = scmp.ne.s32.totalorder %s441, %s455
    %p457 = scmp.eq.s32.totalorder %s32, 0
    %p458 = por %p456, %p457
    %s459 = ssub.s32 %s26, %s33
    %p460 = scmp.eq.s32.totalorder %s459, 0
    %s462 = sadd.s32 %s461, 1
    %s463 = scalar_select %p460, %s461, %s462
    %p466 = pneg %p460
    %p467 = scmp.eq.s32.totalorder %s26, 1
    %p468 = por %p466, %p467
    %p469 = scmp.ne.s32.totalorder %s461, %s464
    %p470 = scmp.eq.s32.totalorder %s26, 0
    %p471 = por %p469, %p470
    %p472 = scmp.ne.s32.totalorder %s461, %s464
    %p473 = scmp.eq.s32.totalorder %s31, 1
    %p474 = por %p472, %p473
    %p475 = scmp.ne.s32.totalorder %s464, %s465
    %p476 = scmp.eq.s32.totalorder %s31, 0
    %p477 = por %p475, %p476
    %p478 = scmp.ne.s32.totalorder %s464, %s465
    %p479 = scmp.eq.s32.totalorder %s32, 1
    %p480 = por %p478, %p479
    %p482 = scmp.ne.s32.totalorder %s465, %s481
    %p483 = scmp.eq.s32.totalorder %s32, 0
    %p484 = por %p482, %p483
    %p485 = scmp.le.s32.totalorder 1, %s26
    %p486 = scmp.lt.s32.totalorder %s26, 3
    %p487 = pnand %p485, %p486
    %p488 = pneg %p487
    // Predicated region
    $region9: #{unet_forward.1} parent=5 // pred_check
      _
    $region10: #{unet_forward.1} parent=5 // pred_check_branch
      %490 = sbr.rel (%p487) target = $region12
    $region11: #{unet_forward.1} parent=5 // pred_region
      %s491 = ssub.s32 %s26, 1
      // Predicated region
      $region13: #{unet_forward.1} parent=11 // pred_check
        %p492 = pneg %p73
      $region14: #{unet_forward.1} parent=11 // pred_check_branch
        %494 = sbr.rel (%p492) target = $region16
      $region15: #{unet_forward.1} parent=11 // pred_region
        _
      $region16: #{unet_forward.1} parent=11 // pred_fallthru
        _
      // Predicated region
      $region17: #{unet_forward.1} parent=11 // pred_check
        %p495 = pneg %p94
      $region18: #{unet_forward.1} parent=11 // pred_check_branch
        %497 = sbr.rel (%p495) target = $region20
      $region19: #{unet_forward.1} parent=11 // pred_region
        _
      $region20: #{unet_forward.1} parent=11 // pred_fallthru
        _
      // Predicated region
      $region21: #{unet_forward.1} parent=11 // pred_check
        %p498 = pneg %p115
      $region22: #{unet_forward.1} parent=11 // pred_check_branch
        %500 = sbr.rel (%p498) target = $region24
      $region23: #{unet_forward.1} parent=11 // pred_region
        _
      $region24: #{unet_forward.1} parent=11 // pred_fallthru
        _
      // Predicated region
      $region25: #{unet_forward.1} parent=11 // pred_check
        %p501 = pneg %p136
      $region26: #{unet_forward.1} parent=11 // pred_check_branch
        %503 = sbr.rel (%p501) target = $region28
      $region27: #{unet_forward.1} parent=11 // pred_region
        _
      $region28: #{unet_forward.1} parent=11 // pred_fallthru
        _
      // Predicated region
      $region29: #{unet_forward.1} parent=11 // pred_check
        %p504 = pneg %p157
      $region30: #{unet_forward.1} parent=11 // pred_check_branch
        %506 = sbr.rel (%p504) target = $region32
      $region31: #{unet_forward.1} parent=11 // pred_region
        _
      $region32: #{unet_forward.1} parent=11 // pred_fallthru
        _
      // Predicated region
      $region33: #{unet_forward.1} parent=11 // pred_check
        %p507 = pneg %p178
      $region34: #{unet_forward.1} parent=11 // pred_check_branch
        %509 = sbr.rel (%p507) target = $region36
      $region35: #{unet_forward.1} parent=11 // pred_region
        _
      $region36: #{unet_forward.1} parent=11 // pred_fallthru
        _
      // Predicated region
      $region37: #{unet_forward.1} parent=11 // pred_check
        %p510 = pneg %p199
      $region38: #{unet_forward.1} parent=11 // pred_check_branch
        %512 = sbr.rel (%p510) target = $region40
      $region39: #{unet_forward.1} parent=11 // pred_region
        _
      $region40: #{unet_forward.1} parent=11 // pred_fallthru
        _
      // Predicated region
      $region41: #{unet_forward.1} parent=11 // pred_check
        %p513 = pneg %p220
      $region42: #{unet_forward.1} parent=11 // pred_check_branch
        %515 = sbr.rel (%p513) target = $region44
      $region43: #{unet_forward.1} parent=11 // pred_region
        _
      $region44: #{unet_forward.1} parent=11 // pred_fallthru
        _
      // Predicated region
      $region45: #{unet_forward.1} parent=11 // pred_check
        %p516 = pneg %p241
      $region46: #{unet_forward.1} parent=11 // pred_check_branch
        %518 = sbr.rel (%p516) target = $region48
      $region47: #{unet_forward.1} parent=11 // pred_region
        _
      $region48: #{unet_forward.1} parent=11 // pred_fallthru
        _
      // Predicated region
      $region49: #{unet_forward.1} parent=11 // pred_check
        %p519 = pneg %p262
      $region50: #{unet_forward.1} parent=11 // pred_check_branch
        %521 = sbr.rel (%p519) target = $region52
      $region51: #{unet_forward.1} parent=11 // pred_region
        _
      $region52: #{unet_forward.1} parent=11 // pred_fallthru
        _
      // Predicated region
      $region53: #{unet_forward.1} parent=11 // pred_check
        %p522 = pneg %p283
      $region54: #{unet_forward.1} parent=11 // pred_check_branch
        %524 = sbr.rel (%p522) target = $region56
      $region55: #{unet_forward.1} parent=11 // pred_region
        _
      $region56: #{unet_forward.1} parent=11 // pred_fallthru
        _
      // Predicated region
      $region57: #{unet_forward.1} parent=11 // pred_check
        %p525 = pneg %p304
      $region58: #{unet_forward.1} parent=11 // pred_check_branch
        %527 = sbr.rel (%p525) target = $region60
      $region59: #{unet_forward.1} parent=11 // pred_region
        _
      $region60: #{unet_forward.1} parent=11 // pred_fallthru
        _
      // Predicated region
      $region61: #{unet_forward.1} parent=11 // pred_check
        %p528 = pneg %p325
      $region62: #{unet_forward.1} parent=11 // pred_check_branch
        %530 = sbr.rel (%p528) target = $region64
      $region63: #{unet_forward.1} parent=11 // pred_region
        _
      $region64: #{unet_forward.1} parent=11 // pred_fallthru
        _
      // Predicated region
      $region65: #{unet_forward.1} parent=11 // pred_check
        %p531 = pneg %p346
      $region66: #{unet_forward.1} parent=11 // pred_check_branch
        %533 = sbr.rel (%p531) target = $region68
      $region67: #{unet_forward.1} parent=11 // pred_region
        _
      $region68: #{unet_forward.1} parent=11 // pred_fallthru
        _
      // Predicated region
      $region69: #{unet_forward.1} parent=11 // pred_check
        %p534 = pneg %p367
      $region70: #{unet_forward.1} parent=11 // pred_check_branch
        %536 = sbr.rel (%p534) target = $region72
      $region71: #{unet_forward.1} parent=11 // pred_region
        _
      $region72: #{unet_forward.1} parent=11 // pred_fallthru
        _
      // Predicated region
      $region73: #{unet_forward.1} parent=11 // pred_check
        %p537 = pneg %p388
      $region74: #{unet_forward.1} parent=11 // pred_check_branch
        %539 = sbr.rel (%p537) target = $region76
      $region75: #{unet_forward.1} parent=11 // pred_region
        _
      $region76: #{unet_forward.1} parent=11 // pred_fallthru
        _
      // Predicated region
      $region77: #{unet_forward.1} parent=11 // pred_check
        %p540 = pneg %p409
      $region78: #{unet_forward.1} parent=11 // pred_check_branch
        %542 = sbr.rel (%p540) target = $region80
      $region79: #{unet_forward.1} parent=11 // pred_region
        _
      $region80: #{unet_forward.1} parent=11 // pred_fallthru
        _
      // Predicated region
      $region81: #{unet_forward.1} parent=11 // pred_check
        %p543 = pneg %p430
      $region82: #{unet_forward.1} parent=11 // pred_check_branch
        %545 = sbr.rel (%p543) target = $region84
      $region83: #{unet_forward.1} parent=11 // pred_region
        _
      $region84: #{unet_forward.1} parent=11 // pred_fallthru
        _
      // Predicated region
      $region85: #{unet_forward.1} parent=11 // pred_check
        %p546 = pneg %p451
      $region86: #{unet_forward.1} parent=11 // pred_check_branch
        %548 = sbr.rel (%p546) target = $region88
      $region87: #{unet_forward.1} parent=11 // pred_region
        _
      $region88: #{unet_forward.1} parent=11 // pred_fallthru
        _
    $region12: #{unet_forward.1} parent=5 // pred_fallthru
      _
    %p549 = scmp.lt.s32.totalorder %s26, 2
    // Predicated region
    $region89: #{unet_forward.1} parent=5 // pred_check
      %p550 = pneg %p549
    $region90: #{unet_forward.1} parent=5 // pred_check_branch
      %552 = sbr.rel (%p550) target = $region92
    $region91: #{unet_forward.1} parent=5 // pred_region
      // Predicated region
      $region93: #{unet_forward.1} parent=91 // pred_check
        %p553 = pneg %p46
      $region94: #{unet_forward.1} parent=91 // pred_check_branch
        %555 = sbr.rel (%p553) target = $region96
      $region95: #{unet_forward.1} parent=91 // pred_region
        %p556 = scmp.lt.s32.totalorder %s26, 1
        %s557 = scalar_select %p556, %s26, 1
        %s558 = smul.addr %s557, 4
        %s559 = smul.addr %s558, 4
        %s560 = scalar_lea.vmem %s0, %s559
      $region96: #{unet_forward.1} parent=91 // pred_fallthru
        _
    $region92: #{unet_forward.1} parent=5 // pred_fallthru
      _
    %p561 = scmp.le.s32.totalorder 1, %s26
    %p562 = scmp.lt.s32.totalorder %s26, 3
    %p563 = pnand %p561, %p562
    %p564 = pneg %p563
    // Predicated region
    $region97: #{unet_forward.1} parent=5 // pred_check
      _
    $region98: #{unet_forward.1} parent=5 // pred_check_branch
      %566 = sbr.rel (%p563) target = $region100
    $region99: #{unet_forward.1} parent=5 // pred_region
      %s567 = ssub.s32 %s26, 1
      %p568 = scmp.lt.s32.totalorder %s31, 1
      %s569 = scalar_select %p568, %s31, 1
      %s570 = smul.addr %s569, 4
      %s571 = smul.addr %s570, 4
      %s572 = scalar_lea.vmem %s0, %s571
      %p573 = pneg %p52
      %p574 = pneg %p49
      %p575 = pneg %p73
      %p576 = pneg %p70
      %p577 = pneg %p94
      %p578 = pneg %p91
      %p579 = pneg %p115
      %p580 = pneg %p112
      %p581 = pneg %p136
      %p582 = pneg %p133
      %p583 = pneg %p157
      %p584 = pneg %p154
      %p585 = pneg %p178
      %p586 = pneg %p175
      %p587 = pneg %p199
      %p588 = pneg %p196
      %p589 = pneg %p220
      %p590 = pneg %p217
      %p591 = pneg %p241
      %p592 = pneg %p238
      %p593 = pneg %p262
      %p594 = pneg %p259
      %p595 = pneg %p283
      %p596 = pneg %p280
      %p597 = pneg %p304
      %p598 = pneg %p301
      %p599 = pneg %p325
      %p600 = pneg %p322
      %p601 = pneg %p346
      %p602 = pneg %p343
      %p603 = pneg %p367
      %p604 = pneg %p364
      %p605 = pneg %p388
      %p606 = pneg %p385
      %p607 = pneg %p409
      %p608 = pneg %p406
      %p609 = pneg %p430
      %p610 = pneg %p427
      %p611 = pneg %p451
      %p612 = pneg %p448
      %p613 = pneg %p477
      %p614 = pneg %p474
      %p615 = scmp.lt.s32.totalorder %s31, 1
      %s616 = scalar_select %p615, %s31, 1
      %s617 = smul.addr %s616, 4
      %s618 = smul.addr %s617, 4
      %s619 = scalar_lea.vmem %s20, %s618
      %p620 = scmp.lt.s32.totalorder %s31, 1
      %s621 = scalar_select %p620, %s31, 1
      %s622 = smul.addr %s621, 4
      %s623 = smul.addr %s622, 4
      %s624 = scalar_lea.vmem %s0, %s623
      %p625 = scmp.lt.s32.totalorder %s31, 1
      %s626 = scalar_select %p625, %s31, 1
      %s627 = smul.addr %s626, 4
      %s628 = smul.addr %s627, 4
      %s629 = scalar_lea.vmem %s20, %s628
      %v631 = vld [vmem:[%s624] sm:$0x77]
      %v632 = vld [vmem:[%s624 + $0x8] sm:$0x77]
      %v633 = vld [vmem:[%s1] sm:$0xff]
      %v634 = vld [vmem:[%s1 + $0x8] sm:$0xff]
      %v635 = vld [vmem:[%s1 + $0x10] sm:$0xff]
      %v636 = vld [vmem:[%s1 + $0x18] sm:$0xff]
      %v637 = vld [vmem:[%s1 + $0x20] sm:$0x1]
      %v638 = vld [vmem:[%s1 + $0x28] sm:$0x1]
      %v639 = vld [vmem:[%s1 + $0x30] sm:$0x1]
      %v640 = vld [vmem:[%s1 + $0x38] sm:$0x1]
      %v643 = vcombine.high %v631, %v631
      %v644 = vcombine.high %v632, %v632
      %647 = vrot.lane.b32.xlu0 %v631, 17
      %v648 = vpop.permute.xlu0 %647
      %649 = vrot.lane.b32.xlu0 %v643, 17
      %v650 = vpop.permute.xlu0 %649
      %651 = vrot.lane.b32.xlu0 %v632, 17
      %v652 = vpop.permute.xlu0 %651
      %653 = vrot.lane.b32.xlu0 %v644, 17
      %v654 = vpop.permute.xlu0 %653
      %v655 = vlaneseq
      %v656 = vand.u32 %v655, 127
      %vm657 = vcmp.lt.s32.totalorder %v656, 17
      %v658 = vsel %vm657, %v652, %v654
      %v659 = vsel %vm657, %v650, %v652
      %v660 = vsel %vm657, %v648, %v650
      %v661 = vsel %vm657, %v654, %v648
      %v662 = vlaneseq
      %v663 = vshrl.u32 %v662, 7
      %v664 = vsub.s32 0, %v663
      %v665 = vrot.slane %v633, %v664
      %v666 = vlaneseq
      %v667 = vshrl.u32 %v666, 7
      %v668 = vsub.s32 0, %v667
      %v669 = vrot.slane %v634, %v668
      %v670 = vlaneseq
      %v671 = vshrl.u32 %v670, 7
      %v672 = vsub.s32 0, %v671
      %v673 = vrot.slane %v635, %v672
      %v674 = vlaneseq
      %v675 = vshrl.u32 %v674, 7
      %v676 = vsub.s32 0, %v675
      %v677 = vrot.slane %v636, %v676
      %v678 = vmul.f32 %v661, %v665
      %v679 = vmul.f32 %v660, %v669
      %v680 = vmul.f32 %v659, %v673
      %v681 = vmul.f32 %v658, %v677
      %v682 = vpack.c.bf16 %v678, %v678
      %v683 = vpack.c.bf16 %v679, %v679
      %v684 = vpack.c.bf16 %v680, %v680
      %v685 = vpack.c.bf16 %v681, %v681
      %686 = vrot.lane.b32.xlu0 %v631, 16
      %v687 = vpop.permute.xlu0 %686
      %688 = vrot.lane.b32.xlu0 %v643, 16
      %v689 = vpop.permute.xlu0 %688
      %690 = vrot.lane.b32.xlu0 %v632, 16
      %v691 = vpop.permute.xlu0 %690
      %692 = vrot.lane.b32.xlu0 %v644, 16
      %v693 = vpop.permute.xlu0 %692
      %vm694 = vcmp.lt.s32.totalorder %v656, 16
      %v695 = vsel %vm694, %v691, %v693
      %v696 = vsel %vm694, %v689, %v691
      %v697 = vsel %vm694, %v687, %v689
      %v698 = vsel %vm694, %v693, %v687
      %v699 = vlaneseq
      %v700 = vshrl.u32 %v699, 7
      %v701 = vsub.s32 1, %v700
      %v702 = vrot.slane %v633, %v701
      %v703 = vlaneseq
      %v704 = vshrl.u32 %v703, 7
      %v705 = vsub.s32 1, %v704
      %v706 = vrot.slane %v634, %v705
      %v707 = vlaneseq
      %v708 = vshrl.u32 %v707, 7
      %v709 = vsub.s32 1, %v708
      %v710 = vrot.slane %v635, %v709
      %v711 = vlaneseq
      %v712 = vshrl.u32 %v711, 7
      %v713 = vsub.s32 1, %v712
      %v714 = vrot.slane %v636, %v713
      %v715 = vmul.f32 %v698, %v702
      %v716 = vmul.f32 %v697, %v706
      %v717 = vmul.f32 %v696, %v710
      %v718 = vmul.f32 %v695, %v714
      %v719 = vpack.c.bf16 %v715, %v715
      %v720 = vpack.c.bf16 %v716, %v716
      %v721 = vpack.c.bf16 %v717, %v717
      %v722 = vpack.c.bf16 %v718, %v718
      %723 = vrot.lane.b32.xlu0 %v631, 15
      %v724 = vpop.permute.xlu0 %723
      %725 = vrot.lane.b32.xlu0 %v643, 15
      %v726 = vpop.permute.xlu0 %725
      %727 = vrot.lane.b32.xlu0 %v632, 15
      %v728 = vpop.permute.xlu0 %727
      %729 = vrot.lane.b32.xlu0 %v644, 15
      %v730 = vpop.permute.xlu0 %729
      %vm731 = vcmp.lt.s32.totalorder %v656, 15
      %v732 = vsel %vm731, %v728, %v730
      %v733 = vsel %vm731, %v726, %v728
      %v734 = vsel %vm731, %v724, %v726
      %v735 = vsel %vm731, %v730, %v724
      %v736 = vlaneseq
      %v737 = vshrl.u32 %v736, 7
      %v738 = vsub.s32 2, %v737
      %v739 = vrot.slane %v633, %v738
      %v740 = vlaneseq
      %v741 = vshrl.u32 %v740, 7
      %v742 = vsub.s32 2, %v741
      %v743 = vrot.slane %v634, %v742
      %v744 = vlaneseq
      %v745 = vshrl.u32 %v744, 7
      %v746 = vsub.s32 2, %v745
      %v747 = vrot.slane %v635, %v746
      %v748 = vlaneseq
      %v749 = vshrl.u32 %v748, 7
      %v750 = vsub.s32 2, %v749
      %v751 = vrot.slane %v636, %v750
      %v752 = vmul.f32 %v735, %v739
      %v753 = vmul.f32 %v734, %v743
      %v754 = vmul.f32 %v733, %v747
      %v755 = vmul.f32 %v732, %v751
      %v756 = vpack.c.bf16 %v752, %v752
      %v757 = vpack.c.bf16 %v753, %v753
      %v758 = vpack.c.bf16 %v754, %v754
      %v759 = vpack.c.bf16 %v755, %v755
      %760 = vrot.lane.b32.xlu0 %v631, 1
      %v761 = vpop.permute.xlu0 %760
      %762 = vrot.lane.b32.xlu0 %v643, 1
      %v763 = vpop.permute.xlu0 %762
      %764 = vrot.lane.b32.xlu0 %v632, 1
      %v765 = vpop.permute.xlu0 %764
      %766 = vrot.lane.b32.xlu0 %v644, 1
      %v767 = vpop.permute.xlu0 %766
      %vm768 = vcmp.lt.s32.totalorder %v656, 1
      %v769 = vsel %vm768, %v765, %v767
      %v770 = vsel %vm768, %v763, %v765
      %v771 = vsel %vm768, %v761, %v763
      %v772 = vsel %vm768, %v767, %v761
      %v773 = vlaneseq
      %v774 = vshrl.u32 %v773, 7
      %v775 = vsub.s32 3, %v774
      %v776 = vrot.slane %v633, %v775
      %v777 = vlaneseq
      %v778 = vshrl.u32 %v777, 7
      %v779 = vsub.s32 3, %v778
      %v780 = vrot.slane %v634, %v779
      %v781 = vlaneseq
      %v782 = vshrl.u32 %v781, 7
      %v783 = vsub.s32 3, %v782
      %v784 = vrot.slane %v635, %v783
      %v785 = vlaneseq
      %v786 = vshrl.u32 %v785, 7
      %v787 = vsub.s32 3, %v786
      %v788 = vrot.slane %v636, %v787
      %v789 = vmul.f32 %v772, %v776
      %v790 = vmul.f32 %v771, %v780
      %v791 = vmul.f32 %v770, %v784
      %v792 = vmul.f32 %v769, %v788
      %v793 = vpack.c.bf16 %v789, %v789
      %v794 = vpack.c.bf16 %v790, %v790
      %v795 = vpack.c.bf16 %v791, %v791
      %v796 = vpack.c.bf16 %v792, %v792
      %v797 = vpack.c.bf16 %v631, %v631
      %v798 = vpack.c.bf16 %v643, %v643
      %v799 = vpack.c.bf16 %v632, %v632
      %v800 = vpack.c.bf16 %v644, %v644
      %801 = vrot.lane.b32.xlu0 %v631, 127
      %v802 = vpop.permute.xlu0 %801
      %803 = vrot.lane.b32.xlu0 %v643, 127
      %v804 = vpop.permute.xlu0 %803
      %805 = vrot.lane.b32.xlu0 %v632, 127
      %v806 = vpop.permute.xlu0 %805
      %807 = vrot.lane.b32.xlu0 %v644, 127
      %v808 = vpop.permute.xlu0 %807
      %vm809 = vcmp.lt.s32.totalorder %v656, 127
      %v810 = vsel %vm809, %v806, %v808
      %v811 = vsel %vm809, %v804, %v806
      %v812 = vsel %vm809, %v802, %v804
      %v813 = vsel %vm809, %v808, %v802
      %v814 = vlaneseq
      %v815 = vshrl.u32 %v814, 7
      %v816 = vsub.s32 5, %v815
      %v817 = vrot.slane %v633, %v816
      %v818 = vlaneseq
      %v819 = vshrl.u32 %v818, 7
      %v820 = vsub.s32 5, %v819
      %v821 = vrot.slane %v634, %v820
      %v822 = vlaneseq
      %v823 = vshrl.u32 %v822, 7
      %v824 = vsub.s32 5, %v823
      %v825 = vrot.slane %v635, %v824
      %v826 = vlaneseq
      %v827 = vshrl.u32 %v826, 7
      %v828 = vsub.s32 5, %v827
      %v829 = vrot.slane %v636, %v828
      %v830 = vmul.f32 %v812, %v817
      %v831 = vmul.f32 %v811, %v821
      %v832 = vmul.f32 %v810, %v825
      %v833 = vmul.f32 %v813, %v829
      %v834 = vpack.c.bf16 %v830, %v830
      %v835 = vpack.c.bf16 %v831, %v831
      %v836 = vpack.c.bf16 %v832, %v832
      %v837 = vpack.c.bf16 %v833, %v833
      %838 = vrot.lane.b32.xlu0 %v631, 113
      %v839 = vpop.permute.xlu0 %838
      %840 = vrot.lane.b32.xlu0 %v643, 113
      %v841 = vpop.permute.xlu0 %840
      %842 = vrot.lane.b32.xlu0 %v632, 113
      %v843 = vpop.permute.xlu0 %842
      %844 = vrot.lane.b32.xlu0 %v644, 113
      %v845 = vpop.permute.xlu0 %844
      %vm846 = vcmp.lt.s32.totalorder %v656, 113
      %v847 = vsel %vm846, %v843, %v845
      %v848 = vsel %vm846, %v841, %v843
      %v849 = vsel %vm846, %v839, %v841
      %v850 = vsel %vm846, %v845, %v839
      %v851 = vlaneseq
      %v852 = vshrl.u32 %v851, 7
      %v853 = vsub.s32 6, %v852
      %v854 = vrot.slane %v633, %v853
      %v855 = vlaneseq
      %v856 = vshrl.u32 %v855, 7
      %v857 = vsub.s32 6, %v856
      %v858 = vrot.slane %v634, %v857
      %v859 = vlaneseq
      %v860 = vshrl.u32 %v859, 7
      %v861 = vsub.s32 6, %v860
      %v862 = vrot.slane %v635, %v861
      %v863 = vlaneseq
      %v864 = vshrl.u32 %v863, 7
      %v865 = vsub.s32 6, %v864
      %v866 = vrot.slane %v636, %v865
      %v867 = vmul.f32 %v849, %v854
      %v868 = vmul.f32 %v848, %v858
      %v869 = vmul.f32 %v847, %v862
      %v870 = vmul.f32 %v850, %v866
      %v871 = vpack.c.bf16 %v867, %v867
      %v872 = vpack.c.bf16 %v868, %v868
      %v873 = vpack.c.bf16 %v869, %v869
      %v874 = vpack.c.bf16 %v870, %v870
      %875 = vrot.lane.b32.xlu0 %v631, 112
      %v876 = vpop.permute.xlu0 %875
      %877 = vrot.lane.b32.xlu0 %v643, 112
      %v878 = vpop.permute.xlu0 %877
      %879 = vrot.lane.b32.xlu0 %v632, 112
      %v880 = vpop.permute.xlu0 %879
      %881 = vrot.lane.b32.xlu0 %v644, 112
      %v882 = vpop.permute.xlu0 %881
      %vm883 = vcmp.lt.s32.totalorder %v656, 112
      %v884 = vsel %vm883, %v880, %v882
      %v885 = vsel %vm883, %v878, %v880
      %v886 = vsel %vm883, %v876, %v878
      %v887 = vsel %vm883, %v882, %v876
      %v888 = vlaneseq
      %v889 = vshrl.u32 %v888, 7
      %v890 = vsub.s32 7, %v889
      %v891 = vrot.slane %v633, %v890
      %v892 = vlaneseq
      %v893 = vshrl.u32 %v892, 7
      %v894 = vsub.s32 7, %v893
      %v895 = vrot.slane %v634, %v894
      %v896 = vlaneseq
      %v897 = vshrl.u32 %v896, 7
      %v898 = vsub.s32 7, %v897
      %v899 = vrot.slane %v635, %v898
      %v900 = vlaneseq
      %v901 = vshrl.u32 %v900, 7
      %v902 = vsub.s32 7, %v901
      %v903 = vrot.slane %v636, %v902
      %v904 = vmul.f32 %v886, %v891
      %v905 = vmul.f32 %v885, %v895
      %v906 = vmul.f32 %v884, %v899
      %v907 = vmul.f32 %v887, %v903
      %v908 = vpack.c.bf16 %v904, %v904
      %v909 = vpack.c.bf16 %v905, %v905
      %v910 = vpack.c.bf16 %v906, %v906
      %v911 = vpack.c.bf16 %v907, %v907
      %912 = vrot.lane.b32.xlu0 %v631, 111
      %v913 = vpop.permute.xlu0 %912
      %914 = vrot.lane.b32.xlu0 %v643, 111
      %v915 = vpop.permute.xlu0 %914
      %916 = vrot.lane.b32.xlu0 %v632, 111
      %v917 = vpop.permute.xlu0 %916
      %918 = vrot.lane.b32.xlu0 %v644, 111
      %v919 = vpop.permute.xlu0 %918
      %vm920 = vcmp.lt.s32.totalorder %v656, 111
      %v921 = vsel %vm920, %v917, %v919
      %v922 = vsel %vm920, %v915, %v917
      %v923 = vsel %vm920, %v913, %v915
      %v924 = vsel %vm920, %v919, %v913
      %v925 = vlaneseq
      %v926 = vshrl.u32 %v925, 7
      %v927 = vsub.s32 0, %v926
      %v928 = vrot.slane %v637, %v927
      %v929 = vlaneseq
      %v930 = vshrl.u32 %v929, 7
      %v931 = vsub.s32 0, %v930
      %v932 = vrot.slane %v638, %v931
      %v933 = vlaneseq
      %v934 = vshrl.u32 %v933, 7
      %v935 = vsub.s32 0, %v934
      %v936 = vrot.slane %v639, %v935
      %v937 = vlaneseq
      %v938 = vshrl.u32 %v937, 7
      %v939 = vsub.s32 0, %v938
      %v940 = vrot.slane %v640, %v939
      %v941 = vmul.f32 %v923, %v928
      %v942 = vmul.f32 %v922, %v932
      %v943 = vmul.f32 %v921, %v936
      %v944 = vmul.f32 %v924, %v940
      %v945 = vpack.c.bf16 %v941, %v941
      %v946 = vpack.c.bf16 %v942, %v942
      %v947 = vpack.c.bf16 %v943, %v943
      %v948 = vpack.c.bf16 %v944, %v944
      %v950 = vshrl.u32 %v719, 16
      %v952 = vrot.slane %v950, 6
      %v953 = vshll.u32 %v719, 16
      %v955 = vrot.slane %v953, 7
      %v956 = vor.u32 %v952, %v955
      %v958 = vshrl.u32 %v720, 16
      %v960 = vrot.slane %v958, 6
      %v961 = vshll.u32 %v720, 16
      %v963 = vrot.slane %v961, 7
      %v964 = vor.u32 %v960, %v963
      %v966 = vshrl.u32 %v721, 16
      %v968 = vrot.slane %v966, 6
      %v969 = vshll.u32 %v721, 16
      %v971 = vrot.slane %v969, 7
      %v972 = vor.u32 %v968, %v971
      %v974 = vshrl.u32 %v722, 16
      %v976 = vrot.slane %v974, 6
      %v977 = vshll.u32 %v722, 16
      %v979 = vrot.slane %v977, 7
      %v980 = vor.u32 %v976, %v979
      %v989 = vrot.slane %v756, 5
      %v990 = vrot.slane %v757, 5
      %v991 = vrot.slane %v758, 5
      %v992 = vrot.slane %v759, 5
      %v994 = vshrl.u32 %v793, 16
      %v996 = vrot.slane %v994, 3
      %v997 = vshll.u32 %v793, 16
      %v999 = vrot.slane %v997, 4
      %v1000 = vor.u32 %v996, %v999
      %v1002 = vshrl.u32 %v794, 16
      %v1004 = vrot.slane %v1002, 3
      %v1005 = vshll.u32 %v794, 16
      %v1007 = vrot.slane %v1005, 4
      %v1008 = vor.u32 %v1004, %v1007
      %v1010 = vshrl.u32 %v795, 16
      %v1012 = vrot.slane %v1010, 3
      %v1013 = vshll.u32 %v795, 16
      %v1015 = vrot.slane %v1013, 4
      %v1016 = vor.u32 %v1012, %v1015
      %v1018 = vshrl.u32 %v796, 16
      %v1020 = vrot.slane %v1018, 3
      %v1021 = vshll.u32 %v796, 16
      %v1023 = vrot.slane %v1021, 4
      %v1024 = vor.u32 %v1020, %v1023
      %v1033 = vrot.slane %v797, 2
      %v1034 = vrot.slane %v798, 2
      %v1035 = vrot.slane %v799, 2
      %v1036 = vrot.slane %v800, 2
      %v1038 = vshll.u32 %v834, 16
      %v1040 = vrot.slane %v1038, 1
      %v1042 = vshll.u32 %v835, 16
      %v1044 = vrot.slane %v1042, 1
      %v1046 = vshll.u32 %v836, 16
      %v1048 = vrot.slane %v1046, 1
      %v1050 = vshll.u32 %v837, 16
      %v1052 = vrot.slane %v1050, 1
      %v1053 = vshrl.u32 %v834, 16
      %v1055 = vor.u32 %v1053, %v1040
      %v1056 = vshrl.u32 %v835, 16
      %v1058 = vor.u32 %v1056, %v1044
      %v1059 = vshrl.u32 %v836, 16
      %v1061 = vor.u32 %v1059, %v1048
      %v1062 = vshrl.u32 %v837, 16
      %v1064 = vor.u32 %v1062, %v1052
      %v1073 = vrot.slane %v871, 7
      %v1074 = vrot.slane %v872, 7
      %v1075 = vrot.slane %v873, 7
      %v1076 = vrot.slane %v874, 7
      %v1078 = vshrl.u32 %v908, 16
      %v1080 = vrot.slane %v1078, 5
      %v1081 = vshll.u32 %v908, 16
      %v1083 = vrot.slane %v1081, 6
      %v1084 = vor.u32 %v1080, %v1083
      %v1086 = vshrl.u32 %v909, 16
      %v1088 = vrot.slane %v1086, 5
      %v1089 = vshll.u32 %v909, 16
      %v1091 = vrot.slane %v1089, 6
      %v1092 = vor.u32 %v1088, %v1091
      %v1094 = vshrl.u32 %v910, 16
      %v1096 = vrot.slane %v1094, 5
      %v1097 = vshll.u32 %v910, 16
      %v1099 = vrot.slane %v1097, 6
      %v1100 = vor.u32 %v1096, %v1099
      %v1102 = vshrl.u32 %v911, 16
      %v1104 = vrot.slane %v1102, 5
      %v1105 = vshll.u32 %v911, 16
      %v1107 = vrot.slane %v1105, 6
      %v1108 = vor.u32 %v1104, %v1107
      %v1117 = vrot.slane %v945, 4
      %v1118 = vrot.slane %v946, 4
      %v1119 = vrot.slane %v947, 4
      %v1120 = vrot.slane %v948, 4
      %vm1121 = vcmask 1041408
      %vm1122 = vsmask.f32 1280
      %vm1123 = vmand %vm1121, %vm1122
      %v1124 = vsel %vm1123, %v682, %v956
      %v1125 = vsel %vm1123, %v683, %v964
      %v1126 = vsel %vm1123, %v684, %v972
      %v1127 = vsel %vm1123, %v685, %v980
      %vm1128 = vcmask 1042432
      %v1131 = vsel %vm1128, %v1124, %v989
      %v1135 = vsel %vm1128, %v1125, %v990
      %v1139 = vsel %vm1128, %v1126, %v991
      %v1143 = vsel %vm1128, %v1127, %v992
      %vm1145 = vcmask 1044480
      %vm1146 = vsmask.f32 4352
      %vm1147 = vmand %vm1145, %vm1146
      %v1148 = vsel %vm1147, %v1131, %v1000
      %v1149 = vsel %vm1147, %v1135, %v1008
      %v1150 = vsel %vm1147, %v1139, %v1016
      %v1151 = vsel %vm1147, %v1143, %v1024
      %vm1152 = vcmask 1045504
      %v1155 = vsel %vm1152, %v1148, %v1033
      %v1159 = vsel %vm1152, %v1149, %v1034
      %v1163 = vsel %vm1152, %v1150, %v1035
      %v1167 = vsel %vm1152, %v1151, %v1036
      %vm1169 = vcmask 1047552
      %vm1170 = vsmask.f32 7424
      %vm1171 = vmand %vm1169, %vm1170
      %v1172 = vsel %vm1171, %v1155, %v1040
      %v1173 = vsel %vm1171, %v1159, %v1044
      %v1174 = vsel %vm1171, %v1163, %v1048
      %v1175 = vsel %vm1171, %v1167, %v1052
      %vm1176 = vcmask 1040384
      %v1179 = vsel %vm1176, %v1055, %v1073
      %v1183 = vsel %vm1176, %v1058, %v1074
      %v1187 = vsel %vm1176, %v1061, %v1075
      %v1191 = vsel %vm1176, %v1064, %v1076
      %vm1193 = vcmask 1042432
      %vm1194 = vsmask.f32 2304
      %vm1195 = vmand %vm1193, %vm1194
      %v1196 = vsel %vm1195, %v1179, %v1084
      %v1197 = vsel %vm1195, %v1183, %v1092
      %v1198 = vsel %vm1195, %v1187, %v1100
      %v1199 = vsel %vm1195, %v1191, %v1108
      %vm1200 = vcmask 1043456
      %v1203 = vsel %vm1200, %v1196, %v1117
      %v1206 = vsel %vm1200, %v1197, %v1118
      %v1209 = vsel %vm1200, %v1198, %v1119
      %v1212 = vsel %vm1200, %v1199, %v1120
      %v1213 = vld [vmem:[%s8] sm:$0xf]
      %vm1214 = vcmask 220160
      %v1216 = vsel %vm1214, %v1213, 0
      %vm1218 = vcmask 1044480
      %v1219 = vsel %vm1218, 4294967295, 65535
      %v1220 = vsel %vm1152, %v1219, 0
      %v1221 = vand.u32 %v1203, %v1220
      %v1223 = vand.u32 %v1206, %v1220
      %v1225 = vand.u32 %v1209, %v1220
      %v1227 = vand.u32 %v1212, %v1220
      %1229 = vmatprep.subr.bf16.mxu0 %v1173
      %1230 = vmatpush1.bf16.msra.mxu0 %v1172
      %1231 = vmatprep.subr.bf16.mxu0 %v1223
      %1232 = vmatpush1.bf16.msra.mxu0 %v1221
      %1233 = vmatprep.subr.bf16.mxu0 0
      %1234 = vmatpush1.bf16.msra.mxu0 0
      %1235 = vmatprep.subr.bf16.mxu0 0
      %1236 = vmatpush1.bf16.msra.mxu0 0
      %1237 = vmatprep.subr.bf16.mxu0 0
      %1238 = vmatpush1.bf16.msra.mxu0 0
      %1239 = vmatprep.subr.bf16.mxu0 0
      %1240 = vmatpush1.bf16.msra.mxu0 0
      %1241 = vmatprep.subr.bf16.mxu0 0
      %1242 = vmatpush1.bf16.msra.mxu0 0
      %1243 = vmatprep.subr.bf16.mxu0 0
      %1244 = vmatpush1.bf16.msra.mxu0 0
      %1245 = vmatprep.subr.bf16.mxu0 0
      %1246 = vmatpush1.bf16.msra.mxu0 0
      %1247 = vmatprep.subr.bf16.mxu0 0
      %1248 = vmatpush1.bf16.msra.mxu0 0
      %1249 = vmatprep.subr.bf16.mxu0 0
      %1250 = vmatpush1.bf16.msra.mxu0 0
      %1251 = vmatprep.subr.bf16.mxu0 0
      %1252 = vmatpush1.bf16.msra.mxu0 0
      %1253 = vmatprep.subr.bf16.mxu0 0
      %1254 = vmatpush1.bf16.msra.mxu0 0
      %1255 = vmatprep.subr.bf16.mxu0 0
      %1256 = vmatpush1.bf16.msra.mxu0 0
      %1257 = vmatprep.subr.bf16.mxu0 0
      %1258 = vmatpush1.bf16.msra.mxu0 0
      %1259 = vmatprep.subr.bf16.mxu0 0
      %1260 = vmatpush1.bf16.msra.mxu0 0
      %1261 = vmatprep.mubr.bf16.mxu0 0
      %1262 = vmatmul.mubr.bf16.gmra.mrb[0].mxu0 %v1216
      %v1263 = vpop.f32.mrb[0].mxu0
      %v1264 = vadd.f32 0.0, %v1263
      %v1265 = vpop.f32.mrb[0].mxu0
      %v1266 = vadd.f32 0.0, %v1265
      %v1267 = vpop.f32.mrb[0].mxu0
      %v1268 = vpop.f32.mrb[0].mxu0
      %1269 = vdwg.mxu0
      %1270 = vmatprep.subr.bf16.mxu0 %v1175
      %1271 = vmatpush1.bf16.msra.mxu0 %v1174
      %1272 = vmatprep.subr.bf16.mxu0 %v1227
      %1273 = vmatpush1.bf16.msra.mxu0 %v1225
      %1274 = vmatprep.subr.bf16.mxu0 0
      %1275 = vmatpush1.bf16.msra.mxu0 0
      %1276 = vmatprep.subr.bf16.mxu0 0
      %1277 = vmatpush1.bf16.msra.mxu0 0
      %1278 = vmatprep.subr.bf16.mxu0 0
      %1279 = vmatpush1.bf16.msra.mxu0 0
      %1280 = vmatprep.subr.bf16.mxu0 0
      %1281 = vmatpush1.bf16.msra.mxu0 0
      %1282 = vmatprep.subr.bf16.mxu0 0
      %1283 = vmatpush1.bf16.msra.mxu0 0
      %1284 = vmatprep.subr.bf16.mxu0 0
      %1285 = vmatpush1.bf16.msra.mxu0 0
      %1286 = vmatprep.subr.bf16.mxu0 0
      %1287 = vmatpush1.bf16.msra.mxu0 0
      %1288 = vmatprep.subr.bf16.mxu0 0
      %1289 = vmatpush1.bf16.msra.mxu0 0
      %1290 = vmatprep.subr.bf16.mxu0 0
      %1291 = vmatpush1.bf16.msra.mxu0 0
      %1292 = vmatprep.subr.bf16.mxu0 0
      %1293 = vmatpush1.bf16.msra.mxu0 0
      %1294 = vmatprep.subr.bf16.mxu0 0
      %1295 = vmatpush1.bf16.msra.mxu0 0
      %1296 = vmatprep.subr.bf16.mxu0 0
      %1297 = vmatpush1.bf16.msra.mxu0 0
      %1298 = vmatprep.subr.bf16.mxu0 0
      %1299 = vmatpush1.bf16.msra.mxu0 0
      %1300 = vmatprep.subr.bf16.mxu0 0
      %1301 = vmatpush1.bf16.msra.mxu0 0
      %1302 = vmatprep.mubr.bf16.mxu0 0
      %1303 = vmatmul.mubr.bf16.gmra.mrb[0].mxu0 %v1216
      %v1304 = vpop.f32.mrb[0].mxu0
      %v1305 = vadd.f32 0.0, %v1304
      %v1306 = vpop.f32.mrb[0].mxu0
      %v1307 = vadd.f32 0.0, %v1306
      %v1308 = vpop.f32.mrb[0].mxu0
      %v1309 = vpop.f32.mrb[0].mxu0
      %1310 = vdwg.mxu0
      %v1311 = vmul.f32 %v1264, 0.2
      %v1312 = vmul.f32 %v1266, 0.2
      %v1313 = vmul.f32 %v1305, 0.2
      %v1314 = vmul.f32 %v1307, 0.2
      %v1315 = vmax.f32 %v1264, %v1311
      %v1316 = vmax.f32 %v1266, %v1312
      %v1317 = vmax.f32 %v1305, %v1313
      %v1318 = vmax.f32 %v1307, %v1314
      %v1319 = vpack.c.bf16 %v1315, %v1315
      %v1320 = vpack.c.bf16 %v1316, %v1316
      %v1321 = vpack.c.bf16 %v1317, %v1317
      %v1322 = vpack.c.bf16 %v1318, %v1318
      %v1323 = vld [vmem:[%s4] sm:$0xf]
      %v1324 = vld [vmem:[%s4 + $0x4] sm:$0xf]
      %v1325 = vld [vmem:[%s4 + $0x8] sm:$0xf]
      %v1326 = vld [vmem:[%s4 + $0xc] sm:$0xf]
      %v1327 = vld [vmem:[%s4 + $0x10] sm:$0xf]
      %v1328 = vld [vmem:[%s4 + $0x14] sm:$0xf]
      %v1329 = vld [vmem:[%s4 + $0x18] sm:$0xf]
      %v1330 = vld [vmem:[%s4 + $0x1c] sm:$0xf]
      %v1331 = vld [vmem:[%s4 + $0x20] sm:$0xf]
      %v1332 = vld [vmem:[%s4 + $0x24] sm:$0xf]
      %v1333 = vld [vmem:[%s4 + $0x28] sm:$0xf]
      %v1334 = vld [vmem:[%s4 + $0x2c] sm:$0xf]
      %v1335 = vld [vmem:[%s4 + $0x30] sm:$0xf]
      %v1336 = vld [vmem:[%s4 + $0x34] sm:$0xf]
      %v1337 = vld [vmem:[%s4 + $0x38] sm:$0xf]
      %v1338 = vld [vmem:[%s4 + $0x3c] sm:$0xf]
      %v1339 = vld [vmem:[%s4 + $0x40] sm:$0xf]
      %v1340 = vld [vmem:[%s4 + $0x44] sm:$0xf]
      %v1341 = vld [vmem:[%s4 + $0x48] sm:$0xf]
      %v1342 = vld [vmem:[%s4 + $0x4c] sm:$0xf]
      %v1343 = vld [vmem:[%s4 + $0x50] sm:$0xf]
      %v1344 = vld [vmem:[%s4 + $0x54] sm:$0xf]
      %v1345 = vld [vmem:[%s4 + $0x58] sm:$0xf]
      %v1346 = vld [vmem:[%s4 + $0x5c] sm:$0xf]
      %v1347 = vld [vmem:[%s4 + $0x60] sm:$0xf]
      %v1348 = vld [vmem:[%s4 + $0x64] sm:$0xf]
      %v1349 = vld [vmem:[%s4 + $0x68] sm:$0xf]
      %v1350 = vld [vmem:[%s4 + $0x6c] sm:$0xf]
      %v1351 = vld [vmem:[%s4 + $0x70] sm:$0xf]
      %v1352 = vld [vmem:[%s4 + $0x74] sm:$0xf]
      %v1353 = vld [vmem:[%s4 + $0x78] sm:$0xf]
      %v1354 = vld [vmem:[%s4 + $0x7c] sm:$0xf]
      %v1355 = vld [vmem:[%s4 + $0x80] sm:$0xf]
      %v1356 = vld [vmem:[%s4 + $0x84] sm:$0xf]
      %v1357 = vld [vmem:[%s4 + $0x88] sm:$0xf]
      %v1358 = vld [vmem:[%s4 + $0x8c] sm:$0xf]
      %v1359 = vld [vmem:[%s4 + $0x90] sm:$0xf]
      %v1360 = vld [vmem:[%s4 + $0x94] sm:$0xf]
      %v1361 = vld [vmem:[%s4 + $0x98] sm:$0xf]
      %v1362 = vld [vmem:[%s4 + $0x9c] sm:$0xf]
      %v1363 = vld [vmem:[%s4 + $0xa0] sm:$0xf]
      %v1364 = vld [vmem:[%s4 + $0xa4] sm:$0xf]
      %v1365 = vld [vmem:[%s4 + $0xa8] sm:$0xf]
      %v1366 = vld [vmem:[%s4 + $0xac] sm:$0xf]
      %v1367 = vld [vmem:[%s4 + $0xb0] sm:$0xf]
      %v1368 = vld [vmem:[%s4 + $0xb4] sm:$0xf]
      %v1369 = vld [vmem:[%s4 + $0xb8] sm:$0xf]
      %v1370 = vld [vmem:[%s4 + $0xbc] sm:$0xf]
      %v1371 = vld [vmem:[%s4 + $0xc0] sm:$0xf]
      %v1372 = vld [vmem:[%s4 + $0xc4] sm:$0xf]
      %v1373 = vld [vmem:[%s4 + $0xc8] sm:$0xf]
      %v1374 = vld [vmem:[%s4 + $0xcc] sm:$0xf]
      %v1375 = vld [vmem:[%s4 + $0xd0] sm:$0xf]
      %v1376 = vld [vmem:[%s4 + $0xd4] sm:$0xf]
      %v1377 = vld [vmem:[%s4 + $0xd8] sm:$0xf]
      %v1378 = vld [vmem:[%s4 + $0xdc] sm:$0xf]
      %v1379 = vld [vmem:[%s4 + $0xe0] sm:$0xf]
      %v1380 = vld [vmem:[%s4 + $0xe4] sm:$0xf]
      %v1381 = vld [vmem:[%s4 + $0xe8] sm:$0xf]
      %v1382 = vld [vmem:[%s4 + $0xec] sm:$0xf]
      %v1383 = vld [vmem:[%s4 + $0xf0] sm:$0xf]
      %v1384 = vld [vmem:[%s4 + $0xf4] sm:$0xf]
      %v1385 = vld [vmem:[%s4 + $0xf8] sm:$0xf]
      %v1386 = vld [vmem:[%s4 + $0xfc] sm:$0xf]
      %v1451 = vunpack.c.l.b16 %v1323
      %v1452 = vunpack.c.l.b16 %v1324
      %v1453 = vunpack.c.l.b16 %v1325
      %v1454 = vunpack.c.l.b16 %v1326
      %v1455 = vunpack.c.l.b16 %v1327
      %v1456 = vunpack.c.l.b16 %v1328
      %v1457 = vunpack.c.l.b16 %v1329
      %v1458 = vunpack.c.l.b16 %v1330
      %v1459 = vunpack.c.l.b16 %v1331
      %v1460 = vunpack.c.l.b16 %v1332
      %v1461 = vunpack.c.l.b16 %v1333
      %v1462 = vunpack.c.l.b16 %v1334
      %v1463 = vunpack.c.l.b16 %v1335
      %v1464 = vunpack.c.l.b16 %v1336
      %v1465 = vunpack.c.l.b16 %v1337
      %v1466 = vunpack.c.l.b16 %v1338
      %v1467 = vunpack.c.l.b16 %v1339
      %v1468 = vunpack.c.l.b16 %v1340
      %v1469 = vunpack.c.l.b16 %v1341
      %v1470 = vunpack.c.l.b16 %v1342
      %v1471 = vunpack.c.l.b16 %v1343
      %v1472 = vunpack.c.l.b16 %v1344
      %v1473 = vunpack.c.l.b16 %v1345
      %v1474 = vunpack.c.l.b16 %v1346
      %v1475 = vunpack.c.l.b16 %v1347
      %v1476 = vunpack.c.l.b16 %v1348
      %v1477 = vunpack.c.l.b16 %v1349
      %v1478 = vunpack.c.l.b16 %v1350
      %v1479 = vunpack.c.l.b16 %v1351
      %v1480 = vunpack.c.l.b16 %v1352
      %v1481 = vunpack.c.l.b16 %v1353
      %v1482 = vunpack.c.l.b16 %v1354
      %v1483 = vunpack.c.l.b16 %v1355
      %v1484 = vunpack.c.l.b16 %v1356
      %v1485 = vunpack.c.l.b16 %v1357
      %v1486 = vunpack.c.l.b16 %v1358
      %v1487 = vunpack.c.l.b16 %v1359
      %v1488 = vunpack.c.l.b16 %v1360
      %v1489 = vunpack.c.l.b16 %v1361
      %v1490 = vunpack.c.l.b16 %v1362
      %v1491 = vunpack.c.l.b16 %v1363
      %v1492 = vunpack.c.l.b16 %v1364
      %v1493 = vunpack.c.l.b16 %v1365
      %v1494 = vunpack.c.l.b16 %v1366
      %v1495 = vunpack.c.l.b16 %v1367
      %v1496 = vunpack.c.l.b16 %v1368
      %v1497 = vunpack.c.l.b16 %v1369
      %v1498 = vunpack.c.l.b16 %v1370
      %v1499 = vunpack.c.l.b16 %v1371
      %v1500 = vunpack.c.l.b16 %v1372
      %v1501 = vunpack.c.l.b16 %v1373
      %v1502 = vunpack.c.l.b16 %v1374
      %v1503 = vunpack.c.l.b16 %v1375
      %v1504 = vunpack.c.l.b16 %v1376
      %v1505 = vunpack.c.l.b16 %v1377
      %v1506 = vunpack.c.l.b16 %v1378
      %v1507 = vunpack.c.l.b16 %v1379
      %v1508 = vunpack.c.l.b16 %v1380
      %v1509 = vunpack.c.l.b16 %v1381
      %v1510 = vunpack.c.l.b16 %v1382
      %v1511 = vunpack.c.l.b16 %v1383
      %v1512 = vunpack.c.l.b16 %v1384
      %v1513 = vunpack.c.l.b16 %v1385
      %v1514 = vunpack.c.l.b16 %v1386
      %v1515 = vpack.c.b16 %v1452, %v1451
      %v1516 = vpack.c.b16 %v1454, %v1453
      %v1517 = vpack.c.b16 %v1456, %v1455
      %v1518 = vpack.c.b16 %v1458, %v1457
      %v1519 = vpack.c.b16 %v1460, %v1459
      %v1520 = vpack.c.b16 %v1462, %v1461
      %v1521 = vpack.c.b16 %v1464, %v1463
      %v1522 = vpack.c.b16 %v1466, %v1465
      %v1523 = vpack.c.b16 %v1468, %v1467
      %v1524 = vpack.c.b16 %v1470, %v1469
      %v1525 = vpack.c.b16 %v1472, %v1471
      %v1526 = vpack.c.b16 %v1474, %v1473
      %v1527 = vpack.c.b16 %v1476, %v1475
      %v1528 = vpack.c.b16 %v1478, %v1477
      %v1529 = vpack.c.b16 %v1480, %v1479
      %v1530 = vpack.c.b16 %v1482, %v1481
      %v1531 = vpack.c.b16 %v1484, %v1483
      %v1532 = vpack.c.b16 %v1486, %v1485
      %v1533 = vpack.c.b16 %v1488, %v1487
      %v1534 = vpack.c.b16 %v1490, %v1489
      %v1535 = vpack.c.b16 %v1492, %v1491
      %v1536 = vpack.c.b16 %v1494, %v1493
      %v1537 = vpack.c.b16 %v1496, %v1495
      %v1538 = vpack.c.b16 %v1498, %v1497
      %v1539 = vpack.c.b16 %v1500, %v1499
      %v1540 = vpack.c.b16 %v1502, %v1501
      %v1541 = vpack.c.b16 %v1504, %v1503
      %v1542 = vpack.c.b16 %v1506, %v1505
      %v1543 = vpack.c.b16 %v1508, %v1507
      %v1544 = vpack.c.b16 %v1510, %v1509
      %v1545 = vpack.c.b16 %v1512, %v1511
      %v1546 = vpack.c.b16 %v1514, %v1513
      %1579 = vmatprep.subr.bf16.mxu0 0
      %1580 = vmatpush1.bf16.msra.mxu0 %v1515
      %1581 = vmatprep.subr.bf16.mxu0 0
      %1582 = vmatpush1.bf16.msra.mxu0 %v1516
      %1583 = vmatprep.subr.bf16.mxu0 0
      %1584 = vmatpush1.bf16.msra.mxu0 %v1517
      %1585 = vmatprep.subr.bf16.mxu0 0
      %1586 = vmatpush1.bf16.msra.mxu0 %v1518
      %1587 = vmatprep.subr.bf16.mxu0 0
      %1588 = vmatpush1.bf16.msra.mxu0 %v1519
      %1589 = vmatprep.subr.bf16.mxu0 0
      %1590 = vmatpush1.bf16.msra.mxu0 %v1520
      %1591 = vmatprep.subr.bf16.mxu0 0
      %1592 = vmatpush1.bf16.msra.mxu0 %v1521
      %1593 = vmatprep.subr.bf16.mxu0 0
      %1594 = vmatpush1.bf16.msra.mxu0 %v1522
      %1595 = vmatprep.subr.bf16.mxu0 0
      %1596 = vmatpush1.bf16.msra.mxu0 %v1523
      %1597 = vmatprep.subr.bf16.mxu0 0
      %1598 = vmatpush1.bf16.msra.mxu0 %v1524
      %1599 = vmatprep.subr.bf16.mxu0 0
      %1600 = vmatpush1.bf16.msra.mxu0 %v1525
      %1601 = vmatprep.subr.bf16.mxu0 0
      %1602 = vmatpush1.bf16.msra.mxu0 %v1526
      %1603 = vmatprep.subr.bf16.mxu0 0
      %1604 = vmatpush1.bf16.msra.mxu0 %v1527
      %1605 = vmatprep.subr.bf16.mxu0 0
      %1606 = vmatpush1.bf16.msra.mxu0 %v1528
      %1607 = vmatprep.subr.bf16.mxu0 0
      %1608 = vmatpush1.bf16.msra.mxu0 %v1529
      %1609 = vmatprep.subr.bf16.mxu0 0
      %1610 = vmatpush1.bf16.msra.mxu0 %v1530
      %1611 = vmatprep.mubr.bf16.mxu0 %v1320
      %1612 = vmatmul.mubr.bf16.gmra.mrb[0].mxu0 %v1319
      %v1613 = vpop.f32.mrb[0].mxu0
      %v1614 = vadd.f32 0.0, %v1613
      %v1615 = vpop.f32.mrb[0].mxu0
      %v1616 = vpop.f32.mrb[0].mxu0
      %v1617 = vpop.f32.mrb[0].mxu0
      %1618 = vdwg.mxu0
      %1619 = vmatprep.subr.bf16.mxu0 0
      %1620 = vmatpush1.bf16.msra.mxu0 %v1531
      %1621 = vmatprep.subr.bf16.mxu0 0
      %1622 = vmatpush1.bf16.msra.mxu0 %v1532
      %1623 = vmatprep.subr.bf16.mxu0 0
      %1624 = vmatpush1.bf16.msra.mxu0 %v1533
      %1625 = vmatprep.subr.bf16.mxu0 0
      %1626 = vmatpush1.bf16.msra.mxu0 %v1534
      %1627 = vmatprep.subr.bf16.mxu0 0
      %1628 = vmatpush1.bf16.msra.mxu0 %v1535
      %1629 = vmatprep.subr.bf16.mxu0 0
      %1630 = vmatpush1.bf16.msra.mxu0 %v1536
      %1631 = vmatprep.subr.bf16.mxu0 0
      %1632 = vmatpush1.bf16.msra.mxu0 %v1537
      %1633 = vmatprep.subr.bf16.mxu0 0
      %1634 = vmatpush1.bf16.msra.mxu0 %v1538
      %1635 = vmatprep.subr.bf16.mxu0 0
      %1636 = vmatpush1.bf16.msra.mxu0 %v1539
      %1637 = vmatprep.subr.bf16.mxu0 0
      %1638 = vmatpush1.bf16.msra.mxu0 %v1540
      %1639 = vmatprep.subr.bf16.mxu0 0
      %1640 = vmatpush1.bf16.msra.mxu0 %v1541
      %1641 = vmatprep.subr.bf16.mxu0 0
      %1642 = vmatpush1.bf16.msra.mxu0 %v1542
      %1643 = vmatprep.subr.bf16.mxu0 0
      %1644 = vmatpush1.bf16.msra.mxu0 %v1543
      %1645 = vmatprep.subr.bf16.mxu0 0
      %1646 = vmatpush1.bf16.msra.mxu0 %v1544
      %1647 = vmatprep.subr.bf16.mxu0 0
      %1648 = vmatpush1.bf16.msra.mxu0 %v1545
      %1649 = vmatprep.subr.bf16.mxu0 0
      %1650 = vmatpush1.bf16.msra.mxu0 %v1546
      %1651 = vmatprep.mubr.bf16.mxu0 %v1322
      %1652 = vmatmul.mubr.bf16.gmra.mrb[0].mxu0 %v1321
      %v1653 = vpop.f32.mrb[0].mxu0
      %v1654 = vadd.f32 %v1614, %v1653
      %v1655 = vpop.f32.mrb[0].mxu0
      %v1656 = vpop.f32.mrb[0].mxu0
      %v1657 = vpop.f32.mrb[0].mxu0
      %1658 = vdwg.mxu0
      %v1659 = vld [vmem:[%s2] sm:$0xff]
      %v1660 = vld [vmem:[%s2 + $0x8] sm:$0x1]
      %1661 = vrot.lane.b32.xlu0 %v1654, 9
      %v1662 = vpop.permute.xlu0 %1661
      %v1663 = vlaneseq
      %v1664 = vshrl.u32 %v1663, 7
      %v1665 = vsub.s32 0, %v1664
      %v1666 = vrot.slane %v1659, %v1665
      %v1667 = vmul.f32 %v1662, %v1666
      %v1668 = vpack.c.bf16 %v1667, %v1667
      %1669 = vrot.lane.b32.xlu0 %v1654, 8
      %v1670 = vpop.permute.xlu0 %1669
      %v1671 = vlaneseq
      %v1672 = vshrl.u32 %v1671, 7
      %v1673 = vsub.s32 1, %v1672
      %v1674 = vrot.slane %v1659, %v1673
      %v1675 = vmul.f32 %v1670, %v1674
      %v1676 = vpack.c.bf16 %v1675, %v1675
      %1677 = vrot.lane.b32.xlu0 %v1654, 7
      %v1678 = vpop.permute.xlu0 %1677
      %v1679 = vlaneseq
      %v1680 = vshrl.u32 %v1679, 7
      %v1681 = vsub.s32 2, %v1680
      %v1682 = vrot.slane %v1659, %v1681
      %v1683 = vmul.f32 %v1678, %v1682
      %v1684 = vpack.c.bf16 %v1683, %v1683
      %1685 = vrot.lane.b32.xlu0 %v1654, 1
      %v1686 = vpop.permute.xlu0 %1685
      %v1687 = vlaneseq
      %v1688 = vshrl.u32 %v1687, 7
      %v1689 = vsub.s32 3, %v1688
      %v1690 = vrot.slane %v1659, %v1689
      %v1691 = vmul.f32 %v1686, %v1690
      %v1692 = vpack.c.bf16 %v1691, %v1691
      %v1693 = vpack.c.bf16 %v1654, %v1654
      %1694 = vrot.lane.b32.xlu0 %v1654, 127
      %v1695 = vpop.permute.xlu0 %1694
      %v1696 = vlaneseq
      %v1697 = vshrl.u32 %v1696, 7
      %v1698 = vsub.s32 5, %v1697
      %v1699 = vrot.slane %v1659, %v1698
      %v1700 = vmul.f32 %v1695, %v1699
      %v1701 = vpack.c.bf16 %v1700, %v1700
      %1702 = vrot.lane.b32.xlu0 %v1654, 121
      %v1703 = vpop.permute.xlu0 %1702
      %v1704 = vlaneseq
      %v1705 = vshrl.u32 %v1704, 7
      %v1706 = vsub.s32 6, %v1705
      %v1707 = vrot.slane %v1659, %v1706
      %v1708 = vmul.f32 %v1703, %v1707
      %v1709 = vpack.c.bf16 %v1708, %v1708
      %1710 = vrot.lane.b32.xlu0 %v1654, 120
      %v1711 = vpop.permute.xlu0 %1710
      %v1712 = vlaneseq
      %v1713 = vshrl.u32 %v1712, 7
      %v1714 = vsub.s32 7, %v1713
      %v1715 = vrot.slane %v1659, %v1714
      %v1716 = vmul.f32 %v1711, %v1715
      %v1717 = vpack.c.bf16 %v1716, %v1716
      %1718 = vrot.lane.b32.xlu0 %v1654, 119
      %v1719 = vpop.permute.xlu0 %1718
      %v1720 = vlaneseq
      %v1721 = vshrl.u32 %v1720, 7
      %v1722 = vsub.s32 0, %v1721
      %v1723 = vrot.slane %v1660, %v1722
      %v1724 = vmul.f32 %v1719, %v1723
      %v1725 = vpack.c.bf16 %v1724, %v1724
      %v1727 = vrot.slane %v1676, 4
      %v1729 = vrot.slane %v1692, 4
      %v1731 = vrot.slane %v1701, 4
      %v1733 = vrot.slane %v1717, 4
      %v1736 = vsel %vm1200, %v1668, %v1727
      %v1740 = vsel %vm1200, %v1684, %v1729
      %v1744 = vsel %vm1200, %v1693, %v1731
      %v1748 = vsel %vm1200, %v1709, %v1733
      %v1750 = vld [vmem:[%s9] sm:$0xf]
      %v1751 = vld [vmem:[%s9 + $0x4] sm:$0xf]
      %v1754 = vunpack.c.l.b16 %v1750
      %v1755 = vunpack.c.l.b16 %v1751
      %v1756 = vpack.c.b16 %v1755, %v1754
      %vm1757 = vcmask 588800
      %v1759 = vsel %vm1757, %v1756, 0
      %v1762 = vsel %vm1200, %v1725, 0
      %1764 = vmatprep.subr.bf16.mxu0 0
      %1765 = vmatpush1.bf16.msra.mxu0 %v1736
      %1766 = vmatprep.subr.bf16.mxu0 0
      %1767 = vmatpush1.bf16.msra.mxu0 %v1740
      %1768 = vmatprep.subr.bf16.mxu0 0
      %1769 = vmatpush1.bf16.msra.mxu0 %v1744
      %1770 = vmatprep.subr.bf16.mxu0 0
      %1771 = vmatpush1.bf16.msra.mxu0 %v1748
      %1772 = vmatprep.subr.bf16.mxu0 0
      %1773 = vmatpush1.bf16.msra.mxu0 %v1762
      %1774 = vmatprep.subr.bf16.mxu0 0
      %1775 = vmatpush1.bf16.msra.mxu0 0
      %1776 = vmatprep.subr.bf16.mxu0 0
      %1777 = vmatpush1.bf16.msra.mxu0 0
      %1778 = vmatprep.subr.bf16.mxu0 0
      %1779 = vmatpush1.bf16.msra.mxu0 0
      %1780 = vmatprep.subr.bf16.mxu0 0
      %1781 = vmatpush1.bf16.msra.mxu0 0
      %1782 = vmatprep.subr.bf16.mxu0 0
      %1783 = vmatpush1.bf16.msra.mxu0 0
      %1784 = vmatprep.subr.bf16.mxu0 0
      %1785 = vmatpush1.bf16.msra.mxu0 0
      %1786 = vmatprep.subr.bf16.mxu0 0
      %1787 = vmatpush1.bf16.msra.mxu0 0
      %1788 = vmatprep.subr.bf16.mxu0 0
      %1789 = vmatpush1.bf16.msra.mxu0 0
      %1790 = vmatprep.subr.bf16.mxu0 0
      %1791 = vmatpush1.bf16.msra.mxu0 0
      %1792 = vmatprep.subr.bf16.mxu0 0
      %1793 = vmatpush1.bf16.msra.mxu0 0
      %1794 = vmatprep.subr.bf16.mxu0 0
      %1795 = vmatpush1.bf16.msra.mxu0 0
      %1796 = vmatprep.mubr.bf16.mxu0 0
      %1797 = vmatmul.mubr.bf16.gmra.mrb[0].mxu0 %v1759
      %v1798 = vpop.f32.mrb[0].mxu0
      %v1799 = vadd.f32 0.0, %v1798
      %v1800 = vpop.f32.mrb[0].mxu0
      %v1801 = vpop.f32.mrb[0].mxu0
      %v1802 = vadd.f32 0.0, %v1801
      %v1803 = vpop.f32.mrb[0].mxu0
      %1804 = vdwg.mxu0
      %v1805 = vmul.f32 %v1799, 0.2
      %v1806 = vmul.f32 %v1802, 0.2
      %v1807 = vmax.f32 %v1799, %v1805
      %v1808 = vmax.f32 %v1802, %v1806
      %v1809 = vpack.c.bf16 %v1808, %v1807
      %v1810 = vld [vmem:[%s5] sm:$0xf]
      %v1811 = vld [vmem:[%s5 + $0x4] sm:$0xf]
      %v1812 = vld [vmem:[%s5 + $0x8] sm:$0xf]
      %v1813 = vld [vmem:[%s5 + $0xc] sm:$0xf]
      %v1814 = vld [vmem:[%s5 + $0x10] sm:$0xf]
      %v1815 = vld [vmem:[%s5 + $0x14] sm:$0xf]
      %v1816 = vld [vmem:[%s5 + $0x18] sm:$0xf]
      %v1817 = vld [vmem:[%s5 + $0x1c] sm:$0xf]
      %v1818 = vld [vmem:[%s5 + $0x20] sm:$0xf]
      %v1819 = vld [vmem:[%s5 + $0x24] sm:$0xf]
      %v1820 = vld [vmem:[%s5 + $0x28] sm:$0xf]
      %v1821 = vld [vmem:[%s5 + $0x2c] sm:$0xf]
      %v1822 = vld [vmem:[%s5 + $0x30] sm:$0xf]
      %v1823 = vld [vmem:[%s5 + $0x34] sm:$0xf]
      %v1824 = vld [vmem:[%s5 + $0x38] sm:$0xf]
      %v1825 = vld [vmem:[%s5 + $0x3c] sm:$0xf]
      %v1842 = vunpack.c.l.b16 %v1810
      %v1843 = vunpack.c.l.b16 %v1811
      %v1844 = vunpack.c.l.b16 %v1812
      %v1845 = vunpack.c.l.b16 %v1813
      %v1846 = vunpack.c.l.b16 %v1814
      %v1847 = vunpack.c.l.b16 %v1815
      %v1848 = vunpack.c.l.b16 %v1816
      %v1849 = vunpack.c.l.b16 %v1817
      %v1850 = vunpack.c.l.b16 %v1818
      %v1851 = vunpack.c.l.b16 %v1819
      %v1852 = vunpack.c.l.b16 %v1820
      %v1853 = vunpack.c.l.b16 %v1821
      %v1854 = vunpack.c.l.b16 %v1822
      %v1855 = vunpack.c.l.b16 %v1823
      %v1856 = vunpack.c.l.b16 %v1824
      %v1857 = vunpack.c.l.b16 %v1825
      %v1858 = vpack.c.b16 %v1843, %v1842
      %v1859 = vpack.c.b16 %v1845, %v1844
      %v1860 = vpack.c.b16 %v1847, %v1846
      %v1861 = vpack.c.b16 %v1849, %v1848
      %v1862 = vpack.c.b16 %v1851, %v1850
      %v1863 = vpack.c.b16 %v1853, %v1852
      %v1864 = vpack.c.b16 %v1855, %v1854
      %v1865 = vpack.c.b16 %v1857, %v1856
      %1874 = vmatprep.subr.bf16.mxu0 0
      %1875 = vmatpush1.bf16.msra.mxu0 %v1858
      %1876 = vmatprep.subr.bf16.mxu0 0
      %1877 = vmatpush1.bf16.msra.mxu0 %v1859
      %1878 = vmatprep.subr.bf16.mxu0 0
      %1879 = vmatpush1.bf16.msra.mxu0 %v1860
      %1880 = vmatprep.subr.bf16.mxu0 0
      %1881 = vmatpush1.bf16.msra.mxu0 %v1861
      %1882 = vmatprep.subr.bf16.mxu0 0
      %1883 = vmatpush1.bf16.msra.mxu0 %v1862
      %1884 = vmatprep.subr.bf16.mxu0 0
      %1885 = vmatpush1.bf16.msra.mxu0 %v1863
      %1886 = vmatprep.subr.bf16.mxu0 0
      %1887 = vmatpush1.bf16.msra.mxu0 %v1864
      %1888 = vmatprep.subr.bf16.mxu0 0
      %1889 = vmatpush1.bf16.msra.mxu0 %v1865
      %1890 = vmatprep.subr.bf16.mxu0 0
      %1891 = vmatpush1.bf16.msra.mxu0 0
      %1892 = vmatprep.subr.bf16.mxu0 0
      %1893 = vmatpush1.bf16.msra.mxu0 0
      %1894 = vmatprep.subr.bf16.mxu0 0
      %1895 = vmatpush1.bf16.msra.mxu0 0
      %1896 = vmatprep.subr.bf16.mxu0 0
      %1897 = vmatpush1.bf16.msra.mxu0 0
      %1898 = vmatprep.subr.bf16.mxu0 0
      %1899 = vmatpush1.bf16.msra.mxu0 0
      %1900 = vmatprep.subr.bf16.mxu0 0
      %1901 = vmatpush1.bf16.msra.mxu0 0
      %1902 = vmatprep.subr.bf16.mxu0 0
      %1903 = vmatpush1.bf16.msra.mxu0 0
      %1904 = vmatprep.subr.bf16.mxu0 0
      %1905 = vmatpush1.bf16.msra.mxu0 0
      %1906 = vmatprep.mubr.bf16.mxu0 0
      %1907 = vmatmul.mubr.bf16.gmra.mrb[0].mxu0 %v1809
      %v1908 = vpop.f32.mrb[0].mxu0
      %v1909 = vadd.f32 0.0, %v1908
      %v1910 = vpop.f32.mrb[0].mxu0
      %v1911 = vpop.f32.mrb[0].mxu0
      %v1912 = vadd.f32 0.0, %v1911
      %v1913 = vpop.f32.mrb[0].mxu0
      %1914 = vdwg.mxu0
      %v1915 = vld [vmem:[%s3] sm:$0xff]
      %v1916 = vld [vmem:[%s3 + $0x8] sm:$0x1]
      %vm1917 = vcmask 1047808
      %1918 = vrot.lane.b32.xlu0 %v1909, 32
      %v1919 = vpop.permute.xlu0 %1918
      %v1920 = vsel %vm1917, %v1919, %v1909
      %1921 = vrot.lane.b32.xlu0 %v1912, 32
      %v1922 = vpop.permute.xlu0 %1921
      %v1923 = vsel %vm1917, %v1922, %v1912
      %1924 = vrot.lane.b32.xlu0 %v1920, 32
      %v1925 = vpop.permute.xlu0 %1924
      %1926 = vrot.lane.b32.xlu0 %v1923, 32
      %v1927 = vpop.permute.xlu0 %1926
      %v1928 = vsel %vm1917, %v1925, %v1909
      %v1929 = vsel %vm1917, %v1927, %v1912
      %v1930 = vlaneseq
      %v1931 = vshrl.u32 %v1930, 7
      %v1932 = vsub.s32 0, %v1931
      %v1933 = vrot.slane %v1915, %v1932
      %1935 = vrot.lane.b32.xlu0 %v1933, 27
      %v1936 = vpop.permute.xlu0 %1935
      %v1938 = vmul.f32 %v1928, %v1936
      %v1939 = vmul.f32 %v1929, %v1936
      %v1940 = vpack.c.bf16 %v1939, %v1938
      %v1941 = vlaneseq
      %v1942 = vshrl.u32 %v1941, 7
      %v1943 = vsub.s32 1, %v1942
      %v1944 = vrot.slane %v1915, %v1943
      %1946 = vrot.lane.b32.xlu0 %v1944, 28
      %v1947 = vpop.permute.xlu0 %1946
      %v1949 = vmul.f32 %v1928, %v1947
      %v1950 = vmul.f32 %v1929, %v1947
      %v1951 = vpack.c.bf16 %v1950, %v1949
      %v1952 = vlaneseq
      %v1953 = vshrl.u32 %v1952, 7
      %v1954 = vsub.s32 2, %v1953
      %v1955 = vrot.slane %v1915, %v1954
      %1957 = vrot.lane.b32.xlu0 %v1955, 29
      %v1958 = vpop.permute.xlu0 %1957
      %v1960 = vmul.f32 %v1928, %v1958
      %v1961 = vmul.f32 %v1929, %v1958
      %v1962 = vpack.c.bf16 %v1961, %v1960
      %v1963 = vlaneseq
      %v1964 = vshrl.u32 %v1963, 7
      %v1965 = vsub.s32 3, %v1964
      %v1966 = vrot.slane %v1915, %v1965
      %1968 = vrot.lane.b32.xlu0 %v1966, 31
      %v1969 = vpop.permute.xlu0 %1968
      %v1971 = vmul.f32 %v1928, %v1969
      %v1972 = vmul.f32 %v1929, %v1969
      %v1973 = vpack.c.bf16 %v1972, %v1971
      %v1974 = vpack.c.bf16 %v1912, %v1909
      %v1975 = vlaneseq
      %v1976 = vshrl.u32 %v1975, 7
      %v1977 = vsub.s32 5, %v1976
      %v1978 = vrot.slane %v1915, %v1977
      %1980 = vrot.lane.b32.xlu0 %v1978, 1
      %v1981 = vpop.permute.xlu0 %1980
      %v1983 = vmul.f32 %v1928, %v1981
      %v1984 = vmul.f32 %v1929, %v1981
      %v1985 = vpack.c.bf16 %v1984, %v1983
      %v1986 = vlaneseq
      %v1987 = vshrl.u32 %v1986, 7
      %v1988 = vsub.s32 6, %v1987
      %v1989 = vrot.slane %v1915, %v1988
      %1991 = vrot.lane.b32.xlu0 %v1989, 3
      %v1992 = vpop.permute.xlu0 %1991
      %v1994 = vmul.f32 %v1928, %v1992
      %v1995 = vmul.f32 %v1929, %v1992
      %v1996 = vpack.c.bf16 %v1995, %v1994
      %v1997 = vlaneseq
      %v1998 = vshrl.u32 %v1997, 7
      %v1999 = vsub.s32 7, %v1998
      %v2000 = vrot.slane %v1915, %v1999
      %2002 = vrot.lane.b32.xlu0 %v2000, 4
      %v2003 = vpop.permute.xlu0 %2002
      %v2005 = vmul.f32 %v1928, %v2003
      %v2006 = vmul.f32 %v1929, %v2003
      %v2007 = vpack.c.bf16 %v2006, %v2005
      %v2008 = vlaneseq
      %v2009 = vshrl.u32 %v2008, 7
      %v2010 = vsub.s32 0, %v2009
      %v2011 = vrot.slane %v1916, %v2010
      %2013 = vrot.lane.b32.xlu0 %v2011, 5
      %v2014 = vpop.permute.xlu0 %2013
      %v2016 = vmul.f32 %v1928, %v2014
      %v2017 = vmul.f32 %v1929, %v2014
      %v2018 = vpack.c.bf16 %v2017, %v2016
      %2020 = vrot.lane.b32.xlu0 %v1951, 127
      %v2021 = vpop.permute.xlu0 %2020
      %2023 = vrot.lane.b32.xlu0 %v1962, 126
      %v2024 = vpop.permute.xlu0 %2023
      %2026 = vrot.lane.b32.xlu0 %v1973, 124
      %v2027 = vpop.permute.xlu0 %2026
      %2029 = vrot.lane.b32.xlu0 %v1974, 27
      %v2030 = vpop.permute.xlu0 %2029
      %2032 = vrot.lane.b32.xlu0 %v1985, 26
      %v2033 = vpop.permute.xlu0 %2032
      %2035 = vrot.lane.b32.xlu0 %v1996, 24
      %v2036 = vpop.permute.xlu0 %2035
      %2038 = vrot.lane.b32.xlu0 %v2007, 23
      %v2039 = vpop.permute.xlu0 %2038
      %2041 = vrot.lane.b32.xlu0 %v2018, 22
      %v2042 = vpop.permute.xlu0 %2041
      %v2043 = vld [vmem:[%s10] sm:$0xff]
      %v2044 = vld [vmem:[%s10 + $0x8] sm:$0xff]
      %v2045 = vld [vmem:[%s11] sm:$0xff]
      %v2046 = vld [vmem:[%s11 + $0x8] sm:$0xff]
      %2048 = vset.pattern.permute.xlu0 0
      %2049 = vperm.xlu0 %2048, %v2045
      %v2050 = vpop.permute.xlu0 %2049
      %2053 = vset.pattern.permute.xlu0 0
      %2054 = vperm.xlu0 %2053, %v2046
      %v2055 = vpop.permute.xlu0 %2054
      %v2059 = vunpack.c.l.b16 %v2043
      %v2060 = vunpack.c.h.b16 %v2043
      %v2061 = vunpack.c.l.b16 %v2044
      %v2062 = vunpack.c.h.b16 %v2044
      %v2063 = vpack.c.b16 %v2061, %v2059
      %v2064 = vpack.c.b16 %v2062, %v2060
      %2067 = vrot.lane.b32.xlu0 %v1940, 101
      %v2068 = vpop.permute.xlu0 %2067
      %2069 = vrot.lane.b32.xlu0 %v2021, 101
      %v2070 = vpop.permute.xlu0 %2069
      %2071 = vrot.lane.b32.xlu0 %v2024, 101
      %v2072 = vpop.permute.xlu0 %2071
      %2073 = vrot.lane.b32.xlu0 %v2027, 101
      %v2074 = vpop.permute.xlu0 %2073
      %2075 = vrot.lane.b32.xlu0 %v2030, 101
      %v2076 = vpop.permute.xlu0 %2075
      %2077 = vrot.lane.b32.xlu0 %v2033, 101
      %v2078 = vpop.permute.xlu0 %2077
      %2079 = vrot.lane.b32.xlu0 %v2036, 101
      %v2080 = vpop.permute.xlu0 %2079
      %2081 = vrot.lane.b32.xlu0 %v2039, 101
      %v2082 = vpop.permute.xlu0 %2081
      %2083 = vrot.lane.b32.xlu0 %v2042, 101
      %v2084 = vpop.permute.xlu0 %2083
      %vm2094 = vcmask 130048
      %v2096 = vsel %vm2094, %v2064, 0
      %2098 = vmatprep.subr.bf16.mxu0 0
      %2099 = vmatpush1.bf16.msra.mxu0 %v2068
      %2100 = vmatprep.subr.bf16.mxu0 0
      %2101 = vmatpush1.bf16.msra.mxu0 %v2070
      %2102 = vmatprep.subr.bf16.mxu0 0
      %2103 = vmatpush1.bf16.msra.mxu0 %v2072
      %2104 = vmatprep.subr.bf16.mxu0 0
      %2105 = vmatpush1.bf16.msra.mxu0 %v2074
      %2106 = vmatprep.subr.bf16.mxu0 0
      %2107 = vmatpush1.bf16.msra.mxu0 %v2076
      %2108 = vmatprep.subr.bf16.mxu0 0
      %2109 = vmatpush1.bf16.msra.mxu0 %v2078
      %2110 = vmatprep.subr.bf16.mxu0 0
      %2111 = vmatpush1.bf16.msra.mxu0 %v2080
      %2112 = vmatprep.subr.bf16.mxu0 0
      %2113 = vmatpush1.bf16.msra.mxu0 %v2082
      %2114 = vmatprep.subr.bf16.mxu0 0
      %2115 = vmatpush1.bf16.msra.mxu0 %v2084
      %2116 = vmatprep.subr.bf16.mxu0 0
      %2117 = vmatpush1.bf16.msra.mxu0 0
      %2118 = vmatprep.subr.bf16.mxu0 0
      %2119 = vmatpush1.bf16.msra.mxu0 0
      %2120 = vmatprep.subr.bf16.mxu0 0
      %2121 = vmatpush1.bf16.msra.mxu0 0
      %2122 = vmatprep.subr.bf16.mxu0 0
      %2123 = vmatpush1.bf16.msra.mxu0 0
      %2124 = vmatprep.subr.bf16.mxu0 0
      %2125 = vmatpush1.bf16.msra.mxu0 0
      %2126 = vmatprep.subr.bf16.mxu0 0
      %2127 = vmatpush1.bf16.msra.mxu0 0
      %2128 = vmatprep.subr.bf16.mxu0 0
      %2129 = vmatpush1.bf16.msra.mxu0 0
      %2130 = vmatprep.mubr.bf16.mxu0 %v2096
      %2131 = vmatmul.mubr.bf16.gmra.mrb[0].mxu0 %v2063
      %v2132 = vpop.f32.mrb[0].mxu0
      %v2133 = vadd.f32 %v2050, %v2132
      %v2134 = vpop.f32.mrb[0].mxu0
      %v2135 = vpop.f32.mrb[0].mxu0
      %v2136 = vadd.f32 %v2055, %v2135
      %v2137 = vpop.f32.mrb[0].mxu0
      %2138 = vdwg.mxu0
      %v2139 = vmul.f32 %v2133, 0.2
      %v2140 = vmul.f32 %v2136, 0.2
      %v2141 = vmax.f32 %v2133, %v2139
      %v2142 = vmax.f32 %v2136, %v2140
      %2143 = vrot.lane.b32.xlu0 %v2141, 32
      %v2144 = vpop.permute.xlu0 %2143
      %v2145 = vsel %vm1917, %v2144, %v2141
      %2146 = vrot.lane.b32.xlu0 %v2142, 32
      %v2147 = vpop.permute.xlu0 %2146
      %v2148 = vsel %vm1917, %v2147, %v2142
      %2149 = vrot.lane.b32.xlu0 %v2145, 32
      %v2150 = vpop.permute.xlu0 %2149
      %2151 = vrot.lane.b32.xlu0 %v2148, 32
      %v2152 = vpop.permute.xlu0 %2151
      %v2153 = vsel %vm1917, %v2150, %v2141
      %v2154 = vsel %vm1917, %v2152, %v2142
      %v2155 = vmul.f32 %v2153, %v1936
      %v2156 = vmul.f32 %v2154, %v1936
      %v2157 = vpack.c.bf16 %v2156, %v2155
      %v2158 = vmul.f32 %v2153, %v1947
      %v2159 = vmul.f32 %v2154, %v1947
      %v2160 = vpack.c.bf16 %v2159, %v2158
      %v2161 = vmul.f32 %v2153, %v1958
      %v2162 = vmul.f32 %v2154, %v1958
      %v2163 = vpack.c.bf16 %v2162, %v2161
      %v2164 = vmul.f32 %v2153, %v1969
      %v2165 = vmul.f32 %v2154, %v1969
      %v2166 = vpack.c.bf16 %v2165, %v2164
      %v2167 = vpack.c.bf16 %v2142, %v2141
      %v2168 = vmul.f32 %v2153, %v1981
      %v2169 = vmul.f32 %v2154, %v1981
      %v2170 = vpack.c.bf16 %v2169, %v2168
      %v2171 = vmul.f32 %v2153, %v1992
      %v2172 = vmul.f32 %v2154, %v1992
      %v2173 = vpack.c.bf16 %v2172, %v2171
      %v2174 = vmul.f32 %v2153, %v2003
      %v2175 = vmul.f32 %v2154, %v2003
      %v2176 = vpack.c.bf16 %v2175, %v2174
      %v2177 = vmul.f32 %v2153, %v2014
      %v2178 = vmul.f32 %v2154, %v2014
      %v2179 = vpack.c.bf16 %v2178, %v2177
      %2181 = vrot.lane.b32.xlu0 %v2160, 127
      %v2182 = vpop.permute.xlu0 %2181
      %2184 = vrot.lane.b32.xlu0 %v2163, 126
      %v2185 = vpop.permute.xlu0 %2184
      %2187 = vrot.lane.b32.xlu0 %v2166, 124
      %v2188 = vpop.permute.xlu0 %2187
      %2190 = vrot.lane.b32.xlu0 %v2167, 27
      %v2191 = vpop.permute.xlu0 %2190
      %2193 = vrot.lane.b32.xlu0 %v2170, 26
      %v2194 = vpop.permute.xlu0 %2193
      %2196 = vrot.lane.b32.xlu0 %v2173, 24
      %v2197 = vpop.permute.xlu0 %2196
      %2199 = vrot.lane.b32.xlu0 %v2176, 23
      %v2200 = vpop.permute.xlu0 %2199
      %2202 = vrot.lane.b32.xlu0 %v2179, 22
      %v2203 = vpop.permute.xlu0 %2202
      %v2204 = vld [vmem:[%s12] sm:$0xff]
      %v2205 = vld [vmem:[%s12 + $0x8] sm:$0xff]
      %v2206 = vld [vmem:[%s13] sm:$0xff]
      %v2207 = vld [vmem:[%s13 + $0x8] sm:$0xff]
      %2209 = vset.pattern.permute.xlu0 0
      %2210 = vperm.xlu0 %2209, %v2206
      %v2211 = vpop.permute.xlu0 %2210
      %2214 = vset.pattern.permute.xlu0 0
      %2215 = vperm.xlu0 %2214, %v2207
      %v2216 = vpop.permute.xlu0 %2215
      %v2220 = vunpack.c.l.b16 %v2204
      %v2221 = vunpack.c.h.b16 %v2204
      %v2222 = vunpack.c.l.b16 %v2205
      %v2223 = vunpack.c.h.b16 %v2205
      %v2224 = vpack.c.b16 %v2222, %v2220
      %v2225 = vpack.c.b16 %v2223, %v2221
      %2228 = vrot.lane.b32.xlu0 %v2157, 101
      %v2229 = vpop.permute.xlu0 %2228
      %2230 = vrot.lane.b32.xlu0 %v2182, 101
      %v2231 = vpop.permute.xlu0 %2230
      %2232 = vrot.lane.b32.xlu0 %v2185, 101
      %v2233 = vpop.permute.xlu0 %2232
      %2234 = vrot.lane.b32.xlu0 %v2188, 101
      %v2235 = vpop.permute.xlu0 %2234
      %2236 = vrot.lane.b32.xlu0 %v2191, 101
      %v2237 = vpop.permute.xlu0 %2236
      %2238 = vrot.lane.b32.xlu0 %v2194, 101
      %v2239 = vpop.permute.xlu0 %2238
      %2240 = vrot.lane.b32.xlu0 %v2197, 101
      %v2241 = vpop.permute.xlu0 %2240
      %2242 = vrot.lane.b32.xlu0 %v2200, 101
      %v2243 = vpop.permute.xlu0 %2242
      %2244 = vrot.lane.b32.xlu0 %v2203, 101
      %v2245 = vpop.permute.xlu0 %2244
      %v2256 = vsel %vm2094, %v2225, 0
      %2258 = vmatprep.subr.bf16.mxu0 0
      %2259 = vmatpush1.bf16.msra.mxu0 %v2229
      %2260 = vmatprep.subr.bf16.mxu0 0
      %2261 = vmatpush1.bf16.msra.mxu0 %v2231
      %2262 = vmatprep.subr.bf16.mxu0 0
      %2263 = vmatpush1.bf16.msra.mxu0 %v2233
      %2264 = vmatprep.subr.bf16.mxu0 0
      %2265 = vmatpush1.bf16.msra.mxu0 %v2235
      %2266 = vmatprep.subr.bf16.mxu0 0
      %2267 = vmatpush1.bf16.msra.mxu0 %v2237
      %2268 = vmatprep.subr.bf16.mxu0 0
      %2269 = vmatpush1.bf16.msra.mxu0 %v2239
      %2270 = vmatprep.subr.bf16.mxu0 0
      %2271 = vmatpush1.bf16.msra.mxu0 %v2241
      %2272 = vmatprep.subr.bf16.mxu0 0
      %2273 = vmatpush1.bf16.msra.mxu0 %v2243
      %2274 = vmatprep.subr.bf16.mxu0 0
      %2275 = vmatpush1.bf16.msra.mxu0 %v2245
      %2276 = vmatprep.subr.bf16.mxu0 0
      %2277 = vmatpush1.bf16.msra.mxu0 0
      %2278 = vmatprep.subr.bf16.mxu0 0
      %2279 = vmatpush1.bf16.msra.mxu0 0
      %2280 = vmatprep.subr.bf16.mxu0 0
      %2281 = vmatpush1.bf16.msra.mxu0 0
      %2282 = vmatprep.subr.bf16.mxu0 0
      %2283 = vmatpush1.bf16.msra.mxu0 0
      %2284 = vmatprep.subr.bf16.mxu0 0
      %2285 = vmatpush1.bf16.msra.mxu0 0
      %2286 = vmatprep.subr.bf16.mxu0 0
      %2287 = vmatpush1.bf16.msra.mxu0 0
      %2288 = vmatprep.subr.bf16.mxu0 0
      %2289 = vmatpush1.bf16.msra.mxu0 0
      %2290 = vmatprep.mubr.bf16.mxu0 %v2256
      %2291 = vmatmul.mubr.bf16.gmra.mrb[0].mxu0 %v2224
      %v2292 = vpop.f32.mrb[0].mxu0
      %v2293 = vadd.f32 %v2211, %v2292
      %v2294 = vpop.f32.mrb[0].mxu0
      %v2295 = vpop.f32.mrb[0].mxu0
      %v2296 = vadd.f32 %v2216, %v2295
      %v2297 = vpop.f32.mrb[0].mxu0
      %2298 = vdwg.mxu0
      %v2299 = vadd.f32 %v1909, %v2293
      %v2300 = vadd.f32 %v1912, %v2296
      %2301 = vrot.lane.b32.xlu0 %v2299, 32
      %v2302 = vpop.permute.xlu0 %2301
      %v2303 = vsel %vm1917, %v2302, %v2299
      %2304 = vrot.lane.b32.xlu0 %v2300, 32
      %v2305 = vpop.permute.xlu0 %2304
      %v2306 = vsel %vm1917, %v2305, %v2300
      %2307 = vrot.lane.b32.xlu0 %v2303, 32
      %v2308 = vpop.permute.xlu0 %2307
      %2309 = vrot.lane.b32.xlu0 %v2306, 32
      %v2310 = vpop.permute.xlu0 %2309
      %v2311 = vsel %vm1917, %v2308, %v2299
      %v2312 = vsel %vm1917, %v2310, %v2300
      %v2313 = vmul.f32 %v2311, %v1936
      %v2314 = vmul.f32 %v2312, %v1936
      %v2315 = vpack.c.bf16 %v2314, %v2313
      %v2316 = vmul.f32 %v2311, %v1947
      %v2317 = vmul.f32 %v2312, %v1947
      %v2318 = vpack.c.bf16 %v2317, %v2316
      %v2319 = vmul.f32 %v2311, %v1958
      %v2320 = vmul.f32 %v2312, %v1958
      %v2321 = vpack.c.bf16 %v2320, %v2319
      %v2322 = vmul.f32 %v2311, %v1969
      %v2323 = vmul.f32 %v2312, %v1969
      %v2324 = vpack.c.bf16 %v2323, %v2322
      %v2325 = vpack.c.bf16 %v2300, %v2299
      %v2326 = vmul.f32 %v2311, %v1981
      %v2327 = vmul.f32 %v2312, %v1981
      %v2328 = vpack.c.bf16 %v2327, %v2326
      %v2329 = vmul.f32 %v2311, %v1992
      %v2330 = vmul.f32 %v2312, %v1992
      %v2331 = vpack.c.bf16 %v2330, %v2329
      %v2332 = vmul.f32 %v2311, %v2003
      %v2333 = vmul.f32 %v2312, %v2003
      %v2334 = vpack.c.bf16 %v2333, %v2332
      %v2335 = vmul.f32 %v2311, %v2014
      %v2336 = vmul.f32 %v2312, %v2014
      %v2337 = vpack.c.bf16 %v2336, %v2335
      %2339 = vrot.lane.b32.xlu0 %v2318, 127
      %v2340 = vpop.permute.xlu0 %2339
      %2342 = vrot.lane.b32.xlu0 %v2321, 126
      %v2343 = vpop.permute.xlu0 %2342
      %2345 = vrot.lane.b32.xlu0 %v2324, 124
      %v2346 = vpop.permute.xlu0 %2345
      %2348 = vrot.lane.b32.xlu0 %v2325, 27
      %v2349 = vpop.permute.xlu0 %2348
      %2351 = vrot.lane.b32.xlu0 %v2328, 26
      %v2352 = vpop.permute.xlu0 %2351
      %2354 = vrot.lane.b32.xlu0 %v2331, 24
      %v2355 = vpop.permute.xlu0 %2354
      %2357 = vrot.lane.b32.xlu0 %v2334, 23
      %v2358 = vpop.permute.xlu0 %2357
      %2360 = vrot.lane.b32.xlu0 %v2337, 22
      %v2361 = vpop.permute.xlu0 %2360
      %v2362 = vld [vmem:[%s14] sm:$0xff]
      %v2363 = vld [vmem:[%s14 + $0x8] sm:$0xff]
      %v2364 = vld [vmem:[%s15] sm:$0xff]
      %v2365 = vld [vmem:[%s15 + $0x8] sm:$0xff]
      %2367 = vset.pattern.permute.xlu0 0
      %2368 = vperm.xlu0 %2367, %v2364
      %v2369 = vpop.permute.xlu0 %2368
      %2372 = vset.pattern.permute.xlu0 0
      %2373 = vperm.xlu0 %2372, %v2365
      %v2374 = vpop.permute.xlu0 %2373
      %v2378 = vunpack.c.l.b16 %v2362
      %v2379 = vunpack.c.h.b16 %v2362
      %v2380 = vunpack.c.l.b16 %v2363
      %v2381 = vunpack.c.h.b16 %v2363
      %v2382 = vpack.c.b16 %v2380, %v2378
      %v2383 = vpack.c.b16 %v2381, %v2379
      %2386 = vrot.lane.b32.xlu0 %v2315, 101
      %v2387 = vpop.permute.xlu0 %2386
      %2388 = vrot.lane.b32.xlu0 %v2340, 101
      %v2389 = vpop.permute.xlu0 %2388
      %2390 = vrot.lane.b32.xlu0 %v2343, 101
      %v2391 = vpop.permute.xlu0 %2390
      %2392 = vrot.lane.b32.xlu0 %v2346, 101
      %v2393 = vpop.permute.xlu0 %2392
      %2394 = vrot.lane.b32.xlu0 %v2349, 101
      %v2395 = vpop.permute.xlu0 %2394
      %2396 = vrot.lane.b32.xlu0 %v2352, 101
      %v2397 = vpop.permute.xlu0 %2396
      %2398 = vrot.lane.b32.xlu0 %v2355, 101
      %v2399 = vpop.permute.xlu0 %2398
      %2400 = vrot.lane.b32.xlu0 %v2358, 101
      %v2401 = vpop.permute.xlu0 %2400
      %2402 = vrot.lane.b32.xlu0 %v2361, 101
      %v2403 = vpop.permute.xlu0 %2402
      %v2414 = vsel %vm2094, %v2383, 0
      %2416 = vmatprep.subr.bf16.mxu0 0
      %2417 = vmatpush1.bf16.msra.mxu0 %v2387
      %2418 = vmatprep.subr.bf16.mxu0 0
      %2419 = vmatpush1.bf16.msra.mxu0 %v2389
      %2420 = vmatprep.subr.bf16.mxu0 0
      %2421 = vmatpush1.bf16.msra.mxu0 %v2391
      %2422 = vmatprep.subr.bf16.mxu0 0
      %2423 = vmatpush1.bf16.msra.mxu0 %v2393
      %2424 = vmatprep.subr.bf16.mxu0 0
      %2425 = vmatpush1.bf16.msra.mxu0 %v2395
      %2426 = vmatprep.subr.bf16.mxu0 0
      %2427 = vmatpush1.bf16.msra.mxu0 %v2397
      %2428 = vmatprep.subr.bf16.mxu0 0
      %2429 = vmatpush1.bf16.msra.mxu0 %v2399
      %2430 = vmatprep.subr.bf16.mxu0 0
      %2431 = vmatpush1.bf16.msra.mxu0 %v2401
      %2432 = vmatprep.subr.bf16.mxu0 0
      %2433 = vmatpush1.bf16.msra.mxu0 %v2403
      %2434 = vmatprep.subr.bf16.mxu0 0
      %2435 = vmatpush1.bf16.msra.mxu0 0
      %2436 = vmatprep.subr.bf16.mxu0 0
      %2437 = vmatpush1.bf16.msra.mxu0 0
      %2438 = vmatprep.subr.bf16.mxu0 0
      %2439 = vmatpush1.bf16.msra.mxu0 0
      %2440 = vmatprep.subr.bf16.mxu0 0
      %2441 = vmatpush1.bf16.msra.mxu0 0
      %2442 = vmatprep.subr.bf16.mxu0 0
      %2443 = vmatpush1.bf16.msra.mxu0 0
      %2444 = vmatprep.subr.bf16.mxu0 0
      %2445 = vmatpush1.bf16.msra.mxu0 0
      %2446 = vmatprep.subr.bf16.mxu0 0
      %2447 = vmatpush1.bf16.msra.mxu0 0
      %2448 = vmatprep.mubr.bf16.mxu0 %v2414
      %2449 = vmatmul.mubr.bf16.gmra.mrb[0].mxu0 %v2382
      %v2450 = vpop.f32.mrb[0].mxu0
      %v2451 = vadd.f32 %v2369, %v2450
      %v2452 = vpop.f32.mrb[0].mxu0
      %v2453 = vpop.f32.mrb[0].mxu0
      %v2454 = vadd.f32 %v2374, %v2453
      %v2455 = vpop.f32.mrb[0].mxu0
      %2456 = vdwg.mxu0
      %v2457 = vmul.f32 %v2451, 0.2
      %v2458 = vmul.f32 %v2454, 0.2
      %v2459 = vmax.f32 %v2451, %v2457
      %v2460 = vmax.f32 %v2454, %v2458
      %2461 = vrot.lane.b32.xlu0 %v2459, 32
      %v2462 = vpop.permute.xlu0 %2461
      %v2463 = vsel %vm1917, %v2462, %v2459
      %2464 = vrot.lane.b32.xlu0 %v2460, 32
      %v2465 = vpop.permute.xlu0 %2464
      %v2466 = vsel %vm1917, %v2465, %v2460
      %2467 = vrot.lane.b32.xlu0 %v2463, 32
      %v2468 = vpop.permute.xlu0 %2467
      %2469 = vrot.lane.b32.xlu0 %v2466, 32
      %v2470 = vpop.permute.xlu0 %2469
      %v2471 = vsel %vm1917, %v2468, %v2459
      %v2472 = vsel %vm1917, %v2470, %v2460
      %v2473 = vmul.f32 %v2471, %v1936
      %v2474 = vmul.f32 %v2472, %v1936
      %v2475 = vpack.c.bf16 %v2474, %v2473
      %v2476 = vmul.f32 %v2471, %v1947
      %v2477 = vmul.f32 %v2472, %v1947
      %v2478 = vpack.c.bf16 %v2477, %v2476
      %v2479 = vmul.f32 %v2471, %v1958
      %v2480 = vmul.f32 %v2472, %v1958
      %v2481 = vpack.c.bf16 %v2480, %v2479
      %v2482 = vmul.f32 %v2471, %v1969
      %v2483 = vmul.f32 %v2472, %v1969
      %v2484 = vpack.c.bf16 %v2483, %v2482
      %v2485 = vpack.c.bf16 %v2460, %v2459
      %v2486 = vmul.f32 %v2471, %v1981
      %v2487 = vmul.f32 %v2472, %v1981
      %v2488 = vpack.c.bf16 %v2487, %v2486
      %v2489 = vmul.f32 %v2471, %v1992
      %v2490 = vmul.f32 %v2472, %v1992
      %v2491 = vpack.c.bf16 %v2490, %v2489
      %v2492 = vmul.f32 %v2471, %v2003
      %v2493 = vmul.f32 %v2472, %v2003
      %v2494 = vpack.c.bf16 %v2493, %v2492
      %v2495 = vmul.f32 %v2471, %v2014
      %v2496 = vmul.f32 %v2472, %v2014
      %v2497 = vpack.c.bf16 %v2496, %v2495
      %2499 = vrot.lane.b32.xlu0 %v2478, 127
      %v2500 = vpop.permute.xlu0 %2499
      %2502 = vrot.lane.b32.xlu0 %v2481, 126
      %v2503 = vpop.permute.xlu0 %2502
      %2505 = vrot.lane.b32.xlu0 %v2484, 124
      %v2506 = vpop.permute.xlu0 %2505
      %2508 = vrot.lane.b32.xlu0 %v2485, 27
      %v2509 = vpop.permute.xlu0 %2508
      %2511 = vrot.lane.b32.xlu0 %v2488, 26
      %v2512 = vpop.permute.xlu0 %2511
      %2514 = vrot.lane.b32.xlu0 %v2491, 24
      %v2515 = vpop.permute.xlu0 %2514
      %2517 = vrot.lane.b32.xlu0 %v2494, 23
      %v2518 = vpop.permute.xlu0 %2517
      %2520 = vrot.lane.b32.xlu0 %v2497, 22
      %v2521 = vpop.permute.xlu0 %2520
      %v2522 = vld [vmem:[%s16] sm:$0xff]
      %v2523 = vld [vmem:[%s16 + $0x8] sm:$0xff]
      %v2524 = vld [vmem:[%s17] sm:$0xff]
      %v2525 = vld [vmem:[%s17 + $0x8] sm:$0xff]
      %2527 = vset.pattern.permute.xlu0 0
      %2528 = vperm.xlu0 %2527, %v2524
      %v2529 = vpop.permute.xlu0 %2528
      %2532 = vset.pattern.permute.xlu0 0
      %2533 = vperm.xlu0 %2532, %v2525
      %v2534 = vpop.permute.xlu0 %2533
      %v2538 = vunpack.c.l.b16 %v2522
      %v2539 = vunpack.c.h.b16 %v2522
      %v2540 = vunpack.c.l.b16 %v2523
      %v2541 = vunpack.c.h.b16 %v2523
      %v2542 = vpack.c.b16 %v2540, %v2538
      %v2543 = vpack.c.b16 %v2541, %v2539
      %2546 = vrot.lane.b32.xlu0 %v2475, 101
      %v2547 = vpop.permute.xlu0 %2546
      %2548 = vrot.lane.b32.xlu0 %v2500, 101
      %v2549 = vpop.permute.xlu0 %2548
      %2550 = vrot.lane.b32.xlu0 %v2503, 101
      %v2551 = vpop.permute.xlu0 %2550
      %2552 = vrot.lane.b32.xlu0 %v2506, 101
      %v2553 = vpop.permute.xlu0 %2552
      %2554 = vrot.lane.b32.xlu0 %v2509, 101
      %v2555 = vpop.permute.xlu0 %2554
      %2556 = vrot.lane.b32.xlu0 %v2512, 101
      %v2557 = vpop.permute.xlu0 %2556
      %2558 = vrot.lane.b32.xlu0 %v2515, 101
      %v2559 = vpop.permute.xlu0 %2558
      %2560 = vrot.lane.b32.xlu0 %v2518, 101
      %v2561 = vpop.permute.xlu0 %2560
      %2562 = vrot.lane.b32.xlu0 %v2521, 101
      %v2563 = vpop.permute.xlu0 %2562
      %v2574 = vsel %vm2094, %v2543, 0
      %2576 = vmatprep.subr.bf16.mxu0 0
      %2577 = vmatpush1.bf16.msra.mxu0 %v2547
      %2578 = vmatprep.subr.bf16.mxu0 0
      %2579 = vmatpush1.bf16.msra.mxu0 %v2549
      %2580 = vmatprep.subr.bf16.mxu0 0
      %2581 = vmatpush1.bf16.msra.mxu0 %v2551
      %2582 = vmatprep.subr.bf16.mxu0 0
      %2583 = vmatpush1.bf16.msra.mxu0 %v2553
      %2584 = vmatprep.subr.bf16.mxu0 0
      %2585 = vmatpush1.bf16.msra.mxu0 %v2555
      %2586 = vmatprep.subr.bf16.mxu0 0
      %2587 = vmatpush1.bf16.msra.mxu0 %v2557
      %2588 = vmatprep.subr.bf16.mxu0 0
      %2589 = vmatpush1.bf16.msra.mxu0 %v2559
      %2590 = vmatprep.subr.bf16.mxu0 0
      %2591 = vmatpush1.bf16.msra.mxu0 %v2561
      %2592 = vmatprep.subr.bf16.mxu0 0
      %2593 = vmatpush1.bf16.msra.mxu0 %v2563
      %2594 = vmatprep.subr.bf16.mxu0 0
      %2595 = vmatpush1.bf16.msra.mxu0 0
      %2596 = vmatprep.subr.bf16.mxu0 0
      %2597 = vmatpush1.bf16.msra.mxu0 0
      %2598 = vmatprep.subr.bf16.mxu0 0
      %2599 = vmatpush1.bf16.msra.mxu0 0
      %2600 = vmatprep.subr.bf16.mxu0 0
      %2601 = vmatpush1.bf16.msra.mxu0 0
      %2602 = vmatprep.subr.bf16.mxu0 0
      %2603 = vmatpush1.bf16.msra.mxu0 0
      %2604 = vmatprep.subr.bf16.mxu0 0
      %2605 = vmatpush1.bf16.msra.mxu0 0
      %2606 = vmatprep.subr.bf16.mxu0 0
      %2607 = vmatpush1.bf16.msra.mxu0 0
      %2608 = vmatprep.mubr.bf16.mxu0 %v2574
      %2609 = vmatmul.mubr.bf16.gmra.mrb[0].mxu0 %v2542
      %v2610 = vpop.f32.mrb[0].mxu0
      %v2611 = vadd.f32 %v2529, %v2610
      %v2612 = vpop.f32.mrb[0].mxu0
      %v2613 = vpop.f32.mrb[0].mxu0
      %v2614 = vadd.f32 %v2534, %v2613
      %v2615 = vpop.f32.mrb[0].mxu0
      %2616 = vdwg.mxu0
      %v2617 = vadd.f32 %v2299, %v2611
      %v2618 = vadd.f32 %v2300, %v2614
      %v2619 = vpack.c.bf16 %v2618, %v2617
      %v2620 = vld [vmem:[%s6] sm:$0xf]
      %v2621 = vld [vmem:[%s6 + $0x4] sm:$0xf]
      %v2622 = vld [vmem:[%s6 + $0x8] sm:$0xf]
      %v2623 = vld [vmem:[%s6 + $0xc] sm:$0xf]
      %v2628 = vunpack.c.l.b16 %v2620
      %v2629 = vunpack.c.l.b16 %v2621
      %v2630 = vunpack.c.l.b16 %v2622
      %v2631 = vunpack.c.l.b16 %v2623
      %v2632 = vpack.c.b16 %v2629, %v2628
      %v2633 = vpack.c.b16 %v2631, %v2630
      %vm2636 = vcmask 261120
      %v2638 = vsel %vm2636, %v2619, 0
      %v2641 = vsel %vm2636, %v1974, 0
      %2643 = vmatprep.subr.bf16.mxu0 0
      %2644 = vmatpush1.bf16.msra.mxu0 %v2632
      %2645 = vmatprep.subr.bf16.mxu0 0
      %2646 = vmatpush1.bf16.msra.mxu0 %v2633
      %2647 = vmatprep.subr.bf16.mxu0 0
      %2648 = vmatpush1.bf16.msra.mxu0 0
      %2649 = vmatprep.subr.bf16.mxu0 0
      %2650 = vmatpush1.bf16.msra.mxu0 0
      %2651 = vmatprep.subr.bf16.mxu0 0
      %2652 = vmatpush1.bf16.msra.mxu0 0
      %2653 = vmatprep.subr.bf16.mxu0 0
      %2654 = vmatpush1.bf16.msra.mxu0 0
      %2655 = vmatprep.subr.bf16.mxu0 0
      %2656 = vmatpush1.bf16.msra.mxu0 0
      %2657 = vmatprep.subr.bf16.mxu0 0
      %2658 = vmatpush1.bf16.msra.mxu0 0
      %2659 = vmatprep.subr.bf16.mxu0 0
      %2660 = vmatpush1.bf16.msra.mxu0 0
      %2661 = vmatprep.subr.bf16.mxu0 0
      %2662 = vmatpush1.bf16.msra.mxu0 0
      %2663 = vmatprep.subr.bf16.mxu0 0
      %2664 = vmatpush1.bf16.msra.mxu0 0
      %2665 = vmatprep.subr.bf16.mxu0 0
      %2666 = vmatpush1.bf16.msra.mxu0 0
      %2667 = vmatprep.subr.bf16.mxu0 0
      %2668 = vmatpush1.bf16.msra.mxu0 0
      %2669 = vmatprep.subr.bf16.mxu0 0
      %2670 = vmatpush1.bf16.msra.mxu0 0
      %2671 = vmatprep.subr.bf16.mxu0 0
      %2672 = vmatpush1.bf16.msra.mxu0 0
      %2673 = vmatprep.subr.bf16.mxu0 0
      %2674 = vmatpush1.bf16.msra.mxu0 0
      %2675 = vmatprep.mubr.bf16.mxu0 0
      %2676 = vmatmul.mubr.bf16.gmra.mrb[0].mxu0 %v2638
      %v2677 = vpop.f32.mrb[0].mxu0
      %v2678 = vadd.f32 0.0, %v2677
      %v2679 = vpop.f32.mrb[0].mxu0
      %v2680 = vpop.f32.mrb[0].mxu0
      %v2681 = vadd.f32 0.0, %v2680
      %v2682 = vpop.f32.mrb[0].mxu0
      %2683 = vmatprep.mubr.bf16.mxu0 0
      %2684 = vmatmul.mubr.bf16.gmra.mrb[0].mxu0 %v2641
      %v2685 = vpop.f32.mrb[0].mxu0
      %v2686 = vadd.f32 0.0, %v2685
      %v2687 = vpop.f32.mrb[0].mxu0
      %v2688 = vpop.f32.mrb[0].mxu0
      %v2689 = vadd.f32 0.0, %v2688
      %v2690 = vpop.f32.mrb[0].mxu0
      %2691 = vdwg.mxu0
      %2692 = vrot.lane.b32.xlu0 %v2678, 9
      %v2693 = vpop.permute.xlu0 %2692
      %2694 = vrot.lane.b32.xlu0 %v2681, 9
      %v2695 = vpop.permute.xlu0 %2694
      %2696 = vrot.lane.b32.xlu0 %v2686, 9
      %v2697 = vpop.permute.xlu0 %2696
      %2698 = vrot.lane.b32.xlu0 %v2689, 9
      %v2699 = vpop.permute.xlu0 %2698
      %v2700 = vmul.f32 %v2693, %v1666
      %v2701 = vmul.f32 %v2695, %v1666
      %v2702 = vmul.f32 %v2697, %v1666
      %v2703 = vmul.f32 %v2699, %v1666
      %v2704 = vpack.c.bf16 %v2701, %v2700
      %v2705 = vpack.c.bf16 %v2703, %v2702
      %2706 = vrot.lane.b32.xlu0 %v2678, 8
      %v2707 = vpop.permute.xlu0 %2706
      %2708 = vrot.lane.b32.xlu0 %v2681, 8
      %v2709 = vpop.permute.xlu0 %2708
      %2710 = vrot.lane.b32.xlu0 %v2686, 8
      %v2711 = vpop.permute.xlu0 %2710
      %2712 = vrot.lane.b32.xlu0 %v2689, 8
      %v2713 = vpop.permute.xlu0 %2712
      %v2714 = vmul.f32 %v2707, %v1674
      %v2715 = vmul.f32 %v2709, %v1674
      %v2716 = vmul.f32 %v2711, %v1674
      %v2717 = vmul.f32 %v2713, %v1674
      %v2718 = vpack.c.bf16 %v2715, %v2714
      %v2719 = vpack.c.bf16 %v2717, %v2716
      %2720 = vrot.lane.b32.xlu0 %v2678, 7
      %v2721 = vpop.permute.xlu0 %2720
      %2722 = vrot.lane.b32.xlu0 %v2681, 7
      %v2723 = vpop.permute.xlu0 %2722
      %2724 = vrot.lane.b32.xlu0 %v2686, 7
      %v2725 = vpop.permute.xlu0 %2724
      %2726 = vrot.lane.b32.xlu0 %v2689, 7
      %v2727 = vpop.permute.xlu0 %2726
      %v2728 = vmul.f32 %v2721, %v1682
      %v2729 = vmul.f32 %v2723, %v1682
      %v2730 = vmul.f32 %v2725, %v1682
      %v2731 = vmul.f32 %v2727, %v1682
      %v2732 = vpack.c.bf16 %v2729, %v2728
      %v2733 = vpack.c.bf16 %v2731, %v2730
      %2734 = vrot.lane.b32.xlu0 %v2678, 1
      %v2735 = vpop.permute.xlu0 %2734
      %2736 = vrot.lane.b32.xlu0 %v2681, 1
      %v2737 = vpop.permute.xlu0 %2736
      %2738 = vrot.lane.b32.xlu0 %v2686, 1
      %v2739 = vpop.permute.xlu0 %2738
      %2740 = vrot.lane.b32.xlu0 %v2689, 1
      %v2741 = vpop.permute.xlu0 %2740
      %v2742 = vmul.f32 %v2735, %v1690
      %v2743 = vmul.f32 %v2737, %v1690
      %v2744 = vmul.f32 %v2739, %v1690
      %v2745 = vmul.f32 %v2741, %v1690
      %v2746 = vpack.c.bf16 %v2743, %v2742
      %v2747 = vpack.c.bf16 %v2745, %v2744
      %v2748 = vpack.c.bf16 %v2681, %v2678
      %v2749 = vpack.c.bf16 %v2689, %v2686
      %2750 = vrot.lane.b32.xlu0 %v2678, 127
      %v2751 = vpop.permute.xlu0 %2750
      %2752 = vrot.lane.b32.xlu0 %v2681, 127
      %v2753 = vpop.permute.xlu0 %2752
      %2754 = vrot.lane.b32.xlu0 %v2686, 127
      %v2755 = vpop.permute.xlu0 %2754
      %2756 = vrot.lane.b32.xlu0 %v2689, 127
      %v2757 = vpop.permute.xlu0 %2756
      %v2758 = vmul.f32 %v2751, %v1699
      %v2759 = vmul.f32 %v2753, %v1699
      %v2760 = vmul.f32 %v2755, %v1699
      %v2761 = vmul.f32 %v2757, %v1699
      %v2762 = vpack.c.bf16 %v2759, %v2758
      %v2763 = vpack.c.bf16 %v2761, %v2760
      %2764 = vrot.lane.b32.xlu0 %v2678, 121
      %v2765 = vpop.permute.xlu0 %2764
      %2766 = vrot.lane.b32.xlu0 %v2681, 121
      %v2767 = vpop.permute.xlu0 %2766
      %2768 = vrot.lane.b32.xlu0 %v2686, 121
      %v2769 = vpop.permute.xlu0 %2768
      %2770 = vrot.lane.b32.xlu0 %v2689, 121
      %v2771 = vpop.permute.xlu0 %2770
      %v2772 = vmul.f32 %v2765, %v1707
      %v2773 = vmul.f32 %v2767, %v1707
      %v2774 = vmul.f32 %v2769, %v1707
      %v2775 = vmul.f32 %v2771, %v1707
      %v2776 = vpack.c.bf16 %v2773, %v2772
      %v2777 = vpack.c.bf16 %v2775, %v2774
      %2778 = vrot.lane.b32.xlu0 %v2678, 120
      %v2779 = vpop.permute.xlu0 %2778
      %2780 = vrot.lane.b32.xlu0 %v2681, 120
      %v2781 = vpop.permute.xlu0 %2780
      %2782 = vrot.lane.b32.xlu0 %v2686, 120
      %v2783 = vpop.permute.xlu0 %2782
      %2784 = vrot.lane.b32.xlu0 %v2689, 120
      %v2785 = vpop.permute.xlu0 %2784
      %v2786 = vmul.f32 %v2779, %v1715
      %v2787 = vmul.f32 %v2781, %v1715
      %v2788 = vmul.f32 %v2783, %v1715
      %v2789 = vmul.f32 %v2785, %v1715
      %v2790 = vpack.c.bf16 %v2787, %v2786
      %v2791 = vpack.c.bf16 %v2789, %v2788
      %2792 = vrot.lane.b32.xlu0 %v2678, 119
      %v2793 = vpop.permute.xlu0 %2792
      %2794 = vrot.lane.b32.xlu0 %v2681, 119
      %v2795 = vpop.permute.xlu0 %2794
      %2796 = vrot.lane.b32.xlu0 %v2686, 119
      %v2797 = vpop.permute.xlu0 %2796
      %2798 = vrot.lane.b32.xlu0 %v2689, 119
      %v2799 = vpop.permute.xlu0 %2798
      %v2800 = vmul.f32 %v2793, %v1723
      %v2801 = vmul.f32 %v2795, %v1723
      %v2802 = vmul.f32 %v2797, %v1723
      %v2803 = vmul.f32 %v2799, %v1723
      %v2804 = vpack.c.bf16 %v2801, %v2800
      %v2805 = vpack.c.bf16 %v2803, %v2802
      %v2806 = vld [vmem:[%s18] sm:$0xff]
      %v2807 = vld [vmem:[%s18 + $0x8] sm:$0xf]
      %v2810 = vunpack.c.l.b16 %v2806
      %v2811 = vunpack.c.h.b16 %v2806
      %v2812 = vunpack.c.l.b16 %v2807
      %v2813 = vpack.c.b16 %v2810, %v2810
      %v2814 = vpack.c.b16 %v2811, %v2811
      %v2815 = vpack.c.b16 %v2812, %v2812
      %v2819 = vsel %vm2636, %v2815, 0
      %2821 = vmatprep.subr.bf16.mxu0 0
      %2822 = vmatpush1.bf16.msra.mxu0 %v2704
      %2823 = vmatprep.subr.bf16.mxu0 0
      %2824 = vmatpush1.bf16.msra.mxu0 %v2705
      %2825 = vmatprep.subr.bf16.mxu0 0
      %2826 = vmatpush1.bf16.msra.mxu0 %v2718
      %2827 = vmatprep.subr.bf16.mxu0 0
      %2828 = vmatpush1.bf16.msra.mxu0 %v2719
      %2829 = vmatprep.subr.bf16.mxu0 0
      %2830 = vmatpush1.bf16.msra.mxu0 %v2732
      %2831 = vmatprep.subr.bf16.mxu0 0
      %2832 = vmatpush1.bf16.msra.mxu0 %v2733
      %2833 = vmatprep.subr.bf16.mxu0 0
      %2834 = vmatpush1.bf16.msra.mxu0 %v2746
      %2835 = vmatprep.subr.bf16.mxu0 0
      %2836 = vmatpush1.bf16.msra.mxu0 %v2747
      %2837 = vmatprep.subr.bf16.mxu0 0
      %2838 = vmatpush1.bf16.msra.mxu0 %v2748
      %2839 = vmatprep.subr.bf16.mxu0 0
      %2840 = vmatpush1.bf16.msra.mxu0 %v2749
      %2841 = vmatprep.subr.bf16.mxu0 0
      %2842 = vmatpush1.bf16.msra.mxu0 %v2762
      %2843 = vmatprep.subr.bf16.mxu0 0
      %2844 = vmatpush1.bf16.msra.mxu0 %v2763
      %2845 = vmatprep.subr.bf16.mxu0 0
      %2846 = vmatpush1.bf16.msra.mxu0 %v2776
      %2847 = vmatprep.subr.bf16.mxu0 0
      %2848 = vmatpush1.bf16.msra.mxu0 %v2777
      %2849 = vmatprep.subr.bf16.mxu0 0
      %2850 = vmatpush1.bf16.msra.mxu0 %v2790
      %2851 = vmatprep.subr.bf16.mxu0 0
      %2852 = vmatpush1.bf16.msra.mxu0 %v2791
      %2853 = vmatprep.mubr.bf16.mxu0 %v2814
      %2854 = vmatmul.mubr.bf16.gmra.mrb[0].mxu0 %v2813
      %v2855 = vpop.f32.mrb[0].mxu0
      %v2856 = vadd.f32 0.0, %v2855
      %v2857 = vpop.f32.mrb[0].mxu0
      %v2858 = vpop.f32.mrb[0].mxu0
      %v2859 = vpop.f32.mrb[0].mxu0
      %2860 = vdwg.mxu0
      %2861 = vmatprep.subr.bf16.mxu0 0
      %2862 = vmatpush1.bf16.msra.mxu0 %v2804
      %2863 = vmatprep.subr.bf16.mxu0 0
      %2864 = vmatpush1.bf16.msra.mxu0 %v2805
      %2865 = vmatprep.subr.bf16.mxu0 0
      %2866 = vmatpush1.bf16.msra.mxu0 0
      %2867 = vmatprep.subr.bf16.mxu0 0
      %2868 = vmatpush1.bf16.msra.mxu0 0
      %2869 = vmatprep.subr.bf16.mxu0 0
      %2870 = vmatpush1.bf16.msra.mxu0 0
      %2871 = vmatprep.subr.bf16.mxu0 0
      %2872 = vmatpush1.bf16.msra.mxu0 0
      %2873 = vmatprep.subr.bf16.mxu0 0
      %2874 = vmatpush1.bf16.msra.mxu0 0
      %2875 = vmatprep.subr.bf16.mxu0 0
      %2876 = vmatpush1.bf16.msra.mxu0 0
      %2877 = vmatprep.subr.bf16.mxu0 0
      %2878 = vmatpush1.bf16.msra.mxu0 0
      %2879 = vmatprep.subr.bf16.mxu0 0
      %2880 = vmatpush1.bf16.msra.mxu0 0
      %2881 = vmatprep.subr.bf16.mxu0 0
      %2882 = vmatpush1.bf16.msra.mxu0 0
      %2883 = vmatprep.subr.bf16.mxu0 0
      %2884 = vmatpush1.bf16.msra.mxu0 0
      %2885 = vmatprep.subr.bf16.mxu0 0
      %2886 = vmatpush1.bf16.msra.mxu0 0
      %2887 = vmatprep.subr.bf16.mxu0 0
      %2888 = vmatpush1.bf16.msra.mxu0 0
      %2889 = vmatprep.subr.bf16.mxu0 0
      %2890 = vmatpush1.bf16.msra.mxu0 0
      %2891 = vmatprep.subr.bf16.mxu0 0
      %2892 = vmatpush1.bf16.msra.mxu0 0
      %2893 = vmatprep.mubr.bf16.mxu0 0
      %2894 = vmatmul.mubr.bf16.gmra.mrb[0].mxu0 %v2819
      %v2895 = vpop.f32.mrb[0].mxu0
      %v2896 = vadd.f32 %v2856, %v2895
      %v2897 = vpop.f32.mrb[0].mxu0
      %v2898 = vpop.f32.mrb[0].mxu0
      %v2899 = vpop.f32.mrb[0].mxu0
      %2900 = vdwg.mxu0
      %v2901 = vmul.f32 %v2896, 0.2
      %v2902 = vmax.f32 %v2896, %v2901
      %v2903 = vpack.c.bf16 %v1654, %v2902
      %v2904 = vld [vmem:[%s7] sm:$0xff]
      %v2905 = vld [vmem:[%s7 + $0x8] sm:$0xff]
      %v2906 = vld [vmem:[%s7 + $0x10] sm:$0xff]
      %v2907 = vld [vmem:[%s7 + $0x18] sm:$0xff]
      %v2908 = vld [vmem:[%s7 + $0x20] sm:$0xff]
      %v2909 = vld [vmem:[%s7 + $0x28] sm:$0xff]
      %v2910 = vld [vmem:[%s7 + $0x30] sm:$0xff]
      %v2911 = vld [vmem:[%s7 + $0x38] sm:$0xff]
      %v2912 = vld [vmem:[%s7 + $0x40] sm:$0xff]
      %v2913 = vld [vmem:[%s7 + $0x48] sm:$0xff]
      %v2914 = vld [vmem:[%s7 + $0x50] sm:$0xff]
      %v2915 = vld [vmem:[%s7 + $0x58] sm:$0xff]
      %v2916 = vld [vmem:[%s7 + $0x60] sm:$0xff]
      %v2917 = vld [vmem:[%s7 + $0x68] sm:$0xff]
      %v2918 = vld [vmem:[%s7 + $0x70] sm:$0xff]
      %v2919 = vld [vmem:[%s7 + $0x78] sm:$0xff]
      %v2920 = vld [vmem:[%s7 + $0x80] sm:$0xff]
      %v2921 = vld [vmem:[%s7 + $0x88] sm:$0xff]
      %v2922 = vld [vmem:[%s7 + $0x90] sm:$0xff]
      %v2923 = vld [vmem:[%s7 + $0x98] sm:$0xff]
      %v2924 = vld [vmem:[%s7 + $0xa0] sm:$0xff]
      %v2925 = vld [vmem:[%s7 + $0xa8] sm:$0xff]
      %v2926 = vld [vmem:[%s7 + $0xb0] sm:$0xff]
      %v2927 = vld [vmem:[%s7 + $0xb8] sm:$0xff]
      %v2928 = vld [vmem:[%s7 + $0xc0] sm:$0xff]
      %v2929 = vld [vmem:[%s7 + $0xc8] sm:$0xff]
      %v2930 = vld [vmem:[%s7 + $0xd0] sm:$0xff]
      %v2931 = vld [vmem:[%s7 + $0xd8] sm:$0xff]
      %v2932 = vld [vmem:[%s7 + $0xe0] sm:$0xff]
      %v2933 = vld [vmem:[%s7 + $0xe8] sm:$0xff]
      %v2934 = vld [vmem:[%s7 + $0xf0] sm:$0xff]
      %v2935 = vld [vmem:[%s7 + $0xf8] sm:$0xff]
      %v2968 = vunpack.c.l.b16 %v2904
      %v2969 = vunpack.c.h.b16 %v2904
      %v2970 = vunpack.c.l.b16 %v2905
      %v2971 = vunpack.c.h.b16 %v2905
      %v2972 = vunpack.c.l.b16 %v2906
      %v2973 = vunpack.c.h.b16 %v2906
      %v2974 = vunpack.c.l.b16 %v2907
      %v2975 = vunpack.c.h.b16 %v2907
      %v2976 = vunpack.c.l.b16 %v2908
      %v2977 = vunpack.c.h.b16 %v2908
      %v2978 = vunpack.c.l.b16 %v2909
      %v2979 = vunpack.c.h.b16 %v2909
      %v2980 = vunpack.c.l.b16 %v2910
      %v2981 = vunpack.c.h.b16 %v2910
      %v2982 = vunpack.c.l.b16 %v2911
      %v2983 = vunpack.c.h.b16 %v2911
      %v2984 = vunpack.c.l.b16 %v2912
      %v2985 = vunpack.c.h.b16 %v2912
      %v2986 = vunpack.c.l.b16 %v2913
      %v2987 = vunpack.c.h.b16 %v2913
      %v2988 = vunpack.c.l.b16 %v2914
      %v2989 = vunpack.c.h.b16 %v2914
      %v2990 = vunpack.c.l.b16 %v2915
      %v2991 = vunpack.c.h.b16 %v2915
      %v2992 = vunpack.c.l.b16 %v2916
      %v2993 = vunpack.c.h.b16 %v2916
      %v2994 = vunpack.c.l.b16 %v2917
      %v2995 = vunpack.c.h.b16 %v2917
      %v2996 = vunpack.c.l.b16 %v2918
      %v2997 = vunpack.c.h.b16 %v2918
      %v2998 = vunpack.c.l.b16 %v2919
      %v2999 = vunpack.c.h.b16 %v2919
      %v3000 = vunpack.c.l.b16 %v2920
      %v3001 = vunpack.c.h.b16 %v2920
      %v3002 = vunpack.c.l.b16 %v2921
      %v3003 = vunpack.c.h.b16 %v2921
      %v3004 = vunpack.c.l.b16 %v2922
      %v3005 = vunpack.c.h.b16 %v2922
      %v3006 = vunpack.c.l.b16 %v2923
      %v3007 = vunpack.c.h.b16 %v2923
      %v3008 = vunpack.c.l.b16 %v2924
      %v3009 = vunpack.c.h.b16 %v2924
      %v3010 = vunpack.c.l.b16 %v2925
      %v3011 = vunpack.c.h.b16 %v2925
      %v3012 = vunpack.c.l.b16 %v2926
      %v3013 = vunpack.c.h.b16 %v2926
      %v3014 = vunpack.c.l.b16 %v2927
      %v3015 = vunpack.c.h.b16 %v2927
      %v3016 = vunpack.c.l.b16 %v2928
      %v3017 = vunpack.c.h.b16 %v2928
      %v3018 = vunpack.c.l.b16 %v2929
      %v3019 = vunpack.c.h.b16 %v2929
      %v3020 = vunpack.c.l.b16 %v2930
      %v3021 = vunpack.c.h.b16 %v2930
      %v3022 = vunpack.c.l.b16 %v2931
      %v3023 = vunpack.c.h.b16 %v2931
      %v3024 = vunpack.c.l.b16 %v2932
      %v3025 = vunpack.c.h.b16 %v2932
      %v3026 = vunpack.c.l.b16 %v2933
      %v3027 = vunpack.c.h.b16 %v2933
      %v3028 = vunpack.c.l.b16 %v2934
      %v3029 = vunpack.c.h.b16 %v2934
      %v3030 = vunpack.c.l.b16 %v2935
      %v3031 = vunpack.c.h.b16 %v2935
      %v3032 = vpack.c.b16 %v2972, %v2968
      %v3033 = vpack.c.b16 %v2973, %v2969
      %v3034 = vpack.c.b16 %v2974, %v2970
      %v3035 = vpack.c.b16 %v2975, %v2971
      %v3036 = vpack.c.b16 %v2980, %v2976
      %v3037 = vpack.c.b16 %v2981, %v2977
      %v3038 = vpack.c.b16 %v2982, %v2978
      %v3039 = vpack.c.b16 %v2983, %v2979
      %v3040 = vpack.c.b16 %v2988, %v2984
      %v3041 = vpack.c.b16 %v2989, %v2985
      %v3042 = vpack.c.b16 %v2990, %v2986
      %v3043 = vpack.c.b16 %v2991, %v2987
      %v3044 = vpack.c.b16 %v2996, %v2992
      %v3045 = vpack.c.b16 %v2997, %v2993
      %v3046 = vpack.c.b16 %v2998, %v2994
      %v3047 = vpack.c.b16 %v2999, %v2995
      %v3048 = vpack.c.b16 %v3004, %v3000
      %v3049 = vpack.c.b16 %v3005, %v3001
      %v3050 = vpack.c.b16 %v3006, %v3002
      %v3051 = vpack.c.b16 %v3007, %v3003
      %v3052 = vpack.c.b16 %v3012, %v3008
      %v3053 = vpack.c.b16 %v3013, %v3009
      %v3054 = vpack.c.b16 %v3014, %v3010
      %v3055 = vpack.c.b16 %v3015, %v3011
      %v3056 = vpack.c.b16 %v3020, %v3016
      %v3057 = vpack.c.b16 %v3021, %v3017
      %v3058 = vpack.c.b16 %v3022, %v3018
      %v3059 = vpack.c.b16 %v3023, %v3019
      %v3060 = vpack.c.b16 %v3028, %v3024
      %v3061 = vpack.c.b16 %v3029, %v3025
      %v3062 = vpack.c.b16 %v3030, %v3026
      %v3063 = vpack.c.b16 %v3031, %v3027
      %3096 = vmatprep.subr.bf16.mxu0 %v3033
      %3097 = vmatpush1.bf16.msra.mxu0 %v3032
      %3098 = vmatprep.subr.bf16.mxu0 %v3037
      %3099 = vmatpush1.bf16.msra.mxu0 %v3036
      %3100 = vmatprep.subr.bf16.mxu0 %v3041
      %3101 = vmatpush1.bf16.msra.mxu0 %v3040
      %3102 = vmatprep.subr.bf16.mxu0 %v3045
      %3103 = vmatpush1.bf16.msra.mxu0 %v3044
      %3104 = vmatprep.subr.bf16.mxu0 %v3049
      %3105 = vmatpush1.bf16.msra.mxu0 %v3048
      %3106 = vmatprep.subr.bf16.mxu0 %v3053
      %3107 = vmatpush1.bf16.msra.mxu0 %v3052
      %3108 = vmatprep.subr.bf16.mxu0 %v3057
      %3109 = vmatpush1.bf16.msra.mxu0 %v3056
      %3110 = vmatprep.subr.bf16.mxu0 %v3061
      %3111 = vmatpush1.bf16.msra.mxu0 %v3060
      %3112 = vmatprep.subr.bf16.mxu0 0
      %3113 = vmatpush1.bf16.msra.mxu0 0
      %3114 = vmatprep.subr.bf16.mxu0 0
      %3115 = vmatpush1.bf16.msra.mxu0 0
      %3116 = vmatprep.subr.bf16.mxu0 0
      %3117 = vmatpush1.bf16.msra.mxu0 0
      %3118 = vmatprep.subr.bf16.mxu0 0
      %3119 = vmatpush1.bf16.msra.mxu0 0
      %3120 = vmatprep.subr.bf16.mxu0 0
      %3121 = vmatpush1.bf16.msra.mxu0 0
      %3122 = vmatprep.subr.bf16.mxu0 0
      %3123 = vmatpush1.bf16.msra.mxu0 0
      %3124 = vmatprep.subr.bf16.mxu0 0
      %3125 = vmatpush1.bf16.msra.mxu0 0
      %3126 = vmatprep.subr.bf16.mxu0 0
      %3127 = vmatpush1.bf16.msra.mxu0 0
      %3128 = vmatprep.mubr.bf16.mxu0 0
      %3129 = vmatmul.mubr.bf16.gmra.mrb[0].mxu0 %v2903
      %v3130 = vpop.f32.mrb[0].mxu0
      %v3131 = vadd.f32 0.0, %v3130
      %v3132 = vpop.f32.mrb[0].mxu0
      %v3133 = vadd.f32 0.0, %v3132
      %v3134 = vpop.f32.mrb[0].mxu0
      %v3135 = vadd.f32 0.0, %v3134
      %v3136 = vpop.f32.mrb[0].mxu0
      %v3137 = vadd.f32 0.0, %v3136
      %3138 = vdwg.mxu0
      %3139 = vmatprep.subr.bf16.mxu0 %v3035
      %3140 = vmatpush1.bf16.msra.mxu0 %v3034
      %3141 = vmatprep.subr.bf16.mxu0 %v3039
      %3142 = vmatpush1.bf16.msra.mxu0 %v3038
      %3143 = vmatprep.subr.bf16.mxu0 %v3043
      %3144 = vmatpush1.bf16.msra.mxu0 %v3042
      %3145 = vmatprep.subr.bf16.mxu0 %v3047
      %3146 = vmatpush1.bf16.msra.mxu0 %v3046
      %3147 = vmatprep.subr.bf16.mxu0 %v3051
      %3148 = vmatpush1.bf16.msra.mxu0 %v3050
      %3149 = vmatprep.subr.bf16.mxu0 %v3055
      %3150 = vmatpush1.bf16.msra.mxu0 %v3054
      %3151 = vmatprep.subr.bf16.mxu0 %v3059
      %3152 = vmatpush1.bf16.msra.mxu0 %v3058
      %3153 = vmatprep.subr.bf16.mxu0 %v3063
      %3154 = vmatpush1.bf16.msra.mxu0 %v3062
      %3155 = vmatprep.subr.bf16.mxu0 0
      %3156 = vmatpush1.bf16.msra.mxu0 0
      %3157 = vmatprep.subr.bf16.mxu0 0
      %3158 = vmatpush1.bf16.msra.mxu0 0
      %3159 = vmatprep.subr.bf16.mxu0 0
      %3160 = vmatpush1.bf16.msra.mxu0 0
      %3161 = vmatprep.subr.bf16.mxu0 0
      %3162 = vmatpush1.bf16.msra.mxu0 0
      %3163 = vmatprep.subr.bf16.mxu0 0
      %3164 = vmatpush1.bf16.msra.mxu0 0
      %3165 = vmatprep.subr.bf16.mxu0 0
      %3166 = vmatpush1.bf16.msra.mxu0 0
      %3167 = vmatprep.subr.bf16.mxu0 0
      %3168 = vmatpush1.bf16.msra.mxu0 0
      %3169 = vmatprep.subr.bf16.mxu0 0
      %3170 = vmatpush1.bf16.msra.mxu0 0
      %3171 = vmatprep.mubr.bf16.mxu0 0
      %3172 = vmatmul.mubr.bf16.gmra.mrb[0].mxu0 %v2903
      %v3173 = vpop.f32.mrb[0].mxu0
      %v3174 = vadd.f32 0.0, %v3173
      %v3175 = vpop.f32.mrb[0].mxu0
      %v3176 = vadd.f32 0.0, %v3175
      %v3177 = vpop.f32.mrb[0].mxu0
      %v3178 = vadd.f32 0.0, %v3177
      %v3179 = vpop.f32.mrb[0].mxu0
      %v3180 = vadd.f32 0.0, %v3179
      %3181 = vdwg.mxu0
      %3182 = vrot.lane.b32.xlu0 %v3131, 17
      %v3183 = vpop.permute.xlu0 %3182
      %3184 = vrot.lane.b32.xlu0 %v3135, 17
      %v3185 = vpop.permute.xlu0 %3184
      %3186 = vrot.lane.b32.xlu0 %v3133, 17
      %v3187 = vpop.permute.xlu0 %3186
      %3188 = vrot.lane.b32.xlu0 %v3137, 17
      %v3189 = vpop.permute.xlu0 %3188
      %3190 = vrot.lane.b32.xlu0 %v3174, 17
      %v3191 = vpop.permute.xlu0 %3190
      %3192 = vrot.lane.b32.xlu0 %v3178, 17
      %v3193 = vpop.permute.xlu0 %3192
      %3194 = vrot.lane.b32.xlu0 %v3176, 17
      %v3195 = vpop.permute.xlu0 %3194
      %3196 = vrot.lane.b32.xlu0 %v3180, 17
      %v3197 = vpop.permute.xlu0 %3196
      %v3198 = vsel %vm657, %v3191, %v3195
      %v3199 = vsel %vm657, %v3193, %v3197
      %v3200 = vsel %vm657, %v3187, %v3191
      %v3201 = vsel %vm657, %v3189, %v3193
      %v3202 = vsel %vm657, %v3183, %v3187
      %v3203 = vsel %vm657, %v3185, %v3189
      %v3204 = vsel %vm657, %v3195, %v3183
      %v3205 = vsel %vm657, %v3197, %v3185
      %v3206 = vmul.f32 %v3204, %v665
      %v3207 = vmul.f32 %v3202, %v669
      %v3208 = vmul.f32 %v3200, %v673
      %v3209 = vmul.f32 %v3198, %v677
      %v3210 = vmul.f32 %v3205, %v665
      %v3211 = vmul.f32 %v3203, %v669
      %v3212 = vmul.f32 %v3201, %v673
      %v3213 = vmul.f32 %v3199, %v677
      %v3214 = vpack.c.bf16 %v3210, %v3206
      %v3215 = vpack.c.bf16 %v3211, %v3207
      %v3216 = vpack.c.bf16 %v3212, %v3208
      %v3217 = vpack.c.bf16 %v3213, %v3209
      %3218 = vrot.lane.b32.xlu0 %v3131, 16
      %v3219 = vpop.permute.xlu0 %3218
      %3220 = vrot.lane.b32.xlu0 %v3135, 16
      %v3221 = vpop.permute.xlu0 %3220
      %3222 = vrot.lane.b32.xlu0 %v3133, 16
      %v3223 = vpop.permute.xlu0 %3222
      %3224 = vrot.lane.b32.xlu0 %v3137, 16
      %v3225 = vpop.permute.xlu0 %3224
      %3226 = vrot.lane.b32.xlu0 %v3174, 16
      %v3227 = vpop.permute.xlu0 %3226
      %3228 = vrot.lane.b32.xlu0 %v3178, 16
      %v3229 = vpop.permute.xlu0 %3228
      %3230 = vrot.lane.b32.xlu0 %v3176, 16
      %v3231 = vpop.permute.xlu0 %3230
      %3232 = vrot.lane.b32.xlu0 %v3180, 16
      %v3233 = vpop.permute.xlu0 %3232
      %v3234 = vsel %vm694, %v3227, %v3231
      %v3235 = vsel %vm694, %v3229, %v3233
      %v3236 = vsel %vm694, %v3223, %v3227
      %v3237 = vsel %vm694, %v3225, %v3229
      %v3238 = vsel %vm694, %v3219, %v3223
      %v3239 = vsel %vm694, %v3221, %v3225
      %v3240 = vsel %vm694, %v3231, %v3219
      %v3241 = vsel %vm694, %v3233, %v3221
      %v3242 = vmul.f32 %v3240, %v702
      %v3243 = vmul.f32 %v3238, %v706
      %v3244 = vmul.f32 %v3236, %v710
      %v3245 = vmul.f32 %v3234, %v714
      %v3246 = vmul.f32 %v3241, %v702
      %v3247 = vmul.f32 %v3239, %v706
      %v3248 = vmul.f32 %v3237, %v710
      %v3249 = vmul.f32 %v3235, %v714
      %v3250 = vpack.c.bf16 %v3246, %v3242
      %v3251 = vpack.c.bf16 %v3247, %v3243
      %v3252 = vpack.c.bf16 %v3248, %v3244
      %v3253 = vpack.c.bf16 %v3249, %v3245
      %3254 = vrot.lane.b32.xlu0 %v3131, 15
      %v3255 = vpop.permute.xlu0 %3254
      %3256 = vrot.lane.b32.xlu0 %v3135, 15
      %v3257 = vpop.permute.xlu0 %3256
      %3258 = vrot.lane.b32.xlu0 %v3133, 15
      %v3259 = vpop.permute.xlu0 %3258
      %3260 = vrot.lane.b32.xlu0 %v3137, 15
      %v3261 = vpop.permute.xlu0 %3260
      %3262 = vrot.lane.b32.xlu0 %v3174, 15
      %v3263 = vpop.permute.xlu0 %3262
      %3264 = vrot.lane.b32.xlu0 %v3178, 15
      %v3265 = vpop.permute.xlu0 %3264
      %3266 = vrot.lane.b32.xlu0 %v3176, 15
      %v3267 = vpop.permute.xlu0 %3266
      %3268 = vrot.lane.b32.xlu0 %v3180, 15
      %v3269 = vpop.permute.xlu0 %3268
      %v3270 = vsel %vm731, %v3263, %v3267
      %v3271 = vsel %vm731, %v3265, %v3269
      %v3272 = vsel %vm731, %v3259, %v3263
      %v3273 = vsel %vm731, %v3261, %v3265
      %v3274 = vsel %vm731, %v3255, %v3259
      %v3275 = vsel %vm731, %v3257, %v3261
      %v3276 = vsel %vm731, %v3267, %v3255
      %v3277 = vsel %vm731, %v3269, %v3257
      %v3278 = vmul.f32 %v3276, %v739
      %v3279 = vmul.f32 %v3274, %v743
      %v3280 = vmul.f32 %v3272, %v747
      %v3281 = vmul.f32 %v3270, %v751
      %v3282 = vmul.f32 %v3277, %v739
      %v3283 = vmul.f32 %v3275, %v743
      %v3284 = vmul.f32 %v3273, %v747
      %v3285 = vmul.f32 %v3271, %v751
      %v3286 = vpack.c.bf16 %v3282, %v3278
      %v3287 = vpack.c.bf16 %v3283, %v3279
      %v3288 = vpack.c.bf16 %v3284, %v3280
      %v3289 = vpack.c.bf16 %v3285, %v3281
      %3290 = vrot.lane.b32.xlu0 %v3131, 1
      %v3291 = vpop.permute.xlu0 %3290
      %3292 = vrot.lane.b32.xlu0 %v3135, 1
      %v3293 = vpop.permute.xlu0 %3292
      %3294 = vrot.lane.b32.xlu0 %v3133, 1
      %v3295 = vpop.permute.xlu0 %3294
      %3296 = vrot.lane.b32.xlu0 %v3137, 1
      %v3297 = vpop.permute.xlu0 %3296
      %3298 = vrot.lane.b32.xlu0 %v3174, 1
      %v3299 = vpop.permute.xlu0 %3298
      %3300 = vrot.lane.b32.xlu0 %v3178, 1
      %v3301 = vpop.permute.xlu0 %3300
      %3302 = vrot.lane.b32.xlu0 %v3176, 1
      %v3303 = vpop.permute.xlu0 %3302
      %3304 = vrot.lane.b32.xlu0 %v3180, 1
      %v3305 = vpop.permute.xlu0 %3304
      %v3306 = vsel %vm768, %v3299, %v3303
      %v3307 = vsel %vm768, %v3301, %v3305
      %v3308 = vsel %vm768, %v3295, %v3299
      %v3309 = vsel %vm768, %v3297, %v3301
      %v3310 = vsel %vm768, %v3291, %v3295
      %v3311 = vsel %vm768, %v3293, %v3297
      %v3312 = vsel %vm768, %v3303, %v3291
      %v3313 = vsel %vm768, %v3305, %v3293
      %v3314 = vmul.f32 %v3312, %v776
      %v3315 = vmul.f32 %v3310, %v780
      %v3316 = vmul.f32 %v3308, %v784
      %v3317 = vmul.f32 %v3306, %v788
      %v3318 = vmul.f32 %v3313, %v776
      %v3319 = vmul.f32 %v3311, %v780
      %v3320 = vmul.f32 %v3309, %v784
      %v3321 = vmul.f32 %v3307, %v788
      %v3322 = vpack.c.bf16 %v3318, %v3314
      %v3323 = vpack.c.bf16 %v3319, %v3315
      %v3324 = vpack.c.bf16 %v3320, %v3316
      %v3325 = vpack.c.bf16 %v3321, %v3317
      %v3326 = vpack.c.bf16 %v3135, %v3131
      %v3327 = vpack.c.bf16 %v3137, %v3133
      %v3328 = vpack.c.bf16 %v3178, %v3174
      %v3329 = vpack.c.bf16 %v3180, %v3176
      %3330 = vrot.lane.b32.xlu0 %v3131, 127
      %v3331 = vpop.permute.xlu0 %3330
      %3332 = vrot.lane.b32.xlu0 %v3135, 127
      %v3333 = vpop.permute.xlu0 %3332
      %3334 = vrot.lane.b32.xlu0 %v3133, 127
      %v3335 = vpop.permute.xlu0 %3334
      %3336 = vrot.lane.b32.xlu0 %v3137, 127
      %v3337 = vpop.permute.xlu0 %3336
      %3338 = vrot.lane.b32.xlu0 %v3174, 127
      %v3339 = vpop.permute.xlu0 %3338
      %3340 = vrot.lane.b32.xlu0 %v3178, 127
      %v3341 = vpop.permute.xlu0 %3340
      %3342 = vrot.lane.b32.xlu0 %v3176, 127
      %v3343 = vpop.permute.xlu0 %3342
      %3344 = vrot.lane.b32.xlu0 %v3180, 127
      %v3345 = vpop.permute.xlu0 %3344
      %v3346 = vsel %vm809, %v3339, %v3343
      %v3347 = vsel %vm809, %v3341, %v3345
      %v3348 = vsel %vm809, %v3335, %v3339
      %v3349 = vsel %vm809, %v3337, %v3341
      %v3350 = vsel %vm809, %v3331, %v3335
      %v3351 = vsel %vm809, %v3333, %v3337
      %v3352 = vsel %vm809, %v3343, %v3331
      %v3353 = vsel %vm809, %v3345, %v3333
      %v3354 = vmul.f32 %v3350, %v817
      %v3355 = vmul.f32 %v3348, %v821
      %v3356 = vmul.f32 %v3346, %v825
      %v3357 = vmul.f32 %v3352, %v829
      %v3358 = vmul.f32 %v3351, %v817
      %v3359 = vmul.f32 %v3349, %v821
      %v3360 = vmul.f32 %v3347, %v825
      %v3361 = vmul.f32 %v3353, %v829
      %v3362 = vpack.c.bf16 %v3358, %v3354
      %v3363 = vpack.c.bf16 %v3359, %v3355
      %v3364 = vpack.c.bf16 %v3360, %v3356
      %v3365 = vpack.c.bf16 %v3361, %v3357
      %3366 = vrot.lane.b32.xlu0 %v3131, 113
      %v3367 = vpop.permute.xlu0 %3366
      %3368 = vrot.lane.b32.xlu0 %v3135, 113
      %v3369 = vpop.permute.xlu0 %3368
      %3370 = vrot.lane.b32.xlu0 %v3133, 113
      %v3371 = vpop.permute.xlu0 %3370
      %3372 = vrot.lane.b32.xlu0 %v3137, 113
      %v3373 = vpop.permute.xlu0 %3372
      %3374 = vrot.lane.b32.xlu0 %v3174, 113
      %v3375 = vpop.permute.xlu0 %3374
      %3376 = vrot.lane.b32.xlu0 %v3178, 113
      %v3377 = vpop.permute.xlu0 %3376
      %3378 = vrot.lane.b32.xlu0 %v3176, 113
      %v3379 = vpop.permute.xlu0 %3378
      %3380 = vrot.lane.b32.xlu0 %v3180, 113
      %v3381 = vpop.permute.xlu0 %3380
      %v3382 = vsel %vm846, %v3375, %v3379
      %v3383 = vsel %vm846, %v3377, %v3381
      %v3384 = vsel %vm846, %v3371, %v3375
      %v3385 = vsel %vm846, %v3373, %v3377
      %v3386 = vsel %vm846, %v3367, %v3371
      %v3387 = vsel %vm846, %v3369, %v3373
      %v3388 = vsel %vm846, %v3379, %v3367
      %v3389 = vsel %vm846, %v3381, %v3369
      %v3390 = vmul.f32 %v3386, %v854
      %v3391 = vmul.f32 %v3384, %v858
      %v3392 = vmul.f32 %v3382, %v862
      %v3393 = vmul.f32 %v3388, %v866
      %v3394 = vmul.f32 %v3387, %v854
      %v3395 = vmul.f32 %v3385, %v858
      %v3396 = vmul.f32 %v3383, %v862
      %v3397 = vmul.f32 %v3389, %v866
      %v3398 = vpack.c.bf16 %v3394, %v3390
      %v3399 = vpack.c.bf16 %v3395, %v3391
      %v3400 = vpack.c.bf16 %v3396, %v3392
      %v3401 = vpack.c.bf16 %v3397, %v3393
      %3402 = vrot.lane.b32.xlu0 %v3131, 112
      %v3403 = vpop.permute.xlu0 %3402
      %3404 = vrot.lane.b32.xlu0 %v3135, 112
      %v3405 = vpop.permute.xlu0 %3404
      %3406 = vrot.lane.b32.xlu0 %v3133, 112
      %v3407 = vpop.permute.xlu0 %3406
      %3408 = vrot.lane.b32.xlu0 %v3137, 112
      %v3409 = vpop.permute.xlu0 %3408
      %3410 = vrot.lane.b32.xlu0 %v3174, 112
      %v3411 = vpop.permute.xlu0 %3410
      %3412 = vrot.lane.b32.xlu0 %v3178, 112
      %v3413 = vpop.permute.xlu0 %3412
      %3414 = vrot.lane.b32.xlu0 %v3176, 112
      %v3415 = vpop.permute.xlu0 %3414
      %3416 = vrot.lane.b32.xlu0 %v3180, 112
      %v3417 = vpop.permute.xlu0 %3416
      %v3418 = vsel %vm883, %v3411, %v3415
      %v3419 = vsel %vm883, %v3413, %v3417
      %v3420 = vsel %vm883, %v3407, %v3411
      %v3421 = vsel %vm883, %v3409, %v3413
      %v3422 = vsel %vm883, %v3403, %v3407
      %v3423 = vsel %vm883, %v3405, %v3409
      %v3424 = vsel %vm883, %v3415, %v3403
      %v3425 = vsel %vm883, %v3417, %v3405
      %v3426 = vmul.f32 %v3422, %v891
      %v3427 = vmul.f32 %v3420, %v895
      %v3428 = vmul.f32 %v3418, %v899
      %v3429 = vmul.f32 %v3424, %v903
      %v3430 = vmul.f32 %v3423, %v891
      %v3431 = vmul.f32 %v3421, %v895
      %v3432 = vmul.f32 %v3419, %v899
      %v3433 = vmul.f32 %v3425, %v903
      %v3434 = vpack.c.bf16 %v3430, %v3426
      %v3435 = vpack.c.bf16 %v3431, %v3427
      %v3436 = vpack.c.bf16 %v3432, %v3428
      %v3437 = vpack.c.bf16 %v3433, %v3429
      %3438 = vrot.lane.b32.xlu0 %v3131, 111
      %v3439 = vpop.permute.xlu0 %3438
      %3440 = vrot.lane.b32.xlu0 %v3135, 111
      %v3441 = vpop.permute.xlu0 %3440
      %3442 = vrot.lane.b32.xlu0 %v3133, 111
      %v3443 = vpop.permute.xlu0 %3442
      %3444 = vrot.lane.b32.xlu0 %v3137, 111
      %v3445 = vpop.permute.xlu0 %3444
      %3446 = vrot.lane.b32.xlu0 %v3174, 111
      %v3447 = vpop.permute.xlu0 %3446
      %3448 = vrot.lane.b32.xlu0 %v3178, 111
      %v3449 = vpop.permute.xlu0 %3448
      %3450 = vrot.lane.b32.xlu0 %v3176, 111
      %v3451 = vpop.permute.xlu0 %3450
      %3452 = vrot.lane.b32.xlu0 %v3180, 111
      %v3453 = vpop.permute.xlu0 %3452
      %v3454 = vsel %vm920, %v3447, %v3451
      %v3455 = vsel %vm920, %v3449, %v3453
      %v3456 = vsel %vm920, %v3443, %v3447
      %v3457 = vsel %vm920, %v3445, %v3449
      %v3458 = vsel %vm920, %v3439, %v3443
      %v3459 = vsel %vm920, %v3441, %v3445
      %v3460 = vsel %vm920, %v3451, %v3439
      %v3461 = vsel %vm920, %v3453, %v3441
      %v3462 = vmul.f32 %v3458, %v928
      %v3463 = vmul.f32 %v3456, %v932
      %v3464 = vmul.f32 %v3454, %v936
      %v3465 = vmul.f32 %v3460, %v940
      %v3466 = vmul.f32 %v3459, %v928
      %v3467 = vmul.f32 %v3457, %v932
      %v3468 = vmul.f32 %v3455, %v936
      %v3469 = vmul.f32 %v3461, %v940
      %v3470 = vpack.c.bf16 %v3466, %v3462
      %v3471 = vpack.c.bf16 %v3467, %v3463
      %v3472 = vpack.c.bf16 %v3468, %v3464
      %v3473 = vpack.c.bf16 %v3469, %v3465
      %v3474 = vld [vmem:[%s19] sm:$0xf]
      %v3477 = vunpack.c.l.s4 1983009808
      %v3478 = vunpack.c.0.s8 %v3477
      %v3479 = vlaneseq
      %v3480 = vshrl.u32 %v3479, 7
      %v3481 = vsub.s32 %v3478, %v3480
      %v3482 = vrot.slane %v3474, %v3481
      %v3483 = vcombine.high %v3482, %v3482
      %v3486 = vsel %vm2094, %v3483, 0
      %3488 = vmatprep.subr.bf16.mxu0 %v3215
      %3489 = vmatpush1.bf16.msra.mxu0 %v3214
      %3490 = vmatprep.subr.bf16.mxu0 %v3251
      %3491 = vmatpush1.bf16.msra.mxu0 %v3250
      %3492 = vmatprep.subr.bf16.mxu0 %v3287
      %3493 = vmatpush1.bf16.msra.mxu0 %v3286
      %3494 = vmatprep.subr.bf16.mxu0 %v3323
      %3495 = vmatpush1.bf16.msra.mxu0 %v3322
      %3496 = vmatprep.subr.bf16.mxu0 %v3327
      %3497 = vmatpush1.bf16.msra.mxu0 %v3326
      %3498 = vmatprep.subr.bf16.mxu0 %v3363
      %3499 = vmatpush1.bf16.msra.mxu0 %v3362
      %3500 = vmatprep.subr.bf16.mxu0 %v3399
      %3501 = vmatpush1.bf16.msra.mxu0 %v3398
      %3502 = vmatprep.subr.bf16.mxu0 %v3435
      %3503 = vmatpush1.bf16.msra.mxu0 %v3434
      %3504 = vmatprep.subr.bf16.mxu0 %v3471
      %3505 = vmatpush1.bf16.msra.mxu0 %v3470
      %3506 = vmatprep.subr.bf16.mxu0 0
      %3507 = vmatpush1.bf16.msra.mxu0 0
      %3508 = vmatprep.subr.bf16.mxu0 0
      %3509 = vmatpush1.bf16.msra.mxu0 0
      %3510 = vmatprep.subr.bf16.mxu0 0
      %3511 = vmatpush1.bf16.msra.mxu0 0
      %3512 = vmatprep.subr.bf16.mxu0 0
      %3513 = vmatpush1.bf16.msra.mxu0 0
      %3514 = vmatprep.subr.bf16.mxu0 0
      %3515 = vmatpush1.bf16.msra.mxu0 0
      %3516 = vmatprep.subr.bf16.mxu0 0
      %3517 = vmatpush1.bf16.msra.mxu0 0
      %3518 = vmatprep.subr.bf16.mxu0 0
      %3519 = vmatpush1.bf16.msra.mxu0 0
      %3520 = vmatprep.mubr.bf16.mxu0 %v3486
      %3521 = vmatmul.mubr.bf16.gmra.mrb[0].mxu0 %v3482
      %v3522 = vpop.f32.mrb[0].mxu0
      %v3523 = vadd.f32 0.0, %v3522
      %v3524 = vpop.f32.mrb[0].mxu0
      %v3525 = vadd.f32 0.0, %v3524
      %v3526 = vpop.f32.mrb[0].mxu0
      %v3527 = vpop.f32.mrb[0].mxu0
      %3528 = vdwg.mxu0
      %3529 = vmatprep.subr.bf16.mxu0 %v3217
      %3530 = vmatpush1.bf16.msra.mxu0 %v3216
      %3531 = vmatprep.subr.bf16.mxu0 %v3253
      %3532 = vmatpush1.bf16.msra.mxu0 %v3252
      %3533 = vmatprep.subr.bf16.mxu0 %v3289
      %3534 = vmatpush1.bf16.msra.mxu0 %v3288
      %3535 = vmatprep.subr.bf16.mxu0 %v3325
      %3536 = vmatpush1.bf16.msra.mxu0 %v3324
      %3537 = vmatprep.subr.bf16.mxu0 %v3329
      %3538 = vmatpush1.bf16.msra.mxu0 %v3328
      %3539 = vmatprep.subr.bf16.mxu0 %v3365
      %3540 = vmatpush1.bf16.msra.mxu0 %v3364
      %3541 = vmatprep.subr.bf16.mxu0 %v3401
      %3542 = vmatpush1.bf16.msra.mxu0 %v3400
      %3543 = vmatprep.subr.bf16.mxu0 %v3437
      %3544 = vmatpush1.bf16.msra.mxu0 %v3436
      %3545 = vmatprep.subr.bf16.mxu0 %v3473
      %3546 = vmatpush1.bf16.msra.mxu0 %v3472
      %3547 = vmatprep.subr.bf16.mxu0 0
      %3548 = vmatpush1.bf16.msra.mxu0 0
      %3549 = vmatprep.subr.bf16.mxu0 0
      %3550 = vmatpush1.bf16.msra.mxu0 0
      %3551 = vmatprep.subr.bf16.mxu0 0
      %3552 = vmatpush1.bf16.msra.mxu0 0
      %3553 = vmatprep.subr.bf16.mxu0 0
      %3554 = vmatpush1.bf16.msra.mxu0 0
      %3555 = vmatprep.subr.bf16.mxu0 0
      %3556 = vmatpush1.bf16.msra.mxu0 0
      %3557 = vmatprep.subr.bf16.mxu0 0
      %3558 = vmatpush1.bf16.msra.mxu0 0
      %3559 = vmatprep.subr.bf16.mxu0 0
      %3560 = vmatpush1.bf16.msra.mxu0 0
      %3561 = vmatprep.mubr.bf16.mxu0 %v3486
      %3562 = vmatmul.mubr.bf16.gmra.mrb[0].mxu0 %v3482
      %v3563 = vpop.f32.mrb[0].mxu0
      %v3564 = vadd.f32 0.0, %v3563
      %v3565 = vpop.f32.mrb[0].mxu0
      %v3566 = vadd.f32 0.0, %v3565
      %v3567 = vpop.f32.mrb[0].mxu0
      %v3568 = vpop.f32.mrb[0].mxu0
      %3569 = vdwg.mxu0
      %v3570 = vmul.f32 %v3523, 0.2
      %v3571 = vmul.f32 %v3525, 0.2
      %v3572 = vmul.f32 %v3564, 0.2
      %v3573 = vmul.f32 %v3566, 0.2
      %v3574 = vmax.f32 %v3523, %v3570
      %v3575 = vmax.f32 %v3525, %v3571
      %v3576 = vmax.f32 %v3564, %v3572
      %v3577 = vmax.f32 %v3566, %v3573
      %v3582 = vcombine.low %v3574, %v3575
      %v3583 = vcombine.low %v3576, %v3577
      %3586 = vst [vmem:[%s629] sm:$0x77] %v3582
      %3587 = vst [vmem:[%s629 + $0x8] sm:$0x77] %v3583
      %p3588 = scmp.lt.s32.totalorder %s31, 1
      %s3589 = scalar_select %p3588, %s31, 1
      %s3590 = smul.addr %s3589, 4
      %s3591 = smul.addr %s3590, 4
      %s3592 = scalar_lea.vmem %s20, %s3591
      // Predicated region
      $region101: #{unet_forward.1} parent=99 // pred_check
        %p3593 = pneg %p474
      $region102: #{unet_forward.1} parent=99 // pred_check_branch
        %3595 = sbr.rel (%p3593) target = $region104
      $region103: #{unet_forward.1} parent=99 // pred_region
        _
      $region104: #{unet_forward.1} parent=99 // pred_fallthru
        _
    $region100: #{unet_forward.1} parent=5 // pred_fallthru
      _
    %p3596 = scmp.le.s32.totalorder 2, %s26
    // Predicated region
    $region105: #{unet_forward.1} parent=5 // pred_check
      %p3597 = pneg %p3596
    $region106: #{unet_forward.1} parent=5 // pred_check_branch
      %3599 = sbr.rel (%p3597) target = $region108
    $region107: #{unet_forward.1} parent=5 // pred_region
      %s3600 = ssub.s32 %s26, 2
      // Predicated region
      $region109: #{unet_forward.1} parent=107 // pred_check
        %p3601 = pneg %p480
      $region110: #{unet_forward.1} parent=107 // pred_check_branch
        %3603 = sbr.rel (%p3601) target = $region112
      $region111: #{unet_forward.1} parent=107 // pred_region
        %p3604 = scmp.lt.s32.totalorder %s32, 1
        %s3605 = scalar_select %p3604, %s32, 1
        %s3606 = smul.addr %s3605, 4
        %s3607 = smul.addr %s3606, 4
        %s3608 = scalar_lea.vmem %s20, %s3607
      $region112: #{unet_forward.1} parent=107 // pred_fallthru
        _
    $region108: #{unet_forward.1} parent=5 // pred_fallthru
      _
  $region6: #{unet_forward.1} parent=0 // loop_footer
    %s30 = sadd.s32 1, %s26
  $region7: #{unet_forward.1} parent=0 // loop_footer_branch
    %25 = sbr.rel target = $region3
  $region8: #{unet_forward.1} parent=0 // loop_exit
    _

</llo_original>
